<compile_context>
chip_gen: v7x
topology: tpu7x:2x2x1
jax: 0.10.0
libtpu: 0.0.40
codegen_flags: <defaults>
</compile_context>

<pallas_src>
import jax
import jax.numpy as jnp
from jax.experimental import pallas as pl
from jax.experimental.pallas import tpu as pltpu

LN_EPS = 1e-5


def _layer_norm(x, g, b):
    mu = jnp.mean(x, axis=-1, keepdims=True)
    var = jnp.mean((x - mu) ** 2, axis=-1, keepdims=True)
    return (x - mu) * jax.lax.rsqrt(var + LN_EPS) * g + b


def _encoder_last_token(x, wqkv, bqkv, wo, bo, g1, be1, w1, b1, w2, b2, g2, be2):
    """Post-norm TransformerEncoderLayer with nhead == d_model (head_dim == 1).

    x: (B, S, D) -> last-token hidden state (B, D).
    Batch is folded into the matmul M dimension; attention stays batched.
    """
    B, S, D = x.shape
    x2d = x.reshape(B * S, D)

    # Packed Q/K/V projection: one MXU pass instead of three.
    qkv = jnp.dot(x2d, wqkv, preferred_element_type=jnp.float32) + bqkv   # (B*S, 3D)
    q = qkv[:, 0 * D:1 * D].reshape(B, S, D)
    k = qkv[:, 1 * D:2 * D].reshape(B, S, D)
    v = qkv[:, 2 * D:3 * D].reshape(B, S, D)

    # Multi-head self-attention with head_dim == 1: per-head attention is an
    # elementwise outer product over the feature axis.
    scores = q[:, :, None, :] * k[:, None, :, :]                  # (B, Sq, Sk, D)
    m = jnp.max(scores, axis=2, keepdims=True)
    p = jnp.exp(scores - m)                                       # unnormalized
    num = jnp.sum(p * v[:, None, :, :], axis=2)                   # (B, Sq, D)
    den = jnp.sum(p, axis=2)                                      # (B, Sq, D)
    attn = num * pl.reciprocal(den, approx=True)                  # deferred softmax norm

    attn2d = jnp.dot(attn.reshape(B * S, D), wo,
                     preferred_element_type=jnp.float32) + bo

    # TODO(synk): dropout layers are treated as identity (eval-mode semantics).
    h = _layer_norm(x2d + attn2d, g1, be1)                        # post-norm #1

    ff = jnp.dot(h, w1, preferred_element_type=jnp.float32) + b1
    ff = jnp.maximum(ff, 0.0)                                     # ReLU
    ff = jnp.dot(ff, w2, preferred_element_type=jnp.float32) + b2

    h2 = _layer_norm(h + ff, g2, be2)                             # post-norm #2
    return h2.reshape(B, S, D)[:, S - 1, :]                       # (B, D) last token


def _fused_forward_kernel(
    x0_ref, x1_ref,
    # encoder 0 (d_model=7, ff=512)
    e0_wqkv, e0_bqkv, e0_wo, e0_bo, e0_g1, e0_be1,
    e0_w1, e0_b1, e0_w2, e0_b2, e0_g2, e0_be2,
    # encoder 1 (d_model=10, ff=1024)
    e1_wqkv, e1_bqkv, e1_wo, e1_bo, e1_g1, e1_be1,
    e1_w1, e1_b1, e1_w2, e1_b2, e1_g2, e1_be2,
    # MLP head (17->32->16->8->1) with the first weight pre-split at the
    # y0/y1 boundary so no in-kernel concat is needed.
    f_w1a, f_w1b, f_b1, f_w2, f_b2, f_w3, f_b3, f_w4, f_b4,
    # outputs
    y_ref, y0_ref, y1_ref,
):
    # TODO(synk): on v7x the two independent encoders could be split across the
    # two TensorCores (core_map); single-invocation fusion is kept for simplicity.
    y0 = _encoder_last_token(
        x0_ref[...],
        e0_wqkv[...], e0_bqkv[...], e0_wo[...], e0_bo[...],
        e0_g1[...], e0_be1[...],
        e0_w1[...], e0_b1[...], e0_w2[...], e0_b2[...],
        e0_g2[...], e0_be2[...])
    y1 = _encoder_last_token(
        x1_ref[...],
        e1_wqkv[...], e1_bqkv[...], e1_wo[...], e1_bo[...],
        e1_g1[...], e1_be1[...],
        e1_w1[...], e1_b1[...], e1_w2[...], e1_b2[...],
        e1_g2[...], e1_be2[...])

    y0_ref[...] = y0
    y1_ref[...] = y1

    # concat([y0, y1], axis=1) @ W1  ==  y0 @ W1[:7] + y1 @ W1[7:]
    h = (jnp.dot(y0, f_w1a[...], preferred_element_type=jnp.float32)
         + jnp.dot(y1, f_w1b[...], preferred_element_type=jnp.float32)
         + f_b1[...])
    h = jnp.maximum(h, 0.0)
    h = jnp.maximum(
        jnp.dot(h, f_w2[...], preferred_element_type=jnp.float32) + f_b2[...], 0.0)
    h = jnp.maximum(
        jnp.dot(h, f_w3[...], preferred_element_type=jnp.float32) + f_b3[...], 0.0)
    y_ref[...] = jnp.dot(h, f_w4[...], preferred_element_type=jnp.float32) + f_b4[...]


def model_forward(x, params, return_module_y=False):
    """Fused forward pass: one pallas_call for the whole model."""
    x0, x1 = x
    B, _, d0 = x0.shape
    d1 = x1.shape[-1]
    e0, e1, ff = params["enc0"], params["enc1"], params["ff"]

    def enc_args(e):
        return (e["wqkv"], e["bqkv"], e["wo"], e["bo"], e["g1"], e["be1"],
                e["w1"], e["b1"], e["w2"], e["b2"], e["g2"], e["be2"])

    args = (x0, x1, *enc_args(e0), *enc_args(e1),
            ff["w1a"], ff["w1b"], ff["b1"], ff["w2"], ff["b2"],
            ff["w3"], ff["b3"], ff["w4"], ff["b4"])

    vmem = lambda: pl.BlockSpec(memory_space=pltpu.MemorySpace.VMEM)
    y, y0, y1 = pl.pallas_call(
        _fused_forward_kernel,
        out_shape=(jax.ShapeDtypeStruct((B, 1), jnp.float32),
                   jax.ShapeDtypeStruct((B, d0), jnp.float32),
                   jax.ShapeDtypeStruct((B, d1), jnp.float32)),
        in_specs=[vmem() for _ in args],
        out_specs=(vmem(), vmem(), vmem()),
    )(*args)

    if return_module_y:
        return x, (y, y0, y1)
    return x, y


# ---------------- deterministic synthetic parameters ----------------

def _n(key, shape, scale):
    return (scale * jax.random.normal(key, shape)).astype(jnp.float32)


def init_encoder_params(key, d_model, dim_ff):
    ks = jax.random.split(key, 6)
    z = lambda n: jnp.zeros((1, n), jnp.float32)
    o = lambda n: jnp.ones((1, n), jnp.float32)
    wq = _n(ks[0], (d_model, d_model), 0.3)
    wk = _n(ks[1], (d_model, d_model), 0.3)
    wv = _n(ks[2], (d_model, d_model), 0.3)
    return dict(
        wqkv=jnp.concatenate([wq, wk, wv], axis=1),   # packed (D, 3D) projection
        bqkv=z(3 * d_model),
        wo=_n(ks[3], (d_model, d_model), 0.3), bo=z(d_model),
        g1=o(d_model), be1=z(d_model),
        w1=_n(ks[4], (d_model, dim_ff), 0.2), b1=z(dim_ff),
        w2=_n(ks[5], (dim_ff, d_model), 0.05), b2=z(d_model),
        g2=o(d_model), be2=z(d_model),
    )


def init_ff_params(key, d0=7):
    ks = jax.random.split(key, 4)
    z = lambda n: jnp.zeros((1, n), jnp.float32)
    w1 = _n(ks[0], (17, 32), 0.3)                     # Linear(17, 32) equivalent
    return dict(
        w1a=w1[:d0], w1b=w1[d0:], b1=z(32),           # split at the y0/y1 boundary
        w2=_n(ks[1], (32, 16), 0.3), b2=z(16),
        w3=_n(ks[2], (16, 8), 0.3), b3=z(8),
        w4=_n(ks[3], (8, 1), 0.3), b4=z(1),
    )


def init_model_params(key):
    k0, k1, k2 = jax.random.split(key, 3)
    return dict(
        enc0=init_encoder_params(k0, d_model=7, dim_ff=512),
        enc1=init_encoder_params(k1, d_model=10, dim_ff=1024),
        ff=init_ff_params(k2, d0=7),
    )


if __name__ == "__main__":
    key = jax.random.PRNGKey(0)
    k_x0, k_x1, k_p = jax.random.split(key, 3)

    B, S0, S1 = 2, 8, 8
    x0 = jax.random.normal(k_x0, (B, S0, 7), dtype=jnp.float32)
    x1 = jax.random.normal(k_x1, (B, S1, 10), dtype=jnp.float32)

    params = init_model_params(k_p)

    (_, _), y = model_forward((x0, x1), params)
    y = jax.block_until_ready(y)
    assert y.shape == (B, 1) and y.dtype == jnp.float32
    print("KERNEL_OK")
</pallas_src>

<mosaic_0001>
module attributes {stable_mosaic.version = 11 : i64} {
  func.func @_fused_forward_kernel(%arg0: memref<2x8x7xf32, #tpu.memory_space<vmem>>, %arg1: memref<2x8x10xf32, #tpu.memory_space<vmem>>, %arg2: memref<7x21xf32, #tpu.memory_space<vmem>>, %arg3: memref<1x21xf32, #tpu.memory_space<vmem>>, %arg4: memref<7x7xf32, #tpu.memory_space<vmem>>, %arg5: memref<1x7xf32, #tpu.memory_space<vmem>>, %arg6: memref<1x7xf32, #tpu.memory_space<vmem>>, %arg7: memref<1x7xf32, #tpu.memory_space<vmem>>, %arg8: memref<7x512xf32, #tpu.memory_space<vmem>>, %arg9: memref<1x512xf32, #tpu.memory_space<vmem>>, %arg10: memref<512x7xf32, #tpu.memory_space<vmem>>, %arg11: memref<1x7xf32, #tpu.memory_space<vmem>>, %arg12: memref<1x7xf32, #tpu.memory_space<vmem>>, %arg13: memref<1x7xf32, #tpu.memory_space<vmem>>, %arg14: memref<10x30xf32, #tpu.memory_space<vmem>>, %arg15: memref<1x30xf32, #tpu.memory_space<vmem>>, %arg16: memref<10x10xf32, #tpu.memory_space<vmem>>, %arg17: memref<1x10xf32, #tpu.memory_space<vmem>>, %arg18: memref<1x10xf32, #tpu.memory_space<vmem>>, %arg19: memref<1x10xf32, #tpu.memory_space<vmem>>, %arg20: memref<10x1024xf32, #tpu.memory_space<vmem>>, %arg21: memref<1x1024xf32, #tpu.memory_space<vmem>>, %arg22: memref<1024x10xf32, #tpu.memory_space<vmem>>, %arg23: memref<1x10xf32, #tpu.memory_space<vmem>>, %arg24: memref<1x10xf32, #tpu.memory_space<vmem>>, %arg25: memref<1x10xf32, #tpu.memory_space<vmem>>, %arg26: memref<7x32xf32, #tpu.memory_space<vmem>>, %arg27: memref<10x32xf32, #tpu.memory_space<vmem>>, %arg28: memref<1x32xf32, #tpu.memory_space<vmem>>, %arg29: memref<32x16xf32, #tpu.memory_space<vmem>>, %arg30: memref<1x16xf32, #tpu.memory_space<vmem>>, %arg31: memref<16x8xf32, #tpu.memory_space<vmem>>, %arg32: memref<1x8xf32, #tpu.memory_space<vmem>>, %arg33: memref<8x1xf32, #tpu.memory_space<vmem>>, %arg34: memref<1x1xf32, #tpu.memory_space<vmem>>, %arg35: memref<2x1xf32, #tpu.memory_space<vmem>>, %arg36: memref<2x7xf32, #tpu.memory_space<vmem>>, %arg37: memref<2x10xf32, #tpu.memory_space<vmem>>) attributes {dimension_semantics = [], scalar_prefetch = 0 : i64, scratch_operands = 0 : i64, tpu.core_type = #tpu.core_type<tc>} {
    %c0 = arith.constant 0 : index
    %c0_0 = arith.constant 0 : index
    %c0_1 = arith.constant 0 : index
    %0 = vector.load %arg0[%c0, %c0_0, %c0_1] : memref<2x8x7xf32, #tpu.memory_space<vmem>>, vector<2x8x7xf32>
    %c0_2 = arith.constant 0 : index
    %c0_3 = arith.constant 0 : index
    %1 = vector.load %arg2[%c0_2, %c0_3] : memref<7x21xf32, #tpu.memory_space<vmem>>, vector<7x21xf32>
    %c0_4 = arith.constant 0 : index
    %c0_5 = arith.constant 0 : index
    %2 = vector.load %arg3[%c0_4, %c0_5] : memref<1x21xf32, #tpu.memory_space<vmem>>, vector<1x21xf32>
    %c0_6 = arith.constant 0 : index
    %c0_7 = arith.constant 0 : index
    %3 = vector.load %arg4[%c0_6, %c0_7] : memref<7x7xf32, #tpu.memory_space<vmem>>, vector<7x7xf32>
    %c0_8 = arith.constant 0 : index
    %c0_9 = arith.constant 0 : index
    %4 = vector.load %arg5[%c0_8, %c0_9] : memref<1x7xf32, #tpu.memory_space<vmem>>, vector<1x7xf32>
    %c0_10 = arith.constant 0 : index
    %c0_11 = arith.constant 0 : index
    %5 = vector.load %arg6[%c0_10, %c0_11] : memref<1x7xf32, #tpu.memory_space<vmem>>, vector<1x7xf32>
    %c0_12 = arith.constant 0 : index
    %c0_13 = arith.constant 0 : index
    %6 = vector.load %arg7[%c0_12, %c0_13] : memref<1x7xf32, #tpu.memory_space<vmem>>, vector<1x7xf32>
    %c0_14 = arith.constant 0 : index
    %c0_15 = arith.constant 0 : index
    %7 = vector.load %arg8[%c0_14, %c0_15] : memref<7x512xf32, #tpu.memory_space<vmem>>, vector<7x512xf32>
    %c0_16 = arith.constant 0 : index
    %c0_17 = arith.constant 0 : index
    %8 = vector.load %arg9[%c0_16, %c0_17] : memref<1x512xf32, #tpu.memory_space<vmem>>, vector<1x512xf32>
    %c0_18 = arith.constant 0 : index
    %c0_19 = arith.constant 0 : index
    %9 = vector.load %arg10[%c0_18, %c0_19] : memref<512x7xf32, #tpu.memory_space<vmem>>, vector<512x7xf32>
    %c0_20 = arith.constant 0 : index
    %c0_21 = arith.constant 0 : index
    %10 = vector.load %arg11[%c0_20, %c0_21] : memref<1x7xf32, #tpu.memory_space<vmem>>, vector<1x7xf32>
    %c0_22 = arith.constant 0 : index
    %c0_23 = arith.constant 0 : index
    %11 = vector.load %arg12[%c0_22, %c0_23] : memref<1x7xf32, #tpu.memory_space<vmem>>, vector<1x7xf32>
    %c0_24 = arith.constant 0 : index
    %c0_25 = arith.constant 0 : index
    %12 = vector.load %arg13[%c0_24, %c0_25] : memref<1x7xf32, #tpu.memory_space<vmem>>, vector<1x7xf32>
    %13 = vector.shape_cast %0 : vector<2x8x7xf32> to vector<16x7xf32>
    %cst = arith.constant dense<0.000000e+00> : vector<16x21xf32>
    %14 = tpu.matmul %13, %1, %cst {dimension_numbers = #tpu.dot_dimension_numbers<[1], [0], [0], [1], [0, 0, 1, 1], [], []>} : vector<16x7xf32>, vector<7x21xf32>, vector<16x21xf32> -> vector<16x21xf32>
    %15 = vector.broadcast %2 : vector<1x21xf32> to vector<16x21xf32>
    %16 = arith.addf %14, %15 : vector<16x21xf32>
    %17 = vector.extract_strided_slice %16 {offsets = [0, 0], sizes = [16, 7], strides = [1, 1]} : vector<16x21xf32> to vector<16x7xf32>
    %18 = vector.shape_cast %17 : vector<16x7xf32> to vector<2x8x7xf32>
    %19 = vector.extract_strided_slice %16 {offsets = [0, 7], sizes = [16, 7], strides = [1, 1]} : vector<16x21xf32> to vector<16x7xf32>
    %20 = vector.shape_cast %19 : vector<16x7xf32> to vector<2x8x7xf32>
    %21 = vector.extract_strided_slice %16 {offsets = [0, 14], sizes = [16, 7], strides = [1, 1]} : vector<16x21xf32> to vector<16x7xf32>
    %22 = vector.shape_cast %21 : vector<16x7xf32> to vector<2x8x7xf32>
    %23 = vector.shape_cast %18 : vector<2x8x7xf32> to vector<2x8x1x7xf32>
    %24 = vector.shape_cast %20 : vector<2x8x7xf32> to vector<2x1x8x7xf32>
    %25 = vector.broadcast %23 : vector<2x8x1x7xf32> to vector<2x8x8x7xf32>
    %26 = vector.broadcast %24 : vector<2x1x8x7xf32> to vector<2x8x8x7xf32>
    %27 = arith.mulf %25, %26 : vector<2x8x8x7xf32>
    %cst_26 = arith.constant dense<0xFF800000> : vector<2x8x7xf32>
    %28 = vector.multi_reduction <maximumf>, %27, %cst_26 [2] : vector<2x8x8x7xf32> to vector<2x8x7xf32>
    %29 = vector.shape_cast %28 : vector<2x8x7xf32> to vector<2x8x1x7xf32>
    %30 = vector.broadcast %29 : vector<2x8x1x7xf32> to vector<2x8x8x7xf32>
    %31 = arith.subf %27, %30 : vector<2x8x8x7xf32>
    %32 = math.exp %31 : vector<2x8x8x7xf32>
    %33 = vector.shape_cast %22 : vector<2x8x7xf32> to vector<2x1x8x7xf32>
    %34 = vector.broadcast %33 : vector<2x1x8x7xf32> to vector<2x8x8x7xf32>
    %35 = arith.mulf %32, %34 : vector<2x8x8x7xf32>
    %cst_27 = arith.constant dense<0.000000e+00> : vector<2x8x7xf32>
    %36 = vector.multi_reduction <add>, %35, %cst_27 [2] : vector<2x8x8x7xf32> to vector<2x8x7xf32>
    %cst_28 = arith.constant dense<0.000000e+00> : vector<2x8x7xf32>
    %37 = vector.multi_reduction <add>, %32, %cst_28 [2] : vector<2x8x8x7xf32> to vector<2x8x7xf32>
    %38 = tpu.reciprocal %37 {approx = true} : vector<2x8x7xf32> -> vector<2x8x7xf32>
    %39 = arith.mulf %36, %38 : vector<2x8x7xf32>
    %40 = vector.shape_cast %39 : vector<2x8x7xf32> to vector<16x7xf32>
    %cst_29 = arith.constant dense<0.000000e+00> : vector<16x7xf32>
    %41 = tpu.matmul %40, %3, %cst_29 {dimension_numbers = #tpu.dot_dimension_numbers<[1], [0], [0], [1], [0, 0, 1, 1], [], []>} : vector<16x7xf32>, vector<7x7xf32>, vector<16x7xf32> -> vector<16x7xf32>
    %42 = vector.broadcast %4 : vector<1x7xf32> to vector<16x7xf32>
    %43 = arith.addf %41, %42 : vector<16x7xf32>
    %44 = arith.addf %13, %43 : vector<16x7xf32>
    %cst_30 = arith.constant dense<0.000000e+00> : vector<16xf32>
    %45 = vector.multi_reduction <add>, %44, %cst_30 [1] : vector<16x7xf32> to vector<16xf32>
    %46 = vector.shape_cast %45 : vector<16xf32> to vector<16x1xf32>
    %cst_31 = arith.constant 7.000000e+00 : f32
    %47 = vector.broadcast %cst_31 : f32 to vector<16x1xf32>
    %48 = arith.divf %46, %47 : vector<16x1xf32>
    %49 = vector.broadcast %48 : vector<16x1xf32> to vector<16x7xf32>
    %50 = arith.subf %44, %49 : vector<16x7xf32>
    %51 = arith.mulf %50, %50 : vector<16x7xf32>
    %cst_32 = arith.constant dense<0.000000e+00> : vector<16xf32>
    %52 = vector.multi_reduction <add>, %51, %cst_32 [1] : vector<16x7xf32> to vector<16xf32>
    %53 = vector.shape_cast %52 : vector<16xf32> to vector<16x1xf32>
    %cst_33 = arith.constant 7.000000e+00 : f32
    %54 = vector.broadcast %cst_33 : f32 to vector<16x1xf32>
    %55 = arith.divf %53, %54 : vector<16x1xf32>
    %56 = vector.broadcast %48 : vector<16x1xf32> to vector<16x7xf32>
    %57 = arith.subf %44, %56 : vector<16x7xf32>
    %cst_34 = arith.constant 9.99999974E-6 : f32
    %58 = vector.broadcast %cst_34 : f32 to vector<16x1xf32>
    %59 = arith.addf %55, %58 : vector<16x1xf32>
    %60 = math.rsqrt %59 : vector<16x1xf32>
    %61 = vector.broadcast %60 : vector<16x1xf32> to vector<16x7xf32>
    %62 = arith.mulf %57, %61 : vector<16x7xf32>
    %63 = vector.broadcast %5 : vector<1x7xf32> to vector<16x7xf32>
    %64 = arith.mulf %62, %63 : vector<16x7xf32>
    %65 = vector.broadcast %6 : vector<1x7xf32> to vector<16x7xf32>
    %66 = arith.addf %64, %65 : vector<16x7xf32>
    %cst_35 = arith.constant dense<0.000000e+00> : vector<16x512xf32>
    %67 = tpu.matmul %66, %7, %cst_35 {dimension_numbers = #tpu.dot_dimension_numbers<[1], [0], [0], [1], [0, 0, 1, 1], [], []>} : vector<16x7xf32>, vector<7x512xf32>, vector<16x512xf32> -> vector<16x512xf32>
    %68 = vector.broadcast %8 : vector<1x512xf32> to vector<16x512xf32>
    %69 = arith.addf %67, %68 : vector<16x512xf32>
    %cst_36 = arith.constant 0.000000e+00 : f32
    %70 = vector.broadcast %cst_36 : f32 to vector<16x512xf32>
    %71 = arith.maximumf %69, %70 : vector<16x512xf32>
    %cst_37 = arith.constant dense<0.000000e+00> : vector<16x7xf32>
    %72 = tpu.matmul %71, %9, %cst_37 {dimension_numbers = #tpu.dot_dimension_numbers<[1], [0], [0], [1], [0, 0, 1, 1], [], []>} : vector<16x512xf32>, vector<512x7xf32>, vector<16x7xf32> -> vector<16x7xf32>
    %73 = vector.broadcast %10 : vector<1x7xf32> to vector<16x7xf32>
    %74 = arith.addf %72, %73 : vector<16x7xf32>
    %75 = arith.addf %66, %74 : vector<16x7xf32>
    %cst_38 = arith.constant dense<0.000000e+00> : vector<16xf32>
    %76 = vector.multi_reduction <add>, %75, %cst_38 [1] : vector<16x7xf32> to vector<16xf32>
    %77 = vector.shape_cast %76 : vector<16xf32> to vector<16x1xf32>
    %cst_39 = arith.constant 7.000000e+00 : f32
    %78 = vector.broadcast %cst_39 : f32 to vector<16x1xf32>
    %79 = arith.divf %77, %78 : vector<16x1xf32>
    %80 = vector.broadcast %79 : vector<16x1xf32> to vector<16x7xf32>
    %81 = arith.subf %75, %80 : vector<16x7xf32>
    %82 = arith.mulf %81, %81 : vector<16x7xf32>
    %cst_40 = arith.constant dense<0.000000e+00> : vector<16xf32>
    %83 = vector.multi_reduction <add>, %82, %cst_40 [1] : vector<16x7xf32> to vector<16xf32>
    %84 = vector.shape_cast %83 : vector<16xf32> to vector<16x1xf32>
    %cst_41 = arith.constant 7.000000e+00 : f32
    %85 = vector.broadcast %cst_41 : f32 to vector<16x1xf32>
    %86 = arith.divf %84, %85 : vector<16x1xf32>
    %87 = vector.broadcast %79 : vector<16x1xf32> to vector<16x7xf32>
    %88 = arith.subf %75, %87 : vector<16x7xf32>
    %cst_42 = arith.constant 9.99999974E-6 : f32
    %89 = vector.broadcast %cst_42 : f32 to vector<16x1xf32>
    %90 = arith.addf %86, %89 : vector<16x1xf32>
    %91 = math.rsqrt %90 : vector<16x1xf32>
    %92 = vector.broadcast %91 : vector<16x1xf32> to vector<16x7xf32>
    %93 = arith.mulf %88, %92 : vector<16x7xf32>
    %94 = vector.broadcast %11 : vector<1x7xf32> to vector<16x7xf32>
    %95 = arith.mulf %93, %94 : vector<16x7xf32>
    %96 = vector.broadcast %12 : vector<1x7xf32> to vector<16x7xf32>
    %97 = arith.addf %95, %96 : vector<16x7xf32>
    %98 = vector.shape_cast %97 : vector<16x7xf32> to vector<2x8x7xf32>
    %99 = vector.extract_strided_slice %98 {offsets = [0, 7, 0], sizes = [2, 1, 7], strides = [1, 1, 1]} : vector<2x8x7xf32> to vector<2x1x7xf32>
    %100 = vector.shape_cast %99 : vector<2x1x7xf32> to vector<2x7xf32>
    %c0_43 = arith.constant 0 : index
    %c0_44 = arith.constant 0 : index
    %c0_45 = arith.constant 0 : index
    %101 = vector.load %arg1[%c0_43, %c0_44, %c0_45] : memref<2x8x10xf32, #tpu.memory_space<vmem>>, vector<2x8x10xf32>
    %c0_46 = arith.constant 0 : index
    %c0_47 = arith.constant 0 : index
    %102 = vector.load %arg14[%c0_46, %c0_47] : memref<10x30xf32, #tpu.memory_space<vmem>>, vector<10x30xf32>
    %c0_48 = arith.constant 0 : index
    %c0_49 = arith.constant 0 : index
    %103 = vector.load %arg15[%c0_48, %c0_49] : memref<1x30xf32, #tpu.memory_space<vmem>>, vector<1x30xf32>
    %c0_50 = arith.constant 0 : index
    %c0_51 = arith.constant 0 : index
    %104 = vector.load %arg16[%c0_50, %c0_51] : memref<10x10xf32, #tpu.memory_space<vmem>>, vector<10x10xf32>
    %c0_52 = arith.constant 0 : index
    %c0_53 = arith.constant 0 : index
    %105 = vector.load %arg17[%c0_52, %c0_53] : memref<1x10xf32, #tpu.memory_space<vmem>>, vector<1x10xf32>
    %c0_54 = arith.constant 0 : index
    %c0_55 = arith.constant 0 : index
    %106 = vector.load %arg18[%c0_54, %c0_55] : memref<1x10xf32, #tpu.memory_space<vmem>>, vector<1x10xf32>
    %c0_56 = arith.constant 0 : index
    %c0_57 = arith.constant 0 : index
    %107 = vector.load %arg19[%c0_56, %c0_57] : memref<1x10xf32, #tpu.memory_space<vmem>>, vector<1x10xf32>
    %c0_58 = arith.constant 0 : index
    %c0_59 = arith.constant 0 : index
    %108 = vector.load %arg20[%c0_58, %c0_59] : memref<10x1024xf32, #tpu.memory_space<vmem>>, vector<10x1024xf32>
    %c0_60 = arith.constant 0 : index
    %c0_61 = arith.constant 0 : index
    %109 = vector.load %arg21[%c0_60, %c0_61] : memref<1x1024xf32, #tpu.memory_space<vmem>>, vector<1x1024xf32>
    %c0_62 = arith.constant 0 : index
    %c0_63 = arith.constant 0 : index
    %110 = vector.load %arg22[%c0_62, %c0_63] : memref<1024x10xf32, #tpu.memory_space<vmem>>, vector<1024x10xf32>
    %c0_64 = arith.constant 0 : index
    %c0_65 = arith.constant 0 : index
    %111 = vector.load %arg23[%c0_64, %c0_65] : memref<1x10xf32, #tpu.memory_space<vmem>>, vector<1x10xf32>
    %c0_66 = arith.constant 0 : index
    %c0_67 = arith.constant 0 : index
    %112 = vector.load %arg24[%c0_66, %c0_67] : memref<1x10xf32, #tpu.memory_space<vmem>>, vector<1x10xf32>
    %c0_68 = arith.constant 0 : index
    %c0_69 = arith.constant 0 : index
    %113 = vector.load %arg25[%c0_68, %c0_69] : memref<1x10xf32, #tpu.memory_space<vmem>>, vector<1x10xf32>
    %114 = vector.shape_cast %101 : vector<2x8x10xf32> to vector<16x10xf32>
    %cst_70 = arith.constant dense<0.000000e+00> : vector<16x30xf32>
    %115 = tpu.matmul %114, %102, %cst_70 {dimension_numbers = #tpu.dot_dimension_numbers<[1], [0], [0], [1], [0, 0, 1, 1], [], []>} : vector<16x10xf32>, vector<10x30xf32>, vector<16x30xf32> -> vector<16x30xf32>
    %116 = vector.broadcast %103 : vector<1x30xf32> to vector<16x30xf32>
    %117 = arith.addf %115, %116 : vector<16x30xf32>
    %118 = vector.extract_strided_slice %117 {offsets = [0, 0], sizes = [16, 10], strides = [1, 1]} : vector<16x30xf32> to vector<16x10xf32>
    %119 = vector.shape_cast %118 : vector<16x10xf32> to vector<2x8x10xf32>
    %120 = vector.extract_strided_slice %117 {offsets = [0, 10], sizes = [16, 10], strides = [1, 1]} : vector<16x30xf32> to vector<16x10xf32>
    %121 = vector.shape_cast %120 : vector<16x10xf32> to vector<2x8x10xf32>
    %122 = vector.extract_strided_slice %117 {offsets = [0, 20], sizes = [16, 10], strides = [1, 1]} : vector<16x30xf32> to vector<16x10xf32>
    %123 = vector.shape_cast %122 : vector<16x10xf32> to vector<2x8x10xf32>
    %124 = vector.shape_cast %119 : vector<2x8x10xf32> to vector<2x8x1x10xf32>
    %125 = vector.shape_cast %121 : vector<2x8x10xf32> to vector<2x1x8x10xf32>
    %126 = vector.broadcast %124 : vector<2x8x1x10xf32> to vector<2x8x8x10xf32>
    %127 = vector.broadcast %125 : vector<2x1x8x10xf32> to vector<2x8x8x10xf32>
    %128 = arith.mulf %126, %127 : vector<2x8x8x10xf32>
    %cst_71 = arith.constant dense<0xFF800000> : vector<2x8x10xf32>
    %129 = vector.multi_reduction <maximumf>, %128, %cst_71 [2] : vector<2x8x8x10xf32> to vector<2x8x10xf32>
    %130 = vector.shape_cast %129 : vector<2x8x10xf32> to vector<2x8x1x10xf32>
    %131 = vector.broadcast %130 : vector<2x8x1x10xf32> to vector<2x8x8x10xf32>
    %132 = arith.subf %128, %131 : vector<2x8x8x10xf32>
    %133 = math.exp %132 : vector<2x8x8x10xf32>
    %134 = vector.shape_cast %123 : vector<2x8x10xf32> to vector<2x1x8x10xf32>
    %135 = vector.broadcast %134 : vector<2x1x8x10xf32> to vector<2x8x8x10xf32>
    %136 = arith.mulf %133, %135 : vector<2x8x8x10xf32>
    %cst_72 = arith.constant dense<0.000000e+00> : vector<2x8x10xf32>
    %137 = vector.multi_reduction <add>, %136, %cst_72 [2] : vector<2x8x8x10xf32> to vector<2x8x10xf32>
    %cst_73 = arith.constant dense<0.000000e+00> : vector<2x8x10xf32>
    %138 = vector.multi_reduction <add>, %133, %cst_73 [2] : vector<2x8x8x10xf32> to vector<2x8x10xf32>
    %139 = tpu.reciprocal %138 {approx = true} : vector<2x8x10xf32> -> vector<2x8x10xf32>
    %140 = arith.mulf %137, %139 : vector<2x8x10xf32>
    %141 = vector.shape_cast %140 : vector<2x8x10xf32> to vector<16x10xf32>
    %cst_74 = arith.constant dense<0.000000e+00> : vector<16x10xf32>
    %142 = tpu.matmul %141, %104, %cst_74 {dimension_numbers = #tpu.dot_dimension_numbers<[1], [0], [0], [1], [0, 0, 1, 1], [], []>} : vector<16x10xf32>, vector<10x10xf32>, vector<16x10xf32> -> vector<16x10xf32>
    %143 = vector.broadcast %105 : vector<1x10xf32> to vector<16x10xf32>
    %144 = arith.addf %142, %143 : vector<16x10xf32>
    %145 = arith.addf %114, %144 : vector<16x10xf32>
    %cst_75 = arith.constant dense<0.000000e+00> : vector<16xf32>
    %146 = vector.multi_reduction <add>, %145, %cst_75 [1] : vector<16x10xf32> to vector<16xf32>
    %147 = vector.shape_cast %146 : vector<16xf32> to vector<16x1xf32>
    %cst_76 = arith.constant 1.000000e+01 : f32
    %148 = vector.broadcast %cst_76 : f32 to vector<16x1xf32>
    %149 = arith.divf %147, %148 : vector<16x1xf32>
    %150 = vector.broadcast %149 : vector<16x1xf32> to vector<16x10xf32>
    %151 = arith.subf %145, %150 : vector<16x10xf32>
    %152 = arith.mulf %151, %151 : vector<16x10xf32>
    %cst_77 = arith.constant dense<0.000000e+00> : vector<16xf32>
    %153 = vector.multi_reduction <add>, %152, %cst_77 [1] : vector<16x10xf32> to vector<16xf32>
    %154 = vector.shape_cast %153 : vector<16xf32> to vector<16x1xf32>
    %cst_78 = arith.constant 1.000000e+01 : f32
    %155 = vector.broadcast %cst_78 : f32 to vector<16x1xf32>
    %156 = arith.divf %154, %155 : vector<16x1xf32>
    %157 = vector.broadcast %149 : vector<16x1xf32> to vector<16x10xf32>
    %158 = arith.subf %145, %157 : vector<16x10xf32>
    %cst_79 = arith.constant 9.99999974E-6 : f32
    %159 = vector.broadcast %cst_79 : f32 to vector<16x1xf32>
    %160 = arith.addf %156, %159 : vector<16x1xf32>
    %161 = math.rsqrt %160 : vector<16x1xf32>
    %162 = vector.broadcast %161 : vector<16x1xf32> to vector<16x10xf32>
    %163 = arith.mulf %158, %162 : vector<16x10xf32>
    %164 = vector.broadcast %106 : vector<1x10xf32> to vector<16x10xf32>
    %165 = arith.mulf %163, %164 : vector<16x10xf32>
    %166 = vector.broadcast %107 : vector<1x10xf32> to vector<16x10xf32>
    %167 = arith.addf %165, %166 : vector<16x10xf32>
    %cst_80 = arith.constant dense<0.000000e+00> : vector<16x1024xf32>
    %168 = tpu.matmul %167, %108, %cst_80 {dimension_numbers = #tpu.dot_dimension_numbers<[1], [0], [0], [1], [0, 0, 1, 1], [], []>} : vector<16x10xf32>, vector<10x1024xf32>, vector<16x1024xf32> -> vector<16x1024xf32>
    %169 = vector.broadcast %109 : vector<1x1024xf32> to vector<16x1024xf32>
    %170 = arith.addf %168, %169 : vector<16x1024xf32>
    %cst_81 = arith.constant 0.000000e+00 : f32
    %171 = vector.broadcast %cst_81 : f32 to vector<16x1024xf32>
    %172 = arith.maximumf %170, %171 : vector<16x1024xf32>
    %cst_82 = arith.constant dense<0.000000e+00> : vector<16x10xf32>
    %173 = tpu.matmul %172, %110, %cst_82 {dimension_numbers = #tpu.dot_dimension_numbers<[1], [0], [0], [1], [0, 0, 1, 1], [], []>} : vector<16x1024xf32>, vector<1024x10xf32>, vector<16x10xf32> -> vector<16x10xf32>
    %174 = vector.broadcast %111 : vector<1x10xf32> to vector<16x10xf32>
    %175 = arith.addf %173, %174 : vector<16x10xf32>
    %176 = arith.addf %167, %175 : vector<16x10xf32>
    %cst_83 = arith.constant dense<0.000000e+00> : vector<16xf32>
    %177 = vector.multi_reduction <add>, %176, %cst_83 [1] : vector<16x10xf32> to vector<16xf32>
    %178 = vector.shape_cast %177 : vector<16xf32> to vector<16x1xf32>
    %cst_84 = arith.constant 1.000000e+01 : f32
    %179 = vector.broadcast %cst_84 : f32 to vector<16x1xf32>
    %180 = arith.divf %178, %179 : vector<16x1xf32>
    %181 = vector.broadcast %180 : vector<16x1xf32> to vector<16x10xf32>
    %182 = arith.subf %176, %181 : vector<16x10xf32>
    %183 = arith.mulf %182, %182 : vector<16x10xf32>
    %cst_85 = arith.constant dense<0.000000e+00> : vector<16xf32>
    %184 = vector.multi_reduction <add>, %183, %cst_85 [1] : vector<16x10xf32> to vector<16xf32>
    %185 = vector.shape_cast %184 : vector<16xf32> to vector<16x1xf32>
    %cst_86 = arith.constant 1.000000e+01 : f32
    %186 = vector.broadcast %cst_86 : f32 to vector<16x1xf32>
    %187 = arith.divf %185, %186 : vector<16x1xf32>
    %188 = vector.broadcast %180 : vector<16x1xf32> to vector<16x10xf32>
    %189 = arith.subf %176, %188 : vector<16x10xf32>
    %cst_87 = arith.constant 9.99999974E-6 : f32
    %190 = vector.broadcast %cst_87 : f32 to vector<16x1xf32>
    %191 = arith.addf %187, %190 : vector<16x1xf32>
    %192 = math.rsqrt %191 : vector<16x1xf32>
    %193 = vector.broadcast %192 : vector<16x1xf32> to vector<16x10xf32>
    %194 = arith.mulf %189, %193 : vector<16x10xf32>
    %195 = vector.broadcast %112 : vector<1x10xf32> to vector<16x10xf32>
    %196 = arith.mulf %194, %195 : vector<16x10xf32>
    %197 = vector.broadcast %113 : vector<1x10xf32> to vector<16x10xf32>
    %198 = arith.addf %196, %197 : vector<16x10xf32>
    %199 = vector.shape_cast %198 : vector<16x10xf32> to vector<2x8x10xf32>
    %200 = vector.extract_strided_slice %199 {offsets = [0, 7, 0], sizes = [2, 1, 10], strides = [1, 1, 1]} : vector<2x8x10xf32> to vector<2x1x10xf32>
    %201 = vector.shape_cast %200 : vector<2x1x10xf32> to vector<2x10xf32>
    %c0_88 = arith.constant 0 : index
    %c0_89 = arith.constant 0 : index
    %202 = vector.load %arg36[%c0_88, %c0_89] : memref<2x7xf32, #tpu.memory_space<vmem>>, vector<2x7xf32>
    tpu.vector_store %arg36[%c0_88, %c0_89], %100 {strides = array<i32>} : memref<2x7xf32, #tpu.memory_space<vmem>>, vector<2x7xf32>,
    %c0_90 = arith.constant 0 : index
    %c0_91 = arith.constant 0 : index
    %203 = vector.load %arg37[%c0_90, %c0_91] : memref<2x10xf32, #tpu.memory_space<vmem>>, vector<2x10xf32>
    tpu.vector_store %arg37[%c0_90, %c0_91], %201 {strides = array<i32>} : memref<2x10xf32, #tpu.memory_space<vmem>>, vector<2x10xf32>,
    %c0_92 = arith.constant 0 : index
    %c0_93 = arith.constant 0 : index
    %204 = vector.load %arg26[%c0_92, %c0_93] : memref<7x32xf32, #tpu.memory_space<vmem>>, vector<7x32xf32>
    %cst_94 = arith.constant dense<0.000000e+00> : vector<2x32xf32>
    %205 = tpu.matmul %100, %204, %cst_94 {dimension_numbers = #tpu.dot_dimension_numbers<[1], [0], [0], [1], [0, 0, 1, 1], [], []>} : vector<2x7xf32>, vector<7x32xf32>, vector<2x32xf32> -> vector<2x32xf32>
    %c0_95 = arith.constant 0 : index
    %c0_96 = arith.constant 0 : index
    %206 = vector.load %arg27[%c0_95, %c0_96] : memref<10x32xf32, #tpu.memory_space<vmem>>, vector<10x32xf32>
    %cst_97 = arith.constant dense<0.000000e+00> : vector<2x32xf32>
    %207 = tpu.matmul %201, %206, %cst_97 {dimension_numbers = #tpu.dot_dimension_numbers<[1], [0], [0], [1], [0, 0, 1, 1], [], []>} : vector<2x10xf32>, vector<10x32xf32>, vector<2x32xf32> -> vector<2x32xf32>
    %208 = arith.addf %205, %207 : vector<2x32xf32>
    %c0_98 = arith.constant 0 : index
    %c0_99 = arith.constant 0 : index
    %209 = vector.load %arg28[%c0_98, %c0_99] : memref<1x32xf32, #tpu.memory_space<vmem>>, vector<1x32xf32>
    %210 = vector.broadcast %209 : vector<1x32xf32> to vector<2x32xf32>
    %211 = arith.addf %208, %210 : vector<2x32xf32>
    %cst_100 = arith.constant 0.000000e+00 : f32
    %212 = vector.broadcast %cst_100 : f32 to vector<2x32xf32>
    %213 = arith.maximumf %211, %212 : vector<2x32xf32>
    %c0_101 = arith.constant 0 : index
    %c0_102 = arith.constant 0 : index
    %214 = vector.load %arg29[%c0_101, %c0_102] : memref<32x16xf32, #tpu.memory_space<vmem>>, vector<32x16xf32>
    %cst_103 = arith.constant dense<0.000000e+00> : vector<2x16xf32>
    %215 = tpu.matmul %213, %214, %cst_103 {dimension_numbers = #tpu.dot_dimension_numbers<[1], [0], [0], [1], [0, 0, 1, 1], [], []>} : vector<2x32xf32>, vector<32x16xf32>, vector<2x16xf32> -> vector<2x16xf32>
    %c0_104 = arith.constant 0 : index
    %c0_105 = arith.constant 0 : index
    %216 = vector.load %arg30[%c0_104, %c0_105] : memref<1x16xf32, #tpu.memory_space<vmem>>, vector<1x16xf32>
    %217 = vector.broadcast %216 : vector<1x16xf32> to vector<2x16xf32>
    %218 = arith.addf %215, %217 : vector<2x16xf32>
    %cst_106 = arith.constant 0.000000e+00 : f32
    %219 = vector.broadcast %cst_106 : f32 to vector<2x16xf32>
    %220 = arith.maximumf %218, %219 : vector<2x16xf32>
    %c0_107 = arith.constant 0 : index
    %c0_108 = arith.constant 0 : index
    %221 = vector.load %arg31[%c0_107, %c0_108] : memref<16x8xf32, #tpu.memory_space<vmem>>, vector<16x8xf32>
    %cst_109 = arith.constant dense<0.000000e+00> : vector<2x8xf32>
    %222 = tpu.matmul %220, %221, %cst_109 {dimension_numbers = #tpu.dot_dimension_numbers<[1], [0], [0], [1], [0, 0, 1, 1], [], []>} : vector<2x16xf32>, vector<16x8xf32>, vector<2x8xf32> -> vector<2x8xf32>
    %c0_110 = arith.constant 0 : index
    %c0_111 = arith.constant 0 : index
    %223 = vector.load %arg32[%c0_110, %c0_111] : memref<1x8xf32, #tpu.memory_space<vmem>>, vector<1x8xf32>
    %224 = vector.broadcast %223 : vector<1x8xf32> to vector<2x8xf32>
    %225 = arith.addf %222, %224 : vector<2x8xf32>
    %cst_112 = arith.constant 0.000000e+00 : f32
    %226 = vector.broadcast %cst_112 : f32 to vector<2x8xf32>
    %227 = arith.maximumf %225, %226 : vector<2x8xf32>
    %c0_113 = arith.constant 0 : index
    %c0_114 = arith.constant 0 : index
    %228 = vector.load %arg33[%c0_113, %c0_114] : memref<8x1xf32, #tpu.memory_space<vmem>>, vector<8x1xf32>
    %cst_115 = arith.constant dense<0.000000e+00> : vector<2x1xf32>
    %229 = tpu.matmul %227, %228, %cst_115 {dimension_numbers = #tpu.dot_dimension_numbers<[1], [0], [0], [1], [0, 0, 1, 1], [], []>} : vector<2x8xf32>, vector<8x1xf32>, vector<2x1xf32> -> vector<2x1xf32>
    %c0_116 = arith.constant 0 : index
    %c0_117 = arith.constant 0 : index
    %230 = vector.load %arg34[%c0_116, %c0_117] : memref<1x1xf32, #tpu.memory_space<vmem>>, vector<1x1xf32>
    %231 = vector.broadcast %230 : vector<1x1xf32> to vector<2x1xf32>
    %232 = arith.addf %229, %231 : vector<2x1xf32>
    %c0_118 = arith.constant 0 : index
    %c0_119 = arith.constant 0 : index
    %233 = vector.load %arg35[%c0_118, %c0_119] : memref<2x1xf32, #tpu.memory_space<vmem>>, vector<2x1xf32>
    tpu.vector_store %arg35[%c0_118, %c0_119], %232 {strides = array<i32>} : memref<2x1xf32, #tpu.memory_space<vmem>>, vector<2x1xf32>,
    return
  }
}

</mosaic_0001>

<llo_original>
// kernel: tpu_custom_call.1
$region0: #{tpu_custom_call.1}
  #allocation0 [shape = 'u32[]', space=smem, size = 0x4, offset = 0x4, fixed_abs, tag = 'smem constant byte address 0x4 - core index']
  #allocation1 [shape = 'u32[144,128]{1,0:T(1,128)}', space=vmem, size = 0x12000, scoped, tag = 'internal scratch']
  #allocation2 [shape = 'f32[1,1]{1,0:T(1,128)S(1)}', space=vmem, size = 0x200, scoped, tag = 'scoped memory for tpu_custom_call.1']
  %s0 = inlined_call_operand.smem [shape: u32[38], index: -1, kind: input, shape index: {}]
  %s1 = sld [smem:[%s0]]
  %s2 = scalar_lea.smem %s0, 1
  %s3 = sld [smem:[%s2]]
  %s4 = scalar_lea.smem %s0, 2
  %s5 = sld [smem:[%s4]]
  %s6 = scalar_lea.smem %s0, 3
  %s7 = sld [smem:[%s6]]
  %s8 = scalar_lea.smem %s0, 4
  %s9 = sld [smem:[%s8]]
  %s10 = scalar_lea.smem %s0, 5
  %s11 = sld [smem:[%s10]]
  %s12 = scalar_lea.smem %s0, 6
  %s13 = sld [smem:[%s12]]
  %s14 = scalar_lea.smem %s0, 7
  %s15 = sld [smem:[%s14]]
  %s16 = scalar_lea.smem %s0, 8
  %s17 = sld [smem:[%s16]]
  %s18 = scalar_lea.smem %s0, 9
  %s19 = sld [smem:[%s18]]
  %s20 = scalar_lea.smem %s0, 10
  %s21 = sld [smem:[%s20]]
  %s22 = scalar_lea.smem %s0, 11
  %s23 = sld [smem:[%s22]]
  %s24 = scalar_lea.smem %s0, 12
  %s25 = sld [smem:[%s24]]
  %s26 = scalar_lea.smem %s0, 13
  %s27 = sld [smem:[%s26]]
  %s28 = scalar_lea.smem %s0, 14
  %s29 = sld [smem:[%s28]]
  %s30 = scalar_lea.smem %s0, 15
  %s31 = sld [smem:[%s30]]
  %s32 = scalar_lea.smem %s0, 16
  %s33 = sld [smem:[%s32]]
  %s34 = scalar_lea.smem %s0, 17
  %s35 = sld [smem:[%s34]]
  %s36 = scalar_lea.smem %s0, 18
  %s37 = sld [smem:[%s36]]
  %s38 = scalar_lea.smem %s0, 19
  %s39 = sld [smem:[%s38]]
  %s40 = scalar_lea.smem %s0, 20
  %s41 = sld [smem:[%s40]]
  %s42 = scalar_lea.smem %s0, 21
  %s43 = sld [smem:[%s42]]
  %s44 = scalar_lea.smem %s0, 22
  %s45 = sld [smem:[%s44]]
  %s46 = scalar_lea.smem %s0, 23
  %s47 = sld [smem:[%s46]]
  %s48 = scalar_lea.smem %s0, 24
  %s49 = sld [smem:[%s48]]
  %s50 = scalar_lea.smem %s0, 25
  %s51 = sld [smem:[%s50]]
  %s52 = scalar_lea.smem %s0, 26
  %s53 = sld [smem:[%s52]]
  %s54 = scalar_lea.smem %s0, 27
  %s55 = sld [smem:[%s54]]
  %s56 = scalar_lea.smem %s0, 28
  %s57 = sld [smem:[%s56]]
  %s58 = scalar_lea.smem %s0, 29
  %s59 = sld [smem:[%s58]]
  %s60 = scalar_lea.smem %s0, 30
  %s61 = sld [smem:[%s60]]
  %s62 = scalar_lea.smem %s0, 31
  %s63 = sld [smem:[%s62]]
  %s64 = scalar_lea.smem %s0, 32
  %s65 = sld [smem:[%s64]]
  %s66 = scalar_lea.smem %s0, 33
  %s67 = sld [smem:[%s66]]
  %s68 = scalar_lea.smem %s0, 34
  %s69 = sld [smem:[%s68]]
  %s70 = scalar_lea.smem %s0, 35
  %s71 = sld [smem:[%s70]]
  %s72 = scalar_lea.smem %s0, 36
  %s73 = sld [smem:[%s72]]
  %s74 = scalar_lea.smem %s0, 37
  %s75 = sld [smem:[%s74]]
  %76 = xla_tuple %s71, %s73, %s75
  %s77 = sld [smem:[#allocation0]]
  $region166: #{tpu_custom_call.1} parent=0
    _
  %s79 = ssub.s32 1, %s77
  %s80 = scalar_select 0, %s79, %s77
  %v81 = vstv %s69
  %82 = vst [vmem:[#allocation2] sm:$0x1] %v81
  $region1: #{tpu_custom_call.1} parent=0
    #allocation3 [shape = 'u8[1024]{0}', space=vmem, size = 0x400, scoped, tag = 'output window, operand 1, single buffered']
    #allocation4 [shape = 's32[1]{0}', space=sflag, size = 0x4, scoped, tag = 'scoped memory for tpu_custom_call.1']
    #allocation5 [shape = 'u8[1024]{0}', space=vmem, size = 0x400, scoped, tag = 'output window, operand 2, single buffered']
    #allocation6 [shape = 's32[1]{0}', space=sflag, size = 0x4, scoped, tag = 'scoped memory for tpu_custom_call.1']
    %83 = vsyncpa [#allocation4], 0
    %84 = vsyncpa [#allocation6], 0
    // Predicated region
    $region2: #{tpu_custom_call.1} parent=1 // pred_check
      _
    $region3: #{tpu_custom_call.1} parent=1 // pred_check_branch
      %86 = sbr.rel (0) target = $region5
    $region4: #{tpu_custom_call.1} parent=1 // pred_region
      _
    $region5: #{tpu_custom_call.1} parent=1 // pred_fallthru
      _
    // Predicated region
    $region6: #{tpu_custom_call.1} parent=1 // pred_check
      _
    $region7: #{tpu_custom_call.1} parent=1 // pred_check_branch
      %88 = sbr.rel (0) target = $region9
    $region8: #{tpu_custom_call.1} parent=1 // pred_region
      _
    $region9: #{tpu_custom_call.1} parent=1 // pred_fallthru
      _
    // Predicated region
    $region10: #{tpu_custom_call.1} parent=1 // pred_check
      _
    $region11: #{tpu_custom_call.1} parent=1 // pred_check_branch
      %90 = sbr.rel (0) target = $region13
    $region12: #{tpu_custom_call.1} parent=1 // pred_region
      _
    $region13: #{tpu_custom_call.1} parent=1 // pred_fallthru
      _
    // Predicated region
    $region14: #{tpu_custom_call.1} parent=1 // pred_check
      _
    $region15: #{tpu_custom_call.1} parent=1 // pred_check_branch
      %92 = sbr.rel (0) target = $region17
    $region16: #{tpu_custom_call.1} parent=1 // pred_region
      _
    $region17: #{tpu_custom_call.1} parent=1 // pred_fallthru
      _
    // Predicated region
    $region18: #{tpu_custom_call.1} parent=1 // pred_check
      _
    $region19: #{tpu_custom_call.1} parent=1 // pred_check_branch
      %94 = sbr.rel (0) target = $region21
    $region20: #{tpu_custom_call.1} parent=1 // pred_region
      _
    $region21: #{tpu_custom_call.1} parent=1 // pred_fallthru
      _
    // Predicated region
    $region22: #{tpu_custom_call.1} parent=1 // pred_check
      _
    $region23: #{tpu_custom_call.1} parent=1 // pred_check_branch
      %96 = sbr.rel (0) target = $region25
    $region24: #{tpu_custom_call.1} parent=1 // pred_region
      _
    $region25: #{tpu_custom_call.1} parent=1 // pred_fallthru
      _
    // Predicated region
    $region26: #{tpu_custom_call.1} parent=1 // pred_check
      _
    $region27: #{tpu_custom_call.1} parent=1 // pred_check_branch
      %98 = sbr.rel (0) target = $region29
    $region28: #{tpu_custom_call.1} parent=1 // pred_region
      _
    $region29: #{tpu_custom_call.1} parent=1 // pred_fallthru
      _
    // Predicated region
    $region30: #{tpu_custom_call.1} parent=1 // pred_check
      _
    $region31: #{tpu_custom_call.1} parent=1 // pred_check_branch
      %100 = sbr.rel (0) target = $region33
    $region32: #{tpu_custom_call.1} parent=1 // pred_region
      _
    $region33: #{tpu_custom_call.1} parent=1 // pred_fallthru
      _
    // Predicated region
    $region34: #{tpu_custom_call.1} parent=1 // pred_check
      _
    $region35: #{tpu_custom_call.1} parent=1 // pred_check_branch
      %102 = sbr.rel (0) target = $region37
    $region36: #{tpu_custom_call.1} parent=1 // pred_region
      _
    $region37: #{tpu_custom_call.1} parent=1 // pred_fallthru
      _
    // Predicated region
    $region38: #{tpu_custom_call.1} parent=1 // pred_check
      _
    $region39: #{tpu_custom_call.1} parent=1 // pred_check_branch
      %104 = sbr.rel (0) target = $region41
    $region40: #{tpu_custom_call.1} parent=1 // pred_region
      _
    $region41: #{tpu_custom_call.1} parent=1 // pred_fallthru
      _
    // Predicated region
    $region42: #{tpu_custom_call.1} parent=1 // pred_check
      _
    $region43: #{tpu_custom_call.1} parent=1 // pred_check_branch
      %106 = sbr.rel (0) target = $region45
    $region44: #{tpu_custom_call.1} parent=1 // pred_region
      _
    $region45: #{tpu_custom_call.1} parent=1 // pred_fallthru
      _
    // Predicated region
    $region46: #{tpu_custom_call.1} parent=1 // pred_check
      _
    $region47: #{tpu_custom_call.1} parent=1 // pred_check_branch
      %108 = sbr.rel (0) target = $region49
    $region48: #{tpu_custom_call.1} parent=1 // pred_region
      _
    $region49: #{tpu_custom_call.1} parent=1 // pred_fallthru
      _
    // Predicated region
    $region50: #{tpu_custom_call.1} parent=1 // pred_check
      _
    $region51: #{tpu_custom_call.1} parent=1 // pred_check_branch
      %110 = sbr.rel (0) target = $region53
    $region52: #{tpu_custom_call.1} parent=1 // pred_region
      _
    $region53: #{tpu_custom_call.1} parent=1 // pred_fallthru
      _
    // Predicated region
    $region54: #{tpu_custom_call.1} parent=1 // pred_check
      _
    $region55: #{tpu_custom_call.1} parent=1 // pred_check_branch
      %112 = sbr.rel (0) target = $region57
    $region56: #{tpu_custom_call.1} parent=1 // pred_region
      _
    $region57: #{tpu_custom_call.1} parent=1 // pred_fallthru
      _
    // Predicated region
    $region58: #{tpu_custom_call.1} parent=1 // pred_check
      _
    $region59: #{tpu_custom_call.1} parent=1 // pred_check_branch
      %114 = sbr.rel (0) target = $region61
    $region60: #{tpu_custom_call.1} parent=1 // pred_region
      _
    $region61: #{tpu_custom_call.1} parent=1 // pred_fallthru
      _
    // Predicated region
    $region62: #{tpu_custom_call.1} parent=1 // pred_check
      _
    $region63: #{tpu_custom_call.1} parent=1 // pred_check_branch
      %116 = sbr.rel (0) target = $region65
    $region64: #{tpu_custom_call.1} parent=1 // pred_region
      _
    $region65: #{tpu_custom_call.1} parent=1 // pred_fallthru
      _
    // Predicated region
    $region66: #{tpu_custom_call.1} parent=1 // pred_check
      _
    $region67: #{tpu_custom_call.1} parent=1 // pred_check_branch
      %118 = sbr.rel (0) target = $region69
    $region68: #{tpu_custom_call.1} parent=1 // pred_region
      _
    $region69: #{tpu_custom_call.1} parent=1 // pred_fallthru
      _
    // Predicated region
    $region70: #{tpu_custom_call.1} parent=1 // pred_check
      _
    $region71: #{tpu_custom_call.1} parent=1 // pred_check_branch
      %120 = sbr.rel (0) target = $region73
    $region72: #{tpu_custom_call.1} parent=1 // pred_region
      _
    $region73: #{tpu_custom_call.1} parent=1 // pred_fallthru
      _
    // Predicated region
    $region74: #{tpu_custom_call.1} parent=1 // pred_check
      _
    $region75: #{tpu_custom_call.1} parent=1 // pred_check_branch
      %122 = sbr.rel (0) target = $region77
    $region76: #{tpu_custom_call.1} parent=1 // pred_region
      _
    $region77: #{tpu_custom_call.1} parent=1 // pred_fallthru
      _
    // Predicated region
    $region78: #{tpu_custom_call.1} parent=1 // pred_check
      _
    $region79: #{tpu_custom_call.1} parent=1 // pred_check_branch
      %124 = sbr.rel (0) target = $region81
    $region80: #{tpu_custom_call.1} parent=1 // pred_region
      _
    $region81: #{tpu_custom_call.1} parent=1 // pred_fallthru
      _
    // Predicated region
    $region82: #{tpu_custom_call.1} parent=1 // pred_check
      _
    $region83: #{tpu_custom_call.1} parent=1 // pred_check_branch
      %126 = sbr.rel (0) target = $region85
    $region84: #{tpu_custom_call.1} parent=1 // pred_region
      _
    $region85: #{tpu_custom_call.1} parent=1 // pred_fallthru
      _
    // Predicated region
    $region86: #{tpu_custom_call.1} parent=1 // pred_check
      _
    $region87: #{tpu_custom_call.1} parent=1 // pred_check_branch
      %128 = sbr.rel (0) target = $region89
    $region88: #{tpu_custom_call.1} parent=1 // pred_region
      _
    $region89: #{tpu_custom_call.1} parent=1 // pred_fallthru
      _
    // Predicated region
    $region90: #{tpu_custom_call.1} parent=1 // pred_check
      _
    $region91: #{tpu_custom_call.1} parent=1 // pred_check_branch
      %130 = sbr.rel (0) target = $region93
    $region92: #{tpu_custom_call.1} parent=1 // pred_region
      _
    $region93: #{tpu_custom_call.1} parent=1 // pred_fallthru
      _
    // Predicated region
    $region94: #{tpu_custom_call.1} parent=1 // pred_check
      _
    $region95: #{tpu_custom_call.1} parent=1 // pred_check_branch
      %132 = sbr.rel (0) target = $region97
    $region96: #{tpu_custom_call.1} parent=1 // pred_region
      _
    $region97: #{tpu_custom_call.1} parent=1 // pred_fallthru
      _
    // Predicated region
    $region98: #{tpu_custom_call.1} parent=1 // pred_check
      _
    $region99: #{tpu_custom_call.1} parent=1 // pred_check_branch
      %134 = sbr.rel (0) target = $region101
    $region100: #{tpu_custom_call.1} parent=1 // pred_region
      _
    $region101: #{tpu_custom_call.1} parent=1 // pred_fallthru
      _
    // Predicated region
    $region102: #{tpu_custom_call.1} parent=1 // pred_check
      _
    $region103: #{tpu_custom_call.1} parent=1 // pred_check_branch
      %136 = sbr.rel (0) target = $region105
    $region104: #{tpu_custom_call.1} parent=1 // pred_region
      _
    $region105: #{tpu_custom_call.1} parent=1 // pred_fallthru
      _
    // Predicated region
    $region106: #{tpu_custom_call.1} parent=1 // pred_check
      _
    $region107: #{tpu_custom_call.1} parent=1 // pred_check_branch
      %138 = sbr.rel (0) target = $region109
    $region108: #{tpu_custom_call.1} parent=1 // pred_region
      _
    $region109: #{tpu_custom_call.1} parent=1 // pred_fallthru
      _
    // Predicated region
    $region110: #{tpu_custom_call.1} parent=1 // pred_check
      _
    $region111: #{tpu_custom_call.1} parent=1 // pred_check_branch
      %140 = sbr.rel (0) target = $region113
    $region112: #{tpu_custom_call.1} parent=1 // pred_region
      _
    $region113: #{tpu_custom_call.1} parent=1 // pred_fallthru
      _
    // Predicated region
    $region114: #{tpu_custom_call.1} parent=1 // pred_check
      _
    $region115: #{tpu_custom_call.1} parent=1 // pred_check_branch
      %142 = sbr.rel (0) target = $region117
    $region116: #{tpu_custom_call.1} parent=1 // pred_region
      _
    $region117: #{tpu_custom_call.1} parent=1 // pred_fallthru
      _
    // Predicated region
    $region118: #{tpu_custom_call.1} parent=1 // pred_check
      _
    $region119: #{tpu_custom_call.1} parent=1 // pred_check_branch
      %144 = sbr.rel (0) target = $region121
    $region120: #{tpu_custom_call.1} parent=1 // pred_region
      _
    $region121: #{tpu_custom_call.1} parent=1 // pred_fallthru
      _
    // Predicated region
    $region122: #{tpu_custom_call.1} parent=1 // pred_check
      _
    $region123: #{tpu_custom_call.1} parent=1 // pred_check_branch
      %146 = sbr.rel (0) target = $region125
    $region124: #{tpu_custom_call.1} parent=1 // pred_region
      _
    $region125: #{tpu_custom_call.1} parent=1 // pred_fallthru
      _
    // Predicated region
    $region126: #{tpu_custom_call.1} parent=1 // pred_check
      _
    $region127: #{tpu_custom_call.1} parent=1 // pred_check_branch
      %148 = sbr.rel (0) target = $region129
    $region128: #{tpu_custom_call.1} parent=1 // pred_region
      _
    $region129: #{tpu_custom_call.1} parent=1 // pred_fallthru
      _
    // Predicated region
    $region130: #{tpu_custom_call.1} parent=1 // pred_check
      _
    $region131: #{tpu_custom_call.1} parent=1 // pred_check_branch
      %150 = sbr.rel (0) target = $region133
    $region132: #{tpu_custom_call.1} parent=1 // pred_region
      _
    $region133: #{tpu_custom_call.1} parent=1 // pred_fallthru
      _
    // Predicated region
    $region134: #{tpu_custom_call.1} parent=1 // pred_check
      _
    $region135: #{tpu_custom_call.1} parent=1 // pred_check_branch
      %152 = sbr.rel (0) target = $region137
    $region136: #{tpu_custom_call.1} parent=1 // pred_region
      _
    $region137: #{tpu_custom_call.1} parent=1 // pred_fallthru
      _
    // Predicated region
    $region138: #{tpu_custom_call.1} parent=1 // pred_check
      _
    $region139: #{tpu_custom_call.1} parent=1 // pred_check_branch
      %154 = sbr.rel (0) target = $region141
    $region140: #{tpu_custom_call.1} parent=1 // pred_region
      _
    $region141: #{tpu_custom_call.1} parent=1 // pred_fallthru
      _
    %v155 = vld [vmem:[%s1] sm:$0xff]
    %v156 = vld [vmem:[%s1 + $0x8] sm:$0xff]
    %v157 = vld [vmem:[%s5] sm:$0x7f]
    %v158 = vld [vmem:[%s7] sm:$0x1]
    %v159 = vld [vmem:[%s9] sm:$0x7f]
    %v160 = vld [vmem:[%s11] sm:$0x1]
    %v161 = vld [vmem:[%s13] sm:$0x1]
    %v162 = vld [vmem:[%s15] sm:$0x1]
    %v163 = vld [vmem:[%s17] sm:$0x7f]
    %v164 = vld [vmem:[%s17 + $0x8] sm:$0x7f]
    %v165 = vld [vmem:[%s17 + $0x10] sm:$0x7f]
    %v166 = vld [vmem:[%s17 + $0x18] sm:$0x7f]
    %v167 = vld [vmem:[%s19] sm:$0xf]
    %v168 = vld [vmem:[%s21] sm:$0xff]
    %v169 = vld [vmem:[%s21 + $0x8] sm:$0xff]
    %v170 = vld [vmem:[%s21 + $0x10] sm:$0xff]
    %v171 = vld [vmem:[%s21 + $0x18] sm:$0xff]
    %v172 = vld [vmem:[%s21 + $0x20] sm:$0xff]
    %v173 = vld [vmem:[%s21 + $0x28] sm:$0xff]
    %v174 = vld [vmem:[%s21 + $0x30] sm:$0xff]
    %v175 = vld [vmem:[%s21 + $0x38] sm:$0xff]
    %v176 = vld [vmem:[%s21 + $0x40] sm:$0xff]
    %v177 = vld [vmem:[%s21 + $0x48] sm:$0xff]
    %v178 = vld [vmem:[%s21 + $0x50] sm:$0xff]
    %v179 = vld [vmem:[%s21 + $0x58] sm:$0xff]
    %v180 = vld [vmem:[%s21 + $0x60] sm:$0xff]
    %v181 = vld [vmem:[%s21 + $0x68] sm:$0xff]
    %v182 = vld [vmem:[%s21 + $0x70] sm:$0xff]
    %v183 = vld [vmem:[%s21 + $0x78] sm:$0xff]
    %v184 = vld [vmem:[%s21 + $0x80] sm:$0xff]
    %v185 = vld [vmem:[%s21 + $0x88] sm:$0xff]
    %v186 = vld [vmem:[%s21 + $0x90] sm:$0xff]
    %v187 = vld [vmem:[%s21 + $0x98] sm:$0xff]
    %v188 = vld [vmem:[%s21 + $0xa0] sm:$0xff]
    %v189 = vld [vmem:[%s21 + $0xa8] sm:$0xff]
    %v190 = vld [vmem:[%s21 + $0xb0] sm:$0xff]
    %v191 = vld [vmem:[%s21 + $0xb8] sm:$0xff]
    %v192 = vld [vmem:[%s21 + $0xc0] sm:$0xff]
    %v193 = vld [vmem:[%s21 + $0xc8] sm:$0xff]
    %v194 = vld [vmem:[%s21 + $0xd0] sm:$0xff]
    %v195 = vld [vmem:[%s21 + $0xd8] sm:$0xff]
    %v196 = vld [vmem:[%s21 + $0xe0] sm:$0xff]
    %v197 = vld [vmem:[%s21 + $0xe8] sm:$0xff]
    %v198 = vld [vmem:[%s21 + $0xf0] sm:$0xff]
    %v199 = vld [vmem:[%s21 + $0xf8] sm:$0xff]
    %v200 = vld [vmem:[%s21 + $0x100] sm:$0xff]
    %v201 = vld [vmem:[%s21 + $0x108] sm:$0xff]
    %v202 = vld [vmem:[%s21 + $0x110] sm:$0xff]
    %v203 = vld [vmem:[%s21 + $0x118] sm:$0xff]
    %v204 = vld [vmem:[%s21 + $0x120] sm:$0xff]
    %v205 = vld [vmem:[%s21 + $0x128] sm:$0xff]
    %v206 = vld [vmem:[%s21 + $0x130] sm:$0xff]
    %v207 = vld [vmem:[%s21 + $0x138] sm:$0xff]
    %v208 = vld [vmem:[%s21 + $0x140] sm:$0xff]
    %v209 = vld [vmem:[%s21 + $0x148] sm:$0xff]
    %v210 = vld [vmem:[%s21 + $0x150] sm:$0xff]
    %v211 = vld [vmem:[%s21 + $0x158] sm:$0xff]
    %v212 = vld [vmem:[%s21 + $0x160] sm:$0xff]
    %v213 = vld [vmem:[%s21 + $0x168] sm:$0xff]
    %v214 = vld [vmem:[%s21 + $0x170] sm:$0xff]
    %v215 = vld [vmem:[%s21 + $0x178] sm:$0xff]
    %v216 = vld [vmem:[%s21 + $0x180] sm:$0xff]
    %v217 = vld [vmem:[%s21 + $0x188] sm:$0xff]
    %v218 = vld [vmem:[%s21 + $0x190] sm:$0xff]
    %v219 = vld [vmem:[%s21 + $0x198] sm:$0xff]
    %v220 = vld [vmem:[%s21 + $0x1a0] sm:$0xff]
    %v221 = vld [vmem:[%s21 + $0x1a8] sm:$0xff]
    %v222 = vld [vmem:[%s21 + $0x1b0] sm:$0xff]
    %v223 = vld [vmem:[%s21 + $0x1b8] sm:$0xff]
    %v224 = vld [vmem:[%s21 + $0x1c0] sm:$0xff]
    %v225 = vld [vmem:[%s21 + $0x1c8] sm:$0xff]
    %v226 = vld [vmem:[%s21 + $0x1d0] sm:$0xff]
    %v227 = vld [vmem:[%s21 + $0x1d8] sm:$0xff]
    %v228 = vld [vmem:[%s21 + $0x1e0] sm:$0xff]
    %v229 = vld [vmem:[%s21 + $0x1e8] sm:$0xff]
    %v230 = vld [vmem:[%s21 + $0x1f0] sm:$0xff]
    %v231 = vld [vmem:[%s21 + $0x1f8] sm:$0xff]
    %v232 = vld [vmem:[%s23] sm:$0x1]
    %v233 = vld [vmem:[%s25] sm:$0x1]
    %v234 = vld [vmem:[%s27] sm:$0x1]
    %v236 = vlaneseq
    %v237 = vshrl.u32 %v236, 7
    %v238 = vsub.s32 0, %v237
    %v239 = vrot.slane %v158, %v238
    %vm241 = vcmask 56320
    %v243 = vsel %vm241, %v155, 0
    %v246 = vsel %vm241, %v156, 0
    %vm248 = vcmask 1046528
    %v250 = vsel %vm248, %v157, 0
    %252 = vmatprep.subr.mxu0 0.0
    %253 = vmatpush1.msra.mxu0 %v250
    %254 = vmatprep.subr.mxu0 0.0
    %255 = vmatpush1.msra.mxu0 0.0
    %256 = vmatprep.subr.mxu0 0.0
    %257 = vmatpush1.msra.mxu0 0.0
    %258 = vmatprep.subr.mxu0 0.0
    %259 = vmatpush1.msra.mxu0 0.0
    %260 = vmatprep.subr.mxu0 0.0
    %261 = vmatpush1.msra.mxu0 0.0
    %262 = vmatprep.subr.mxu0 0.0
    %263 = vmatpush1.msra.mxu0 0.0
    %264 = vmatprep.subr.mxu0 0.0
    %265 = vmatpush1.msra.mxu0 0.0
    %266 = vmatprep.subr.mxu0 0.0
    %267 = vmatpush1.msra.mxu0 0.0
    %268 = vmatprep.subr.mxu0 0.0
    %269 = vmatpush1.msra.mxu0 0.0
    %270 = vmatprep.subr.mxu0 0.0
    %271 = vmatpush1.msra.mxu0 0.0
    %272 = vmatprep.subr.mxu0 0.0
    %273 = vmatpush1.msra.mxu0 0.0
    %274 = vmatprep.subr.mxu0 0.0
    %275 = vmatpush1.msra.mxu0 0.0
    %276 = vmatprep.subr.mxu0 0.0
    %277 = vmatpush1.msra.mxu0 0.0
    %278 = vmatprep.subr.mxu0 0.0
    %279 = vmatpush1.msra.mxu0 0.0
    %280 = vmatprep.subr.mxu0 0.0
    %281 = vmatpush1.msra.mxu0 0.0
    %282 = vmatprep.subr.mxu0 0.0
    %283 = vmatpush1.msra.mxu0 0.0
    %284 = vmatprep.subr.mxu0 0.0
    %285 = vmatpush1.msra.mxu0 0.0
    %286 = vmatprep.subr.mxu0 0.0
    %287 = vmatpush1.msra.mxu0 0.0
    %288 = vmatprep.subr.mxu0 0.0
    %289 = vmatpush1.msra.mxu0 0.0
    %290 = vmatprep.subr.mxu0 0.0
    %291 = vmatpush1.msra.mxu0 0.0
    %292 = vmatprep.subr.mxu0 0.0
    %293 = vmatpush1.msra.mxu0 0.0
    %294 = vmatprep.subr.mxu0 0.0
    %295 = vmatpush1.msra.mxu0 0.0
    %296 = vmatprep.subr.mxu0 0.0
    %297 = vmatpush1.msra.mxu0 0.0
    %298 = vmatprep.subr.mxu0 0.0
    %299 = vmatpush1.msra.mxu0 0.0
    %300 = vmatprep.subr.mxu0 0.0
    %301 = vmatpush1.msra.mxu0 0.0
    %302 = vmatprep.subr.mxu0 0.0
    %303 = vmatpush1.msra.mxu0 0.0
    %304 = vmatprep.subr.mxu0 0.0
    %305 = vmatpush1.msra.mxu0 0.0
    %306 = vmatprep.subr.mxu0 0.0
    %307 = vmatpush1.msra.mxu0 0.0
    %308 = vmatprep.subr.mxu0 0.0
    %309 = vmatpush1.msra.mxu0 0.0
    %310 = vmatprep.subr.mxu0 0.0
    %311 = vmatpush1.msra.mxu0 0.0
    %312 = vmatprep.subr.mxu0 0.0
    %313 = vmatpush1.msra.mxu0 0.0
    %314 = vmatprep.subr.mxu0 0.0
    %315 = vmatpush1.msra.mxu0 0.0
    %316 = vmatprep.mubr.f32.mxu0 0.0
    %317 = vmatmul.mubr.f32.gmra.mrb[0].mxu0 %v243
    %v318 = vpop.f32.mrb[0].mxu0
    %v319 = vadd.f32 %v239, %v318
    %v320 = vpop.f32.mrb[0].mxu0
    %321 = vmatprep.mubr.f32.mxu0 0.0
    %322 = vmatmul.mubr.f32.gmra.mrb[0].mxu0 %v246
    %v323 = vpop.f32.mrb[0].mxu0
    %v324 = vadd.f32 %v239, %v323
    %v325 = vpop.f32.mrb[0].mxu0
    %326 = vdwg.mxu0
    %v329 = vcombine.high %v319, %v319
    %v331 = vunpack.c.l.s4 1966171168
    %v332 = vunpack.c.0.s8 %v331
    %v333 = vlaneseq
    %v334 = vshrl.u32 %v333, 7
    %v335 = vsub.s32 %v332, %v334
    %v336 = vrot.slane %v319, %v335
    %v338 = vunpack.c.l.s4 1966171168
    %v339 = vunpack.c.0.s8 %v338
    %v340 = vlaneseq
    %v341 = vshrl.u32 %v340, 7
    %v342 = vsub.s32 %v339, %v341
    %v343 = vrot.slane %v329, %v342
    %v344 = vcombine.high %v336, %v336
    %v345 = vcombine.high %v343, %v343
    %v347 = vunpack.c.l.s4 1966171168
    %v348 = vunpack.c.0.s8 %v347
    %v349 = vlaneseq
    %v350 = vshrl.u32 %v349, 7
    %v351 = vsub.s32 %v348, %v350
    %v352 = vrot.slane %v336, %v351
    %v354 = vunpack.c.l.s4 1966171168
    %v355 = vunpack.c.0.s8 %v354
    %v356 = vlaneseq
    %v357 = vshrl.u32 %v356, 7
    %v358 = vsub.s32 %v355, %v357
    %v359 = vrot.slane %v343, %v358
    %v361 = vunpack.c.l.s4 1966171168
    %v362 = vunpack.c.0.s8 %v361
    %v363 = vlaneseq
    %v364 = vshrl.u32 %v363, 7
    %v365 = vsub.s32 %v362, %v364
    %v366 = vrot.slane %v344, %v365
    %v368 = vunpack.c.l.s4 1966171168
    %v369 = vunpack.c.0.s8 %v368
    %v370 = vlaneseq
    %v371 = vshrl.u32 %v370, 7
    %v372 = vsub.s32 %v369, %v371
    %v373 = vrot.slane %v345, %v372
    %v374 = vcombine.high %v352, %v352
    %v375 = vcombine.high %v359, %v359
    %v376 = vcombine.high %v366, %v366
    %v377 = vcombine.high %v373, %v373
    %v378 = vcombine.high %v324, %v324
    %v380 = vunpack.c.l.s4 1966171168
    %v381 = vunpack.c.0.s8 %v380
    %v382 = vlaneseq
    %v383 = vshrl.u32 %v382, 7
    %v384 = vsub.s32 %v381, %v383
    %v385 = vrot.slane %v324, %v384
    %v387 = vunpack.c.l.s4 1966171168
    %v388 = vunpack.c.0.s8 %v387
    %v389 = vlaneseq
    %v390 = vshrl.u32 %v389, 7
    %v391 = vsub.s32 %v388, %v390
    %v392 = vrot.slane %v378, %v391
    %v393 = vcombine.high %v385, %v385
    %v394 = vcombine.high %v392, %v392
    %v396 = vunpack.c.l.s4 1966171168
    %v397 = vunpack.c.0.s8 %v396
    %v398 = vlaneseq
    %v399 = vshrl.u32 %v398, 7
    %v400 = vsub.s32 %v397, %v399
    %v401 = vrot.slane %v385, %v400
    %v403 = vunpack.c.l.s4 1966171168
    %v404 = vunpack.c.0.s8 %v403
    %v405 = vlaneseq
    %v406 = vshrl.u32 %v405, 7
    %v407 = vsub.s32 %v404, %v406
    %v408 = vrot.slane %v392, %v407
    %v410 = vunpack.c.l.s4 1966171168
    %v411 = vunpack.c.0.s8 %v410
    %v412 = vlaneseq
    %v413 = vshrl.u32 %v412, 7
    %v414 = vsub.s32 %v411, %v413
    %v415 = vrot.slane %v393, %v414
    %v417 = vunpack.c.l.s4 1966171168
    %v418 = vunpack.c.0.s8 %v417
    %v419 = vlaneseq
    %v420 = vshrl.u32 %v419, 7
    %v421 = vsub.s32 %v418, %v420
    %v422 = vrot.slane %v394, %v421
    %v423 = vcombine.high %v401, %v401
    %v424 = vcombine.high %v408, %v408
    %v425 = vcombine.high %v415, %v415
    %v426 = vcombine.high %v422, %v422
    %v427 = vlaneseq
    %v428 = vshrl.u32 %v427, 7
    %v429 = vsub.s32 0, %v428
    %v430 = vrot.slane %v352, %v429
    %v431 = vlaneseq
    %v432 = vshrl.u32 %v431, 7
    %v433 = vsub.s32 0, %v432
    %v434 = vrot.slane %v366, %v433
    %v435 = vlaneseq
    %v436 = vshrl.u32 %v435, 7
    %v437 = vsub.s32 0, %v436
    %v438 = vrot.slane %v374, %v437
    %v439 = vlaneseq
    %v440 = vshrl.u32 %v439, 7
    %v441 = vsub.s32 0, %v440
    %v442 = vrot.slane %v376, %v441
    %v443 = vlaneseq
    %v444 = vshrl.u32 %v443, 7
    %v445 = vsub.s32 0, %v444
    %v446 = vrot.slane %v359, %v445
    %v447 = vlaneseq
    %v448 = vshrl.u32 %v447, 7
    %v449 = vsub.s32 0, %v448
    %v450 = vrot.slane %v373, %v449
    %v451 = vlaneseq
    %v452 = vshrl.u32 %v451, 7
    %v453 = vsub.s32 0, %v452
    %v454 = vrot.slane %v375, %v453
    %v455 = vlaneseq
    %v456 = vshrl.u32 %v455, 7
    %v457 = vsub.s32 0, %v456
    %v458 = vrot.slane %v377, %v457
    %v459 = vlaneseq
    %v460 = vshrl.u32 %v459, 7
    %v461 = vsub.s32 0, %v460
    %v462 = vrot.slane %v401, %v461
    %v463 = vlaneseq
    %v464 = vshrl.u32 %v463, 7
    %v465 = vsub.s32 0, %v464
    %v466 = vrot.slane %v415, %v465
    %v467 = vlaneseq
    %v468 = vshrl.u32 %v467, 7
    %v469 = vsub.s32 0, %v468
    %v470 = vrot.slane %v423, %v469
    %v471 = vlaneseq
    %v472 = vshrl.u32 %v471, 7
    %v473 = vsub.s32 0, %v472
    %v474 = vrot.slane %v425, %v473
    %v475 = vlaneseq
    %v476 = vshrl.u32 %v475, 7
    %v477 = vsub.s32 0, %v476
    %v478 = vrot.slane %v408, %v477
    %v479 = vlaneseq
    %v480 = vshrl.u32 %v479, 7
    %v481 = vsub.s32 0, %v480
    %v482 = vrot.slane %v422, %v481
    %v483 = vlaneseq
    %v484 = vshrl.u32 %v483, 7
    %v485 = vsub.s32 0, %v484
    %v486 = vrot.slane %v424, %v485
    %v487 = vlaneseq
    %v488 = vshrl.u32 %v487, 7
    %v489 = vsub.s32 0, %v488
    %v490 = vrot.slane %v426, %v489
    %507 = vrot.lane.b32.xlu0 %v319, 121
    %v508 = vpop.permute.xlu0 %507
    %509 = vrot.lane.b32.xlu0 %v324, 121
    %v510 = vpop.permute.xlu0 %509
    %v513 = vmul.f32 %v430, %v508
    %v514 = vmul.f32 %v434, %v508
    %v515 = vmul.f32 %v438, %v508
    %v516 = vmul.f32 %v442, %v508
    %v517 = vmul.f32 %v446, %v508
    %v518 = vmul.f32 %v450, %v508
    %v519 = vmul.f32 %v454, %v508
    %v520 = vmul.f32 %v458, %v508
    %v521 = vmul.f32 %v462, %v510
    %v522 = vmul.f32 %v466, %v510
    %v523 = vmul.f32 %v470, %v510
    %v524 = vmul.f32 %v474, %v510
    %v525 = vmul.f32 %v478, %v510
    %v526 = vmul.f32 %v482, %v510
    %v527 = vmul.f32 %v486, %v510
    %v528 = vmul.f32 %v490, %v510
    %v529 = vsel %vm241, %v513, -inf
    %v530 = vrot.slane %v529, 4
    %v531 = vmax.f32 %v529, %v530
    %v532 = vrot.slane %v531, 2
    %v533 = vmax.f32 %v531, %v532
    %v534 = vrot.slane %v533, 1
    %v535 = vmax.f32 %v533, %v534
    %v536 = vsel %vm241, %v514, -inf
    %v537 = vrot.slane %v536, 4
    %v538 = vmax.f32 %v536, %v537
    %v539 = vrot.slane %v538, 2
    %v540 = vmax.f32 %v538, %v539
    %v541 = vrot.slane %v540, 1
    %v542 = vmax.f32 %v540, %v541
    %v543 = vsel %vm241, %v515, -inf
    %v544 = vrot.slane %v543, 4
    %v545 = vmax.f32 %v543, %v544
    %v546 = vrot.slane %v545, 2
    %v547 = vmax.f32 %v545, %v546
    %v548 = vrot.slane %v547, 1
    %v549 = vmax.f32 %v547, %v548
    %v550 = vsel %vm241, %v516, -inf
    %v551 = vrot.slane %v550, 4
    %v552 = vmax.f32 %v550, %v551
    %v553 = vrot.slane %v552, 2
    %v554 = vmax.f32 %v552, %v553
    %v555 = vrot.slane %v554, 1
    %v556 = vmax.f32 %v554, %v555
    %v557 = vsel %vm241, %v517, -inf
    %v558 = vrot.slane %v557, 4
    %v559 = vmax.f32 %v557, %v558
    %v560 = vrot.slane %v559, 2
    %v561 = vmax.f32 %v559, %v560
    %v562 = vrot.slane %v561, 1
    %v563 = vmax.f32 %v561, %v562
    %v564 = vsel %vm241, %v518, -inf
    %v565 = vrot.slane %v564, 4
    %v566 = vmax.f32 %v564, %v565
    %v567 = vrot.slane %v566, 2
    %v568 = vmax.f32 %v566, %v567
    %v569 = vrot.slane %v568, 1
    %v570 = vmax.f32 %v568, %v569
    %v571 = vsel %vm241, %v519, -inf
    %v572 = vrot.slane %v571, 4
    %v573 = vmax.f32 %v571, %v572
    %v574 = vrot.slane %v573, 2
    %v575 = vmax.f32 %v573, %v574
    %v576 = vrot.slane %v575, 1
    %v577 = vmax.f32 %v575, %v576
    %v578 = vsel %vm241, %v520, -inf
    %v579 = vrot.slane %v578, 4
    %v580 = vmax.f32 %v578, %v579
    %v581 = vrot.slane %v580, 2
    %v582 = vmax.f32 %v580, %v581
    %v583 = vrot.slane %v582, 1
    %v584 = vmax.f32 %v582, %v583
    %v585 = vsel %vm241, %v521, -inf
    %v586 = vrot.slane %v585, 4
    %v587 = vmax.f32 %v585, %v586
    %v588 = vrot.slane %v587, 2
    %v589 = vmax.f32 %v587, %v588
    %v590 = vrot.slane %v589, 1
    %v591 = vmax.f32 %v589, %v590
    %v592 = vsel %vm241, %v522, -inf
    %v593 = vrot.slane %v592, 4
    %v594 = vmax.f32 %v592, %v593
    %v595 = vrot.slane %v594, 2
    %v596 = vmax.f32 %v594, %v595
    %v597 = vrot.slane %v596, 1
    %v598 = vmax.f32 %v596, %v597
    %v599 = vsel %vm241, %v523, -inf
    %v600 = vrot.slane %v599, 4
    %v601 = vmax.f32 %v599, %v600
    %v602 = vrot.slane %v601, 2
    %v603 = vmax.f32 %v601, %v602
    %v604 = vrot.slane %v603, 1
    %v605 = vmax.f32 %v603, %v604
    %v606 = vsel %vm241, %v524, -inf
    %v607 = vrot.slane %v606, 4
    %v608 = vmax.f32 %v606, %v607
    %v609 = vrot.slane %v608, 2
    %v610 = vmax.f32 %v608, %v609
    %v611 = vrot.slane %v610, 1
    %v612 = vmax.f32 %v610, %v611
    %v613 = vsel %vm241, %v525, -inf
    %v614 = vrot.slane %v613, 4
    %v615 = vmax.f32 %v613, %v614
    %v616 = vrot.slane %v615, 2
    %v617 = vmax.f32 %v615, %v616
    %v618 = vrot.slane %v617, 1
    %v619 = vmax.f32 %v617, %v618
    %v620 = vsel %vm241, %v526, -inf
    %v621 = vrot.slane %v620, 4
    %v622 = vmax.f32 %v620, %v621
    %v623 = vrot.slane %v622, 2
    %v624 = vmax.f32 %v622, %v623
    %v625 = vrot.slane %v624, 1
    %v626 = vmax.f32 %v624, %v625
    %v627 = vsel %vm241, %v527, -inf
    %v628 = vrot.slane %v627, 4
    %v629 = vmax.f32 %v627, %v628
    %v630 = vrot.slane %v629, 2
    %v631 = vmax.f32 %v629, %v630
    %v632 = vrot.slane %v631, 1
    %v633 = vmax.f32 %v631, %v632
    %v634 = vsel %vm241, %v528, -inf
    %v635 = vrot.slane %v634, 4
    %v636 = vmax.f32 %v634, %v635
    %v637 = vrot.slane %v636, 2
    %v638 = vmax.f32 %v636, %v637
    %v639 = vrot.slane %v638, 1
    %v640 = vmax.f32 %v638, %v639
    %v641 = vsub.f32 %v513, %v535
    %v642 = vsub.f32 %v514, %v542
    %v643 = vsub.f32 %v515, %v549
    %v644 = vsub.f32 %v516, %v556
    %v645 = vsub.f32 %v517, %v563
    %v646 = vsub.f32 %v518, %v570
    %v647 = vsub.f32 %v519, %v577
    %v648 = vsub.f32 %v520, %v584
    %v649 = vsub.f32 %v521, %v591
    %v650 = vsub.f32 %v522, %v598
    %v651 = vsub.f32 %v523, %v605
    %v652 = vsub.f32 %v524, %v612
    %v653 = vsub.f32 %v525, %v619
    %v654 = vsub.f32 %v526, %v626
    %v655 = vsub.f32 %v527, %v633
    %v656 = vsub.f32 %v528, %v640
    %v657 = vmul.f32 %v641, 1.442695
    %v658 = vpow.pop %v657
    %v659 = vmul.f32 %v642, 1.442695
    %v660 = vpow.pop %v659
    %v661 = vmul.f32 %v643, 1.442695
    %v662 = vpow.pop %v661
    %v663 = vmul.f32 %v644, 1.442695
    %v664 = vpow.pop %v663
    %v665 = vmul.f32 %v645, 1.442695
    %v666 = vpow.pop %v665
    %v667 = vmul.f32 %v646, 1.442695
    %v668 = vpow.pop %v667
    %v669 = vmul.f32 %v647, 1.442695
    %v670 = vpow.pop %v669
    %v671 = vmul.f32 %v648, 1.442695
    %v672 = vpow.pop %v671
    %v673 = vmul.f32 %v649, 1.442695
    %v674 = vpow.pop %v673
    %v675 = vmul.f32 %v650, 1.442695
    %v676 = vpow.pop %v675
    %v677 = vmul.f32 %v651, 1.442695
    %v678 = vpow.pop %v677
    %v679 = vmul.f32 %v652, 1.442695
    %v680 = vpow.pop %v679
    %v681 = vmul.f32 %v653, 1.442695
    %v682 = vpow.pop %v681
    %v683 = vmul.f32 %v654, 1.442695
    %v684 = vpow.pop %v683
    %v685 = vmul.f32 %v655, 1.442695
    %v686 = vpow.pop %v685
    %v687 = vmul.f32 %v656, 1.442695
    %v688 = vpow.pop %v687
    %689 = vrot.lane.b32.xlu0 %v319, 114
    %v690 = vpop.permute.xlu0 %689
    %691 = vrot.lane.b32.xlu0 %v324, 114
    %v692 = vpop.permute.xlu0 %691
    %v695 = vmul.f32 %v658, %v690
    %v696 = vmul.f32 %v660, %v690
    %v697 = vmul.f32 %v662, %v690
    %v698 = vmul.f32 %v664, %v690
    %v699 = vmul.f32 %v666, %v690
    %v700 = vmul.f32 %v668, %v690
    %v701 = vmul.f32 %v670, %v690
    %v702 = vmul.f32 %v672, %v690
    %v703 = vmul.f32 %v674, %v692
    %v704 = vmul.f32 %v676, %v692
    %v705 = vmul.f32 %v678, %v692
    %v706 = vmul.f32 %v680, %v692
    %v707 = vmul.f32 %v682, %v692
    %v708 = vmul.f32 %v684, %v692
    %v709 = vmul.f32 %v686, %v692
    %v710 = vmul.f32 %v688, %v692
    %v711 = vsel %vm241, %v695, 0.0
    %v712 = vrot.slane %v711, 4
    %v713 = vadd.f32 %v711, %v712
    %v714 = vrot.slane %v713, 2
    %v715 = vadd.f32 %v713, %v714
    %v716 = vrot.slane %v715, 1
    %v717 = vadd.f32 %v715, %v716
    %v718 = vsel %vm241, %v696, 0.0
    %v719 = vrot.slane %v718, 4
    %v720 = vadd.f32 %v718, %v719
    %v721 = vrot.slane %v720, 2
    %v722 = vadd.f32 %v720, %v721
    %v723 = vrot.slane %v722, 1
    %v724 = vadd.f32 %v722, %v723
    %v725 = vsel %vm241, %v697, 0.0
    %v726 = vrot.slane %v725, 4
    %v727 = vadd.f32 %v725, %v726
    %v728 = vrot.slane %v727, 2
    %v729 = vadd.f32 %v727, %v728
    %v730 = vrot.slane %v729, 1
    %v731 = vadd.f32 %v729, %v730
    %v732 = vsel %vm241, %v698, 0.0
    %v733 = vrot.slane %v732, 4
    %v734 = vadd.f32 %v732, %v733
    %v735 = vrot.slane %v734, 2
    %v736 = vadd.f32 %v734, %v735
    %v737 = vrot.slane %v736, 1
    %v738 = vadd.f32 %v736, %v737
    %v739 = vsel %vm241, %v699, 0.0
    %v740 = vrot.slane %v739, 4
    %v741 = vadd.f32 %v739, %v740
    %v742 = vrot.slane %v741, 2
    %v743 = vadd.f32 %v741, %v742
    %v744 = vrot.slane %v743, 1
    %v745 = vadd.f32 %v743, %v744
    %v746 = vsel %vm241, %v700, 0.0
    %v747 = vrot.slane %v746, 4
    %v748 = vadd.f32 %v746, %v747
    %v749 = vrot.slane %v748, 2
    %v750 = vadd.f32 %v748, %v749
    %v751 = vrot.slane %v750, 1
    %v752 = vadd.f32 %v750, %v751
    %v753 = vsel %vm241, %v701, 0.0
    %v754 = vrot.slane %v753, 4
    %v755 = vadd.f32 %v753, %v754
    %v756 = vrot.slane %v755, 2
    %v757 = vadd.f32 %v755, %v756
    %v758 = vrot.slane %v757, 1
    %v759 = vadd.f32 %v757, %v758
    %v760 = vsel %vm241, %v702, 0.0
    %v761 = vrot.slane %v760, 4
    %v762 = vadd.f32 %v760, %v761
    %v763 = vrot.slane %v762, 2
    %v764 = vadd.f32 %v762, %v763
    %v765 = vrot.slane %v764, 1
    %v766 = vadd.f32 %v764, %v765
    %v767 = vsel %vm241, %v703, 0.0
    %v768 = vrot.slane %v767, 4
    %v769 = vadd.f32 %v767, %v768
    %v770 = vrot.slane %v769, 2
    %v771 = vadd.f32 %v769, %v770
    %v772 = vrot.slane %v771, 1
    %v773 = vadd.f32 %v771, %v772
    %v774 = vsel %vm241, %v704, 0.0
    %v775 = vrot.slane %v774, 4
    %v776 = vadd.f32 %v774, %v775
    %v777 = vrot.slane %v776, 2
    %v778 = vadd.f32 %v776, %v777
    %v779 = vrot.slane %v778, 1
    %v780 = vadd.f32 %v778, %v779
    %v781 = vsel %vm241, %v705, 0.0
    %v782 = vrot.slane %v781, 4
    %v783 = vadd.f32 %v781, %v782
    %v784 = vrot.slane %v783, 2
    %v785 = vadd.f32 %v783, %v784
    %v786 = vrot.slane %v785, 1
    %v787 = vadd.f32 %v785, %v786
    %v788 = vsel %vm241, %v706, 0.0
    %v789 = vrot.slane %v788, 4
    %v790 = vadd.f32 %v788, %v789
    %v791 = vrot.slane %v790, 2
    %v792 = vadd.f32 %v790, %v791
    %v793 = vrot.slane %v792, 1
    %v794 = vadd.f32 %v792, %v793
    %v795 = vsel %vm241, %v707, 0.0
    %v796 = vrot.slane %v795, 4
    %v797 = vadd.f32 %v795, %v796
    %v798 = vrot.slane %v797, 2
    %v799 = vadd.f32 %v797, %v798
    %v800 = vrot.slane %v799, 1
    %v801 = vadd.f32 %v799, %v800
    %v802 = vsel %vm241, %v708, 0.0
    %v803 = vrot.slane %v802, 4
    %v804 = vadd.f32 %v802, %v803
    %v805 = vrot.slane %v804, 2
    %v806 = vadd.f32 %v804, %v805
    %v807 = vrot.slane %v806, 1
    %v808 = vadd.f32 %v806, %v807
    %v809 = vsel %vm241, %v709, 0.0
    %v810 = vrot.slane %v809, 4
    %v811 = vadd.f32 %v809, %v810
    %v812 = vrot.slane %v811, 2
    %v813 = vadd.f32 %v811, %v812
    %v814 = vrot.slane %v813, 1
    %v815 = vadd.f32 %v813, %v814
    %v816 = vsel %vm241, %v710, 0.0
    %v817 = vrot.slane %v816, 4
    %v818 = vadd.f32 %v816, %v817
    %v819 = vrot.slane %v818, 2
    %v820 = vadd.f32 %v818, %v819
    %v821 = vrot.slane %v820, 1
    %v822 = vadd.f32 %v820, %v821
    %v823 = vsel %vm241, %v658, 0.0
    %v824 = vrot.slane %v823, 4
    %v825 = vadd.f32 %v823, %v824
    %v826 = vrot.slane %v825, 2
    %v827 = vadd.f32 %v825, %v826
    %v828 = vrot.slane %v827, 1
    %v829 = vadd.f32 %v827, %v828
    %v830 = vsel %vm241, %v660, 0.0
    %v831 = vrot.slane %v830, 4
    %v832 = vadd.f32 %v830, %v831
    %v833 = vrot.slane %v832, 2
    %v834 = vadd.f32 %v832, %v833
    %v835 = vrot.slane %v834, 1
    %v836 = vadd.f32 %v834, %v835
    %v837 = vsel %vm241, %v662, 0.0
    %v838 = vrot.slane %v837, 4
    %v839 = vadd.f32 %v837, %v838
    %v840 = vrot.slane %v839, 2
    %v841 = vadd.f32 %v839, %v840
    %v842 = vrot.slane %v841, 1
    %v843 = vadd.f32 %v841, %v842
    %v844 = vsel %vm241, %v664, 0.0
    %v845 = vrot.slane %v844, 4
    %v846 = vadd.f32 %v844, %v845
    %v847 = vrot.slane %v846, 2
    %v848 = vadd.f32 %v846, %v847
    %v849 = vrot.slane %v848, 1
    %v850 = vadd.f32 %v848, %v849
    %v851 = vsel %vm241, %v666, 0.0
    %v852 = vrot.slane %v851, 4
    %v853 = vadd.f32 %v851, %v852
    %v854 = vrot.slane %v853, 2
    %v855 = vadd.f32 %v853, %v854
    %v856 = vrot.slane %v855, 1
    %v857 = vadd.f32 %v855, %v856
    %v858 = vsel %vm241, %v668, 0.0
    %v859 = vrot.slane %v858, 4
    %v860 = vadd.f32 %v858, %v859
    %v861 = vrot.slane %v860, 2
    %v862 = vadd.f32 %v860, %v861
    %v863 = vrot.slane %v862, 1
    %v864 = vadd.f32 %v862, %v863
    %v865 = vsel %vm241, %v670, 0.0
    %v866 = vrot.slane %v865, 4
    %v867 = vadd.f32 %v865, %v866
    %v868 = vrot.slane %v867, 2
    %v869 = vadd.f32 %v867, %v868
    %v870 = vrot.slane %v869, 1
    %v871 = vadd.f32 %v869, %v870
    %v872 = vsel %vm241, %v672, 0.0
    %v873 = vrot.slane %v872, 4
    %v874 = vadd.f32 %v872, %v873
    %v875 = vrot.slane %v874, 2
    %v876 = vadd.f32 %v874, %v875
    %v877 = vrot.slane %v876, 1
    %v878 = vadd.f32 %v876, %v877
    %v879 = vsel %vm241, %v674, 0.0
    %v880 = vrot.slane %v879, 4
    %v881 = vadd.f32 %v879, %v880
    %v882 = vrot.slane %v881, 2
    %v883 = vadd.f32 %v881, %v882
    %v884 = vrot.slane %v883, 1
    %v885 = vadd.f32 %v883, %v884
    %v886 = vsel %vm241, %v676, 0.0
    %v887 = vrot.slane %v886, 4
    %v888 = vadd.f32 %v886, %v887
    %v889 = vrot.slane %v888, 2
    %v890 = vadd.f32 %v888, %v889
    %v891 = vrot.slane %v890, 1
    %v892 = vadd.f32 %v890, %v891
    %v893 = vsel %vm241, %v678, 0.0
    %v894 = vrot.slane %v893, 4
    %v895 = vadd.f32 %v893, %v894
    %v896 = vrot.slane %v895, 2
    %v897 = vadd.f32 %v895, %v896
    %v898 = vrot.slane %v897, 1
    %v899 = vadd.f32 %v897, %v898
    %v900 = vsel %vm241, %v680, 0.0
    %v901 = vrot.slane %v900, 4
    %v902 = vadd.f32 %v900, %v901
    %v903 = vrot.slane %v902, 2
    %v904 = vadd.f32 %v902, %v903
    %v905 = vrot.slane %v904, 1
    %v906 = vadd.f32 %v904, %v905
    %v907 = vsel %vm241, %v682, 0.0
    %v908 = vrot.slane %v907, 4
    %v909 = vadd.f32 %v907, %v908
    %v910 = vrot.slane %v909, 2
    %v911 = vadd.f32 %v909, %v910
    %v912 = vrot.slane %v911, 1
    %v913 = vadd.f32 %v911, %v912
    %v914 = vsel %vm241, %v684, 0.0
    %v915 = vrot.slane %v914, 4
    %v916 = vadd.f32 %v914, %v915
    %v917 = vrot.slane %v916, 2
    %v918 = vadd.f32 %v916, %v917
    %v919 = vrot.slane %v918, 1
    %v920 = vadd.f32 %v918, %v919
    %v921 = vsel %vm241, %v686, 0.0
    %v922 = vrot.slane %v921, 4
    %v923 = vadd.f32 %v921, %v922
    %v924 = vrot.slane %v923, 2
    %v925 = vadd.f32 %v923, %v924
    %v926 = vrot.slane %v925, 1
    %v927 = vadd.f32 %v925, %v926
    %v928 = vsel %vm241, %v688, 0.0
    %v929 = vrot.slane %v928, 4
    %v930 = vadd.f32 %v928, %v929
    %v931 = vrot.slane %v930, 2
    %v932 = vadd.f32 %v930, %v931
    %v933 = vrot.slane %v932, 1
    %v934 = vadd.f32 %v932, %v933
    %v935 = vrcp.pop %v829
    %v936 = vrcp.pop %v836
    %v937 = vrcp.pop %v843
    %v938 = vrcp.pop %v850
    %v939 = vrcp.pop %v857
    %v940 = vrcp.pop %v864
    %v941 = vrcp.pop %v871
    %v942 = vrcp.pop %v878
    %v943 = vrcp.pop %v885
    %v944 = vrcp.pop %v892
    %v945 = vrcp.pop %v899
    %v946 = vrcp.pop %v906
    %v947 = vrcp.pop %v913
    %v948 = vrcp.pop %v920
    %v949 = vrcp.pop %v927
    %v950 = vrcp.pop %v934
    %v951 = vmul.f32 %v717, %v935
    %v952 = vmul.f32 %v724, %v936
    %v953 = vmul.f32 %v731, %v937
    %v954 = vmul.f32 %v738, %v938
    %v955 = vmul.f32 %v745, %v939
    %v956 = vmul.f32 %v752, %v940
    %v957 = vmul.f32 %v759, %v941
    %v958 = vmul.f32 %v766, %v942
    %v959 = vmul.f32 %v773, %v943
    %v960 = vmul.f32 %v780, %v944
    %v961 = vmul.f32 %v787, %v945
    %v962 = vmul.f32 %v794, %v946
    %v963 = vmul.f32 %v801, %v947
    %v964 = vmul.f32 %v808, %v948
    %v965 = vmul.f32 %v815, %v949
    %v966 = vmul.f32 %v822, %v950
    %v968 = vlaneseq
    %v969 = vshrl.u32 %v968, 7
    %v970 = vsub.s32 0, %v969
    %v971 = vrot.slane %v160, %v970
    %vm989 = vcmask 1041409
    %v990 = vsel %vm989, %v952, %v951
    %vm991 = vcmask 1042434
    %v992 = vsel %vm991, %v953, %v990
    %vm993 = vcmask 1043459
    %v994 = vsel %vm993, %v954, %v992
    %vm995 = vcmask 1044484
    %v996 = vsel %vm995, %v955, %v994
    %vm997 = vcmask 1045509
    %v998 = vsel %vm997, %v956, %v996
    %vm999 = vcmask 1046534
    %v1000 = vsel %vm999, %v957, %v998
    %vm1001 = vcmask 1047559
    %v1002 = vsel %vm1001, %v958, %v1000
    %v1003 = vsel %vm989, %v960, %v959
    %v1004 = vsel %vm991, %v961, %v1003
    %v1005 = vsel %vm993, %v962, %v1004
    %v1006 = vsel %vm995, %v963, %v1005
    %v1007 = vsel %vm997, %v964, %v1006
    %v1008 = vsel %vm999, %v965, %v1007
    %v1009 = vsel %vm1001, %v966, %v1008
    %v1010 = vsel %vm241, %v1002, 0
    %v1012 = vsel %vm241, %v1009, 0
    %v1015 = vsel %vm248, %v159, 0
    %1017 = vmatprep.subr.mxu0 0.0
    %1018 = vmatpush1.msra.mxu0 %v1015
    %1019 = vmatprep.subr.mxu0 0.0
    %1020 = vmatpush1.msra.mxu0 0.0
    %1021 = vmatprep.subr.mxu0 0.0
    %1022 = vmatpush1.msra.mxu0 0.0
    %1023 = vmatprep.subr.mxu0 0.0
    %1024 = vmatpush1.msra.mxu0 0.0
    %1025 = vmatprep.subr.mxu0 0.0
    %1026 = vmatpush1.msra.mxu0 0.0
    %1027 = vmatprep.subr.mxu0 0.0
    %1028 = vmatpush1.msra.mxu0 0.0
    %1029 = vmatprep.subr.mxu0 0.0
    %1030 = vmatpush1.msra.mxu0 0.0
    %1031 = vmatprep.subr.mxu0 0.0
    %1032 = vmatpush1.msra.mxu0 0.0
    %1033 = vmatprep.subr.mxu0 0.0
    %1034 = vmatpush1.msra.mxu0 0.0
    %1035 = vmatprep.subr.mxu0 0.0
    %1036 = vmatpush1.msra.mxu0 0.0
    %1037 = vmatprep.subr.mxu0 0.0
    %1038 = vmatpush1.msra.mxu0 0.0
    %1039 = vmatprep.subr.mxu0 0.0
    %1040 = vmatpush1.msra.mxu0 0.0
    %1041 = vmatprep.subr.mxu0 0.0
    %1042 = vmatpush1.msra.mxu0 0.0
    %1043 = vmatprep.subr.mxu0 0.0
    %1044 = vmatpush1.msra.mxu0 0.0
    %1045 = vmatprep.subr.mxu0 0.0
    %1046 = vmatpush1.msra.mxu0 0.0
    %1047 = vmatprep.subr.mxu0 0.0
    %1048 = vmatpush1.msra.mxu0 0.0
    %1049 = vmatprep.subr.mxu0 0.0
    %1050 = vmatpush1.msra.mxu0 0.0
    %1051 = vmatprep.subr.mxu0 0.0
    %1052 = vmatpush1.msra.mxu0 0.0
    %1053 = vmatprep.subr.mxu0 0.0
    %1054 = vmatpush1.msra.mxu0 0.0
    %1055 = vmatprep.subr.mxu0 0.0
    %1056 = vmatpush1.msra.mxu0 0.0
    %1057 = vmatprep.subr.mxu0 0.0
    %1058 = vmatpush1.msra.mxu0 0.0
    %1059 = vmatprep.subr.mxu0 0.0
    %1060 = vmatpush1.msra.mxu0 0.0
    %1061 = vmatprep.subr.mxu0 0.0
    %1062 = vmatpush1.msra.mxu0 0.0
    %1063 = vmatprep.subr.mxu0 0.0
    %1064 = vmatpush1.msra.mxu0 0.0
    %1065 = vmatprep.subr.mxu0 0.0
    %1066 = vmatpush1.msra.mxu0 0.0
    %1067 = vmatprep.subr.mxu0 0.0
    %1068 = vmatpush1.msra.mxu0 0.0
    %1069 = vmatprep.subr.mxu0 0.0
    %1070 = vmatpush1.msra.mxu0 0.0
    %1071 = vmatprep.subr.mxu0 0.0
    %1072 = vmatpush1.msra.mxu0 0.0
    %1073 = vmatprep.subr.mxu0 0.0
    %1074 = vmatpush1.msra.mxu0 0.0
    %1075 = vmatprep.subr.mxu0 0.0
    %1076 = vmatpush1.msra.mxu0 0.0
    %1077 = vmatprep.subr.mxu0 0.0
    %1078 = vmatpush1.msra.mxu0 0.0
    %1079 = vmatprep.subr.mxu0 0.0
    %1080 = vmatpush1.msra.mxu0 0.0
    %1081 = vmatprep.mubr.f32.mxu0 0.0
    %1082 = vmatmul.mubr.f32.gmra.mrb[0].mxu0 %v1010
    %v1083 = vpop.f32.mrb[0].mxu0
    %v1084 = vadd.f32 %v971, %v1083
    %v1085 = vpop.f32.mrb[0].mxu0
    %1086 = vmatprep.mubr.f32.mxu0 0.0
    %1087 = vmatmul.mubr.f32.gmra.mrb[0].mxu0 %v1012
    %v1088 = vpop.f32.mrb[0].mxu0
    %v1089 = vadd.f32 %v971, %v1088
    %v1090 = vpop.f32.mrb[0].mxu0
    %1091 = vdwg.mxu0
    %v1092 = vadd.f32 %v155, %v1084
    %v1093 = vadd.f32 %v156, %v1089
    %v1094 = vsel %vm241, %v1092, 0.0
    %1095 = vadd.xlane.f32.xlu0 %v1094
    %v1096 = vpop.xlane.xlu0 %1095
    %v1097 = vsel %vm241, %v1093, 0.0
    %1098 = vadd.xlane.f32.xlu0 %v1097
    %v1099 = vpop.xlane.xlu0 %1098
    %v1100 = vrcp.pop 7.0
    %v1101 = vmul.f32 %v1096, %v1100
    %v1102 = vmul.f32 %v1099, %v1100
    %v1103 = vsub.f32 %v1092, %v1101
    %v1104 = vsub.f32 %v1093, %v1102
    %v1105 = vmul.f32 %v1103, %v1103
    %v1106 = vmul.f32 %v1104, %v1104
    %v1107 = vsel %vm241, %v1105, 0.0
    %1108 = vadd.xlane.f32.xlu0 %v1107
    %v1109 = vpop.xlane.xlu0 %1108
    %v1110 = vsel %vm241, %v1106, 0.0
    %1111 = vadd.xlane.f32.xlu0 %v1110
    %v1112 = vpop.xlane.xlu0 %1111
    %v1113 = vmul.f32 %v1109, %v1100
    %v1114 = vmul.f32 %v1112, %v1100
    %v1115 = vadd.f32 %v1113, 1e-05
    %v1116 = vadd.f32 %v1114, 1e-05
    %v1117 = vrsqrt.pop %v1115
    %v1118 = vrsqrt.pop %v1116
    %v1119 = vmul.f32 %v1103, %v1117
    %v1120 = vmul.f32 %v1104, %v1118
    %v1122 = vlaneseq
    %v1123 = vshrl.u32 %v1122, 7
    %v1124 = vsub.s32 0, %v1123
    %v1125 = vrot.slane %v161, %v1124
    %v1127 = vmul.f32 %v1119, %v1125
    %v1128 = vmul.f32 %v1120, %v1125
    %v1130 = vlaneseq
    %v1131 = vshrl.u32 %v1130, 7
    %v1132 = vsub.s32 0, %v1131
    %v1133 = vrot.slane %v162, %v1132
    %v1135 = vadd.f32 %v1127, %v1133
    %v1136 = vadd.f32 %v1128, %v1133
    %v1138 = vlaneseq
    %v1139 = vshrl.u32 %v1138, 7
    %v1140 = vsub.s32 0, %v1139
    %v1141 = vrot.slane %v167, %v1140
    %v1142 = vlaneseq
    %v1143 = vshrl.u32 %v1142, 7
    %v1144 = vsub.s32 1, %v1143
    %v1145 = vrot.slane %v167, %v1144
    %v1146 = vlaneseq
    %v1147 = vshrl.u32 %v1146, 7
    %v1148 = vsub.s32 2, %v1147
    %v1149 = vrot.slane %v167, %v1148
    %v1150 = vlaneseq
    %v1151 = vshrl.u32 %v1150, 7
    %v1152 = vsub.s32 3, %v1151
    %v1153 = vrot.slane %v167, %v1152
    %v1159 = vsel %vm241, %v1135, 0
    %v1162 = vsel %vm241, %v1136, 0
    %v1165 = vsel %vm248, %v163, 0
    %v1168 = vsel %vm248, %v164, 0
    %v1171 = vsel %vm248, %v165, 0
    %v1174 = vsel %vm248, %v166, 0
    %1176 = vmatprep.subr.mxu0 %v1168
    %1177 = vmatpush1.msra.mxu0 %v1165
    %1178 = vmatprep.subr.mxu0 0.0
    %1179 = vmatpush1.msra.mxu0 0.0
    %1180 = vmatprep.subr.mxu0 0.0
    %1181 = vmatpush1.msra.mxu0 0.0
    %1182 = vmatprep.subr.mxu0 0.0
    %1183 = vmatpush1.msra.mxu0 0.0
    %1184 = vmatprep.subr.mxu0 0.0
    %1185 = vmatpush1.msra.mxu0 0.0
    %1186 = vmatprep.subr.mxu0 0.0
    %1187 = vmatpush1.msra.mxu0 0.0
    %1188 = vmatprep.subr.mxu0 0.0
    %1189 = vmatpush1.msra.mxu0 0.0
    %1190 = vmatprep.subr.mxu0 0.0
    %1191 = vmatpush1.msra.mxu0 0.0
    %1192 = vmatprep.subr.mxu0 0.0
    %1193 = vmatpush1.msra.mxu0 0.0
    %1194 = vmatprep.subr.mxu0 0.0
    %1195 = vmatpush1.msra.mxu0 0.0
    %1196 = vmatprep.subr.mxu0 0.0
    %1197 = vmatpush1.msra.mxu0 0.0
    %1198 = vmatprep.subr.mxu0 0.0
    %1199 = vmatpush1.msra.mxu0 0.0
    %1200 = vmatprep.subr.mxu0 0.0
    %1201 = vmatpush1.msra.mxu0 0.0
    %1202 = vmatprep.subr.mxu0 0.0
    %1203 = vmatpush1.msra.mxu0 0.0
    %1204 = vmatprep.subr.mxu0 0.0
    %1205 = vmatpush1.msra.mxu0 0.0
    %1206 = vmatprep.subr.mxu0 0.0
    %1207 = vmatpush1.msra.mxu0 0.0
    %1208 = vmatprep.subr.mxu0 0.0
    %1209 = vmatpush1.msra.mxu0 0.0
    %1210 = vmatprep.subr.mxu0 0.0
    %1211 = vmatpush1.msra.mxu0 0.0
    %1212 = vmatprep.subr.mxu0 0.0
    %1213 = vmatpush1.msra.mxu0 0.0
    %1214 = vmatprep.subr.mxu0 0.0
    %1215 = vmatpush1.msra.mxu0 0.0
    %1216 = vmatprep.subr.mxu0 0.0
    %1217 = vmatpush1.msra.mxu0 0.0
    %1218 = vmatprep.subr.mxu0 0.0
    %1219 = vmatpush1.msra.mxu0 0.0
    %1220 = vmatprep.subr.mxu0 0.0
    %1221 = vmatpush1.msra.mxu0 0.0
    %1222 = vmatprep.subr.mxu0 0.0
    %1223 = vmatpush1.msra.mxu0 0.0
    %1224 = vmatprep.subr.mxu0 0.0
    %1225 = vmatpush1.msra.mxu0 0.0
    %1226 = vmatprep.subr.mxu0 0.0
    %1227 = vmatpush1.msra.mxu0 0.0
    %1228 = vmatprep.subr.mxu0 0.0
    %1229 = vmatpush1.msra.mxu0 0.0
    %1230 = vmatprep.subr.mxu0 0.0
    %1231 = vmatpush1.msra.mxu0 0.0
    %1232 = vmatprep.subr.mxu0 0.0
    %1233 = vmatpush1.msra.mxu0 0.0
    %1234 = vmatprep.subr.mxu0 0.0
    %1235 = vmatpush1.msra.mxu0 0.0
    %1236 = vmatprep.subr.mxu0 0.0
    %1237 = vmatpush1.msra.mxu0 0.0
    %1238 = vmatprep.subr.mxu0 0.0
    %1239 = vmatpush1.msra.mxu0 0.0
    %1240 = vmatprep.mubr.f32.mxu0 0.0
    %1241 = vmatmul.mubr.f32.gmra.mrb[0].mxu0 %v1159
    %v1242 = vpop.f32.mrb[0].mxu0
    %v1243 = vadd.f32 %v1141, %v1242
    %v1244 = vpop.f32.mrb[0].mxu0
    %v1245 = vadd.f32 %v1145, %v1244
    %1246 = vmatprep.mubr.f32.mxu0 0.0
    %1247 = vmatmul.mubr.f32.gmra.mrb[0].mxu0 %v1162
    %v1248 = vpop.f32.mrb[0].mxu0
    %v1249 = vadd.f32 %v1141, %v1248
    %v1250 = vpop.f32.mrb[0].mxu0
    %v1251 = vadd.f32 %v1145, %v1250
    %1252 = vdwg.mxu0
    %1253 = vmatprep.subr.mxu0 %v1174
    %1254 = vmatpush1.msra.mxu0 %v1171
    %1255 = vmatprep.subr.mxu0 0.0
    %1256 = vmatpush1.msra.mxu0 0.0
    %1257 = vmatprep.subr.mxu0 0.0
    %1258 = vmatpush1.msra.mxu0 0.0
    %1259 = vmatprep.subr.mxu0 0.0
    %1260 = vmatpush1.msra.mxu0 0.0
    %1261 = vmatprep.subr.mxu0 0.0
    %1262 = vmatpush1.msra.mxu0 0.0
    %1263 = vmatprep.subr.mxu0 0.0
    %1264 = vmatpush1.msra.mxu0 0.0
    %1265 = vmatprep.subr.mxu0 0.0
    %1266 = vmatpush1.msra.mxu0 0.0
    %1267 = vmatprep.subr.mxu0 0.0
    %1268 = vmatpush1.msra.mxu0 0.0
    %1269 = vmatprep.subr.mxu0 0.0
    %1270 = vmatpush1.msra.mxu0 0.0
    %1271 = vmatprep.subr.mxu0 0.0
    %1272 = vmatpush1.msra.mxu0 0.0
    %1273 = vmatprep.subr.mxu0 0.0
    %1274 = vmatpush1.msra.mxu0 0.0
    %1275 = vmatprep.subr.mxu0 0.0
    %1276 = vmatpush1.msra.mxu0 0.0
    %1277 = vmatprep.subr.mxu0 0.0
    %1278 = vmatpush1.msra.mxu0 0.0
    %1279 = vmatprep.subr.mxu0 0.0
    %1280 = vmatpush1.msra.mxu0 0.0
    %1281 = vmatprep.subr.mxu0 0.0
    %1282 = vmatpush1.msra.mxu0 0.0
    %1283 = vmatprep.subr.mxu0 0.0
    %1284 = vmatpush1.msra.mxu0 0.0
    %1285 = vmatprep.subr.mxu0 0.0
    %1286 = vmatpush1.msra.mxu0 0.0
    %1287 = vmatprep.subr.mxu0 0.0
    %1288 = vmatpush1.msra.mxu0 0.0
    %1289 = vmatprep.subr.mxu0 0.0
    %1290 = vmatpush1.msra.mxu0 0.0
    %1291 = vmatprep.subr.mxu0 0.0
    %1292 = vmatpush1.msra.mxu0 0.0
    %1293 = vmatprep.subr.mxu0 0.0
    %1294 = vmatpush1.msra.mxu0 0.0
    %1295 = vmatprep.subr.mxu0 0.0
    %1296 = vmatpush1.msra.mxu0 0.0
    %1297 = vmatprep.subr.mxu0 0.0
    %1298 = vmatpush1.msra.mxu0 0.0
    %1299 = vmatprep.subr.mxu0 0.0
    %1300 = vmatpush1.msra.mxu0 0.0
    %1301 = vmatprep.subr.mxu0 0.0
    %1302 = vmatpush1.msra.mxu0 0.0
    %1303 = vmatprep.subr.mxu0 0.0
    %1304 = vmatpush1.msra.mxu0 0.0
    %1305 = vmatprep.subr.mxu0 0.0
    %1306 = vmatpush1.msra.mxu0 0.0
    %1307 = vmatprep.subr.mxu0 0.0
    %1308 = vmatpush1.msra.mxu0 0.0
    %1309 = vmatprep.subr.mxu0 0.0
    %1310 = vmatpush1.msra.mxu0 0.0
    %1311 = vmatprep.subr.mxu0 0.0
    %1312 = vmatpush1.msra.mxu0 0.0
    %1313 = vmatprep.subr.mxu0 0.0
    %1314 = vmatpush1.msra.mxu0 0.0
    %1315 = vmatprep.subr.mxu0 0.0
    %1316 = vmatpush1.msra.mxu0 0.0
    %1317 = vmatprep.mubr.f32.mxu0 0.0
    %1318 = vmatmul.mubr.f32.gmra.mrb[0].mxu0 %v1159
    %v1319 = vpop.f32.mrb[0].mxu0
    %v1320 = vadd.f32 %v1149, %v1319
    %v1321 = vpop.f32.mrb[0].mxu0
    %v1322 = vadd.f32 %v1153, %v1321
    %1323 = vmatprep.mubr.f32.mxu0 0.0
    %1324 = vmatmul.mubr.f32.gmra.mrb[0].mxu0 %v1162
    %v1325 = vpop.f32.mrb[0].mxu0
    %v1326 = vadd.f32 %v1149, %v1325
    %v1327 = vpop.f32.mrb[0].mxu0
    %v1328 = vadd.f32 %v1153, %v1327
    %1329 = vdwg.mxu0
    %v1330 = vmax.f32 %v1243, 0.0
    %v1331 = vmax.f32 %v1245, 0.0
    %v1332 = vmax.f32 %v1320, 0.0
    %v1333 = vmax.f32 %v1322, 0.0
    %v1334 = vmax.f32 %v1249, 0.0
    %v1335 = vmax.f32 %v1251, 0.0
    %v1336 = vmax.f32 %v1326, 0.0
    %v1337 = vmax.f32 %v1328, 0.0
    %v1339 = vlaneseq
    %v1340 = vshrl.u32 %v1339, 7
    %v1341 = vsub.s32 0, %v1340
    %v1342 = vrot.slane %v232, %v1341
    %1344 = vmatprep.subr.mxu0 0.0
    %1345 = vmatpush1.msra.mxu0 %v168
    %1346 = vmatprep.subr.mxu0 0.0
    %1347 = vmatpush1.msra.mxu0 %v169
    %1348 = vmatprep.subr.mxu0 0.0
    %1349 = vmatpush1.msra.mxu0 %v170
    %1350 = vmatprep.subr.mxu0 0.0
    %1351 = vmatpush1.msra.mxu0 %v171
    %1352 = vmatprep.subr.mxu0 0.0
    %1353 = vmatpush1.msra.mxu0 %v172
    %1354 = vmatprep.subr.mxu0 0.0
    %1355 = vmatpush1.msra.mxu0 %v173
    %1356 = vmatprep.subr.mxu0 0.0
    %1357 = vmatpush1.msra.mxu0 %v174
    %1358 = vmatprep.subr.mxu0 0.0
    %1359 = vmatpush1.msra.mxu0 %v175
    %1360 = vmatprep.subr.mxu0 0.0
    %1361 = vmatpush1.msra.mxu0 %v176
    %1362 = vmatprep.subr.mxu0 0.0
    %1363 = vmatpush1.msra.mxu0 %v177
    %1364 = vmatprep.subr.mxu0 0.0
    %1365 = vmatpush1.msra.mxu0 %v178
    %1366 = vmatprep.subr.mxu0 0.0
    %1367 = vmatpush1.msra.mxu0 %v179
    %1368 = vmatprep.subr.mxu0 0.0
    %1369 = vmatpush1.msra.mxu0 %v180
    %1370 = vmatprep.subr.mxu0 0.0
    %1371 = vmatpush1.msra.mxu0 %v181
    %1372 = vmatprep.subr.mxu0 0.0
    %1373 = vmatpush1.msra.mxu0 %v182
    %1374 = vmatprep.subr.mxu0 0.0
    %1375 = vmatpush1.msra.mxu0 %v183
    %1376 = vmatprep.subr.mxu0 0.0
    %1377 = vmatpush1.msra.mxu0 %v184
    %1378 = vmatprep.subr.mxu0 0.0
    %1379 = vmatpush1.msra.mxu0 %v185
    %1380 = vmatprep.subr.mxu0 0.0
    %1381 = vmatpush1.msra.mxu0 %v186
    %1382 = vmatprep.subr.mxu0 0.0
    %1383 = vmatpush1.msra.mxu0 %v187
    %1384 = vmatprep.subr.mxu0 0.0
    %1385 = vmatpush1.msra.mxu0 %v188
    %1386 = vmatprep.subr.mxu0 0.0
    %1387 = vmatpush1.msra.mxu0 %v189
    %1388 = vmatprep.subr.mxu0 0.0
    %1389 = vmatpush1.msra.mxu0 %v190
    %1390 = vmatprep.subr.mxu0 0.0
    %1391 = vmatpush1.msra.mxu0 %v191
    %1392 = vmatprep.subr.mxu0 0.0
    %1393 = vmatpush1.msra.mxu0 %v192
    %1394 = vmatprep.subr.mxu0 0.0
    %1395 = vmatpush1.msra.mxu0 %v193
    %1396 = vmatprep.subr.mxu0 0.0
    %1397 = vmatpush1.msra.mxu0 %v194
    %1398 = vmatprep.subr.mxu0 0.0
    %1399 = vmatpush1.msra.mxu0 %v195
    %1400 = vmatprep.subr.mxu0 0.0
    %1401 = vmatpush1.msra.mxu0 %v196
    %1402 = vmatprep.subr.mxu0 0.0
    %1403 = vmatpush1.msra.mxu0 %v197
    %1404 = vmatprep.subr.mxu0 0.0
    %1405 = vmatpush1.msra.mxu0 %v198
    %1406 = vmatprep.subr.mxu0 0.0
    %1407 = vmatpush1.msra.mxu0 %v199
    %1408 = vmatprep.mubr.f32.mxu0 %v1331
    %1409 = vmatmul.mubr.f32.gmra.mrb[0].mxu0 %v1330
    %v1410 = vpop.f32.mrb[0].mxu0
    %v1411 = vadd.f32 %v1342, %v1410
    %v1412 = vpop.f32.mrb[0].mxu0
    %1413 = vmatprep.mubr.f32.mxu0 %v1335
    %1414 = vmatmul.mubr.f32.gmra.mrb[0].mxu0 %v1334
    %v1415 = vpop.f32.mrb[0].mxu0
    %v1416 = vadd.f32 %v1342, %v1415
    %v1417 = vpop.f32.mrb[0].mxu0
    %1418 = vdwg.mxu0
    %1419 = vmatprep.subr.mxu0 0.0
    %1420 = vmatpush1.msra.mxu0 %v200
    %1421 = vmatprep.subr.mxu0 0.0
    %1422 = vmatpush1.msra.mxu0 %v201
    %1423 = vmatprep.subr.mxu0 0.0
    %1424 = vmatpush1.msra.mxu0 %v202
    %1425 = vmatprep.subr.mxu0 0.0
    %1426 = vmatpush1.msra.mxu0 %v203
    %1427 = vmatprep.subr.mxu0 0.0
    %1428 = vmatpush1.msra.mxu0 %v204
    %1429 = vmatprep.subr.mxu0 0.0
    %1430 = vmatpush1.msra.mxu0 %v205
    %1431 = vmatprep.subr.mxu0 0.0
    %1432 = vmatpush1.msra.mxu0 %v206
    %1433 = vmatprep.subr.mxu0 0.0
    %1434 = vmatpush1.msra.mxu0 %v207
    %1435 = vmatprep.subr.mxu0 0.0
    %1436 = vmatpush1.msra.mxu0 %v208
    %1437 = vmatprep.subr.mxu0 0.0
    %1438 = vmatpush1.msra.mxu0 %v209
    %1439 = vmatprep.subr.mxu0 0.0
    %1440 = vmatpush1.msra.mxu0 %v210
    %1441 = vmatprep.subr.mxu0 0.0
    %1442 = vmatpush1.msra.mxu0 %v211
    %1443 = vmatprep.subr.mxu0 0.0
    %1444 = vmatpush1.msra.mxu0 %v212
    %1445 = vmatprep.subr.mxu0 0.0
    %1446 = vmatpush1.msra.mxu0 %v213
    %1447 = vmatprep.subr.mxu0 0.0
    %1448 = vmatpush1.msra.mxu0 %v214
    %1449 = vmatprep.subr.mxu0 0.0
    %1450 = vmatpush1.msra.mxu0 %v215
    %1451 = vmatprep.subr.mxu0 0.0
    %1452 = vmatpush1.msra.mxu0 %v216
    %1453 = vmatprep.subr.mxu0 0.0
    %1454 = vmatpush1.msra.mxu0 %v217
    %1455 = vmatprep.subr.mxu0 0.0
    %1456 = vmatpush1.msra.mxu0 %v218
    %1457 = vmatprep.subr.mxu0 0.0
    %1458 = vmatpush1.msra.mxu0 %v219
    %1459 = vmatprep.subr.mxu0 0.0
    %1460 = vmatpush1.msra.mxu0 %v220
    %1461 = vmatprep.subr.mxu0 0.0
    %1462 = vmatpush1.msra.mxu0 %v221
    %1463 = vmatprep.subr.mxu0 0.0
    %1464 = vmatpush1.msra.mxu0 %v222
    %1465 = vmatprep.subr.mxu0 0.0
    %1466 = vmatpush1.msra.mxu0 %v223
    %1467 = vmatprep.subr.mxu0 0.0
    %1468 = vmatpush1.msra.mxu0 %v224
    %1469 = vmatprep.subr.mxu0 0.0
    %1470 = vmatpush1.msra.mxu0 %v225
    %1471 = vmatprep.subr.mxu0 0.0
    %1472 = vmatpush1.msra.mxu0 %v226
    %1473 = vmatprep.subr.mxu0 0.0
    %1474 = vmatpush1.msra.mxu0 %v227
    %1475 = vmatprep.subr.mxu0 0.0
    %1476 = vmatpush1.msra.mxu0 %v228
    %1477 = vmatprep.subr.mxu0 0.0
    %1478 = vmatpush1.msra.mxu0 %v229
    %1479 = vmatprep.subr.mxu0 0.0
    %1480 = vmatpush1.msra.mxu0 %v230
    %1481 = vmatprep.subr.mxu0 0.0
    %1482 = vmatpush1.msra.mxu0 %v231
    %1483 = vmatprep.mubr.f32.mxu0 %v1333
    %1484 = vmatmul.mubr.f32.gmra.mrb[0].mxu0 %v1332
    %v1485 = vpop.f32.mrb[0].mxu0
    %v1486 = vadd.f32 %v1411, %v1485
    %v1487 = vpop.f32.mrb[0].mxu0
    %1488 = vmatprep.mubr.f32.mxu0 %v1337
    %1489 = vmatmul.mubr.f32.gmra.mrb[0].mxu0 %v1336
    %v1490 = vpop.f32.mrb[0].mxu0
    %v1491 = vadd.f32 %v1416, %v1490
    %v1492 = vpop.f32.mrb[0].mxu0
    %1493 = vdwg.mxu0
    %v1494 = vadd.f32 %v1135, %v1486
    %v1495 = vadd.f32 %v1136, %v1491
    %v1496 = vsel %vm241, %v1494, 0.0
    %1497 = vadd.xlane.f32.xlu0 %v1496
    %v1498 = vpop.xlane.xlu0 %1497
    %v1499 = vsel %vm241, %v1495, 0.0
    %1500 = vadd.xlane.f32.xlu0 %v1499
    %v1501 = vpop.xlane.xlu0 %1500
    %v1502 = vmul.f32 %v1498, %v1100
    %v1503 = vmul.f32 %v1501, %v1100
    %v1504 = vsub.f32 %v1494, %v1502
    %v1505 = vsub.f32 %v1495, %v1503
    %v1506 = vmul.f32 %v1504, %v1504
    %v1507 = vmul.f32 %v1505, %v1505
    %v1508 = vsel %vm241, %v1506, 0.0
    %1509 = vadd.xlane.f32.xlu0 %v1508
    %v1510 = vpop.xlane.xlu0 %1509
    %v1511 = vsel %vm241, %v1507, 0.0
    %1512 = vadd.xlane.f32.xlu0 %v1511
    %v1513 = vpop.xlane.xlu0 %1512
    %v1514 = vmul.f32 %v1510, %v1100
    %v1515 = vmul.f32 %v1513, %v1100
    %v1516 = vadd.f32 %v1514, 1e-05
    %v1517 = vadd.f32 %v1515, 1e-05
    %v1518 = vrsqrt.pop %v1516
    %v1519 = vrsqrt.pop %v1517
    %v1520 = vmul.f32 %v1504, %v1518
    %v1521 = vmul.f32 %v1505, %v1519
    %v1523 = vlaneseq
    %v1524 = vshrl.u32 %v1523, 7
    %v1525 = vsub.s32 0, %v1524
    %v1526 = vrot.slane %v233, %v1525
    %v1528 = vmul.f32 %v1520, %v1526
    %v1529 = vmul.f32 %v1521, %v1526
    %v1531 = vlaneseq
    %v1532 = vshrl.u32 %v1531, 7
    %v1533 = vsub.s32 0, %v1532
    %v1534 = vrot.slane %v234, %v1533
    %v1536 = vadd.f32 %v1528, %v1534
    %v1537 = vadd.f32 %v1529, %v1534
    %v1538 = vld [vmem:[%s3] sm:$0xff]
    %v1539 = vld [vmem:[%s3 + $0x8] sm:$0xff]
    %v1540 = vld [vmem:[%s29] sm:$0xff]
    %v1541 = vld [vmem:[%s29 + $0x8] sm:$0x3]
    %v1542 = vld [vmem:[%s31] sm:$0x1]
    %v1543 = vld [vmem:[%s33] sm:$0xff]
    %v1544 = vld [vmem:[%s33 + $0x8] sm:$0x3]
    %v1545 = vld [vmem:[%s35] sm:$0x1]
    %v1546 = vld [vmem:[%s37] sm:$0x1]
    %v1547 = vld [vmem:[%s39] sm:$0x1]
    %v1548 = vld [vmem:[%s41] sm:$0xff]
    %v1549 = vld [vmem:[%s41 + $0x8] sm:$0xff]
    %v1550 = vld [vmem:[%s41 + $0x10] sm:$0xff]
    %v1551 = vld [vmem:[%s41 + $0x18] sm:$0xff]
    %v1552 = vld [vmem:[%s41 + $0x20] sm:$0xff]
    %v1553 = vld [vmem:[%s41 + $0x28] sm:$0xff]
    %v1554 = vld [vmem:[%s41 + $0x30] sm:$0xff]
    %v1555 = vld [vmem:[%s41 + $0x38] sm:$0xff]
    %v1556 = vld [vmem:[%s41 + $0x40] sm:$0x3]
    %v1557 = vld [vmem:[%s41 + $0x48] sm:$0x3]
    %v1558 = vld [vmem:[%s41 + $0x50] sm:$0x3]
    %v1559 = vld [vmem:[%s41 + $0x58] sm:$0x3]
    %v1560 = vld [vmem:[%s41 + $0x60] sm:$0x3]
    %v1561 = vld [vmem:[%s41 + $0x68] sm:$0x3]
    %v1562 = vld [vmem:[%s41 + $0x70] sm:$0x3]
    %v1563 = vld [vmem:[%s41 + $0x78] sm:$0x3]
    %v1564 = vld [vmem:[%s43] sm:$0xff]
    %v1565 = vld [vmem:[%s45] sm:$0xff]
    %v1566 = vld [vmem:[%s45 + $0x8] sm:$0xff]
    %v1567 = vld [vmem:[%s45 + $0x10] sm:$0xff]
    %v1568 = vld [vmem:[%s45 + $0x18] sm:$0xff]
    %v1569 = vld [vmem:[%s45 + $0x20] sm:$0xff]
    %v1570 = vld [vmem:[%s45 + $0x28] sm:$0xff]
    %v1571 = vld [vmem:[%s45 + $0x30] sm:$0xff]
    %v1572 = vld [vmem:[%s45 + $0x38] sm:$0xff]
    %v1573 = vld [vmem:[%s45 + $0x40] sm:$0xff]
    %v1574 = vld [vmem:[%s45 + $0x48] sm:$0xff]
    %v1575 = vld [vmem:[%s45 + $0x50] sm:$0xff]
    %v1576 = vld [vmem:[%s45 + $0x58] sm:$0xff]
    %v1577 = vld [vmem:[%s45 + $0x60] sm:$0xff]
    %v1578 = vld [vmem:[%s45 + $0x68] sm:$0xff]
    %v1579 = vld [vmem:[%s45 + $0x70] sm:$0xff]
    %v1580 = vld [vmem:[%s45 + $0x78] sm:$0xff]
    %v1581 = vld [vmem:[%s45 + $0x80] sm:$0xff]
    %v1582 = vld [vmem:[%s45 + $0x88] sm:$0xff]
    %v1583 = vld [vmem:[%s45 + $0x90] sm:$0xff]
    %v1584 = vld [vmem:[%s45 + $0x98] sm:$0xff]
    %v1585 = vld [vmem:[%s45 + $0xa0] sm:$0xff]
    %v1586 = vld [vmem:[%s45 + $0xa8] sm:$0xff]
    %v1587 = vld [vmem:[%s45 + $0xb0] sm:$0xff]
    %v1588 = vld [vmem:[%s45 + $0xb8] sm:$0xff]
    %v1589 = vld [vmem:[%s45 + $0xc0] sm:$0xff]
    %v1590 = vld [vmem:[%s45 + $0xc8] sm:$0xff]
    %v1591 = vld [vmem:[%s45 + $0xd0] sm:$0xff]
    %v1592 = vld [vmem:[%s45 + $0xd8] sm:$0xff]
    %v1593 = vld [vmem:[%s45 + $0xe0] sm:$0xff]
    %v1594 = vld [vmem:[%s45 + $0xe8] sm:$0xff]
    %v1595 = vld [vmem:[%s45 + $0xf0] sm:$0xff]
    %v1596 = vld [vmem:[%s45 + $0xf8] sm:$0xff]
    %v1597 = vld [vmem:[%s45 + $0x100] sm:$0xff]
    %v1598 = vld [vmem:[%s45 + $0x108] sm:$0xff]
    %v1599 = vld [vmem:[%s45 + $0x110] sm:$0xff]
    %v1600 = vld [vmem:[%s45 + $0x118] sm:$0xff]
    %v1601 = vld [vmem:[%s45 + $0x120] sm:$0xff]
    %v1602 = vld [vmem:[%s45 + $0x128] sm:$0xff]
    %v1603 = vld [vmem:[%s45 + $0x130] sm:$0xff]
    %v1604 = vld [vmem:[%s45 + $0x138] sm:$0xff]
    %v1605 = vld [vmem:[%s45 + $0x140] sm:$0xff]
    %v1606 = vld [vmem:[%s45 + $0x148] sm:$0xff]
    %v1607 = vld [vmem:[%s45 + $0x150] sm:$0xff]
    %v1608 = vld [vmem:[%s45 + $0x158] sm:$0xff]
    %v1609 = vld [vmem:[%s45 + $0x160] sm:$0xff]
    %v1610 = vld [vmem:[%s45 + $0x168] sm:$0xff]
    %v1611 = vld [vmem:[%s45 + $0x170] sm:$0xff]
    %v1612 = vld [vmem:[%s45 + $0x178] sm:$0xff]
    %v1613 = vld [vmem:[%s45 + $0x180] sm:$0xff]
    %v1614 = vld [vmem:[%s45 + $0x188] sm:$0xff]
    %v1615 = vld [vmem:[%s45 + $0x190] sm:$0xff]
    %v1616 = vld [vmem:[%s45 + $0x198] sm:$0xff]
    %v1617 = vld [vmem:[%s45 + $0x1a0] sm:$0xff]
    %v1618 = vld [vmem:[%s45 + $0x1a8] sm:$0xff]
    %v1619 = vld [vmem:[%s45 + $0x1b0] sm:$0xff]
    %v1620 = vld [vmem:[%s45 + $0x1b8] sm:$0xff]
    %v1621 = vld [vmem:[%s45 + $0x1c0] sm:$0xff]
    %v1622 = vld [vmem:[%s45 + $0x1c8] sm:$0xff]
    %v1623 = vld [vmem:[%s45 + $0x1d0] sm:$0xff]
    %v1624 = vld [vmem:[%s45 + $0x1d8] sm:$0xff]
    %v1625 = vld [vmem:[%s45 + $0x1e0] sm:$0xff]
    %v1626 = vld [vmem:[%s45 + $0x1e8] sm:$0xff]
    %v1627 = vld [vmem:[%s45 + $0x1f0] sm:$0xff]
    %v1628 = vld [vmem:[%s45 + $0x1f8] sm:$0xff]
    %v1629 = vld [vmem:[%s45 + $0x200] sm:$0xff]
    %v1630 = vld [vmem:[%s45 + $0x208] sm:$0xff]
    %v1631 = vld [vmem:[%s45 + $0x210] sm:$0xff]
    %v1632 = vld [vmem:[%s45 + $0x218] sm:$0xff]
    %v1633 = vld [vmem:[%s45 + $0x220] sm:$0xff]
    %v1634 = vld [vmem:[%s45 + $0x228] sm:$0xff]
    %v1635 = vld [vmem:[%s45 + $0x230] sm:$0xff]
    %v1636 = vld [vmem:[%s45 + $0x238] sm:$0xff]
    %v1637 = vld [vmem:[%s45 + $0x240] sm:$0xff]
    %v1638 = vld [vmem:[%s45 + $0x248] sm:$0xff]
    %v1639 = vld [vmem:[%s45 + $0x250] sm:$0xff]
    %v1640 = vld [vmem:[%s45 + $0x258] sm:$0xff]
    %v1641 = vld [vmem:[%s45 + $0x260] sm:$0xff]
    %v1642 = vld [vmem:[%s45 + $0x268] sm:$0xff]
    %v1643 = vld [vmem:[%s45 + $0x270] sm:$0xff]
    %v1644 = vld [vmem:[%s45 + $0x278] sm:$0xff]
    %v1645 = vld [vmem:[%s45 + $0x280] sm:$0xff]
    %v1646 = vld [vmem:[%s45 + $0x288] sm:$0xff]
    %v1647 = vld [vmem:[%s45 + $0x290] sm:$0xff]
    %v1648 = vld [vmem:[%s45 + $0x298] sm:$0xff]
    %v1649 = vld [vmem:[%s45 + $0x2a0] sm:$0xff]
    %v1650 = vld [vmem:[%s45 + $0x2a8] sm:$0xff]
    %v1651 = vld [vmem:[%s45 + $0x2b0] sm:$0xff]
    %v1652 = vld [vmem:[%s45 + $0x2b8] sm:$0xff]
    %v1653 = vld [vmem:[%s45 + $0x2c0] sm:$0xff]
    %v1654 = vld [vmem:[%s45 + $0x2c8] sm:$0xff]
    %v1655 = vld [vmem:[%s45 + $0x2d0] sm:$0xff]
    %v1656 = vld [vmem:[%s45 + $0x2d8] sm:$0xff]
    %v1657 = vld [vmem:[%s45 + $0x2e0] sm:$0xff]
    %v1658 = vld [vmem:[%s45 + $0x2e8] sm:$0xff]
    %v1659 = vld [vmem:[%s45 + $0x2f0] sm:$0xff]
    %v1660 = vld [vmem:[%s45 + $0x2f8] sm:$0xff]
    %v1661 = vld [vmem:[%s45 + $0x300] sm:$0xff]
    %v1662 = vld [vmem:[%s45 + $0x308] sm:$0xff]
    %v1663 = vld [vmem:[%s45 + $0x310] sm:$0xff]
    %v1664 = vld [vmem:[%s45 + $0x318] sm:$0xff]
    %v1665 = vld [vmem:[%s45 + $0x320] sm:$0xff]
    %v1666 = vld [vmem:[%s45 + $0x328] sm:$0xff]
    %v1667 = vld [vmem:[%s45 + $0x330] sm:$0xff]
    %v1668 = vld [vmem:[%s45 + $0x338] sm:$0xff]
    %v1669 = vld [vmem:[%s45 + $0x340] sm:$0xff]
    %v1670 = vld [vmem:[%s45 + $0x348] sm:$0xff]
    %v1671 = vld [vmem:[%s45 + $0x350] sm:$0xff]
    %v1672 = vld [vmem:[%s45 + $0x358] sm:$0xff]
    %v1673 = vld [vmem:[%s45 + $0x360] sm:$0xff]
    %v1674 = vld [vmem:[%s45 + $0x368] sm:$0xff]
    %v1675 = vld [vmem:[%s45 + $0x370] sm:$0xff]
    %v1676 = vld [vmem:[%s45 + $0x378] sm:$0xff]
    %v1677 = vld [vmem:[%s45 + $0x380] sm:$0xff]
    %v1678 = vld [vmem:[%s45 + $0x388] sm:$0xff]
    %v1679 = vld [vmem:[%s45 + $0x390] sm:$0xff]
    %v1680 = vld [vmem:[%s45 + $0x398] sm:$0xff]
    %v1681 = vld [vmem:[%s45 + $0x3a0] sm:$0xff]
    %v1682 = vld [vmem:[%s45 + $0x3a8] sm:$0xff]
    %v1683 = vld [vmem:[%s45 + $0x3b0] sm:$0xff]
    %v1684 = vld [vmem:[%s45 + $0x3b8] sm:$0xff]
    %v1685 = vld [vmem:[%s45 + $0x3c0] sm:$0xff]
    %v1686 = vld [vmem:[%s45 + $0x3c8] sm:$0xff]
    %v1687 = vld [vmem:[%s45 + $0x3d0] sm:$0xff]
    %v1688 = vld [vmem:[%s45 + $0x3d8] sm:$0xff]
    %v1689 = vld [vmem:[%s45 + $0x3e0] sm:$0xff]
    %v1690 = vld [vmem:[%s45 + $0x3e8] sm:$0xff]
    %v1691 = vld [vmem:[%s45 + $0x3f0] sm:$0xff]
    %v1692 = vld [vmem:[%s45 + $0x3f8] sm:$0xff]
    %v1693 = vld [vmem:[%s47] sm:$0x1]
    %v1694 = vld [vmem:[%s49] sm:$0x1]
    %v1695 = vld [vmem:[%s51] sm:$0x1]
    %v1697 = vlaneseq
    %v1698 = vshrl.u32 %v1697, 7
    %v1699 = vsub.s32 0, %v1698
    %v1700 = vrot.slane %v1542, %v1699
    %vm1702 = vcmask 80896
    %v1704 = vsel %vm1702, %v1538, 0
    %v1707 = vsel %vm1702, %v1539, 0
    %vm1709 = vcmask 1041408
    %v1711 = vsel %vm1709, %v1541, 0
    %1713 = vmatprep.subr.mxu0 0.0
    %1714 = vmatpush1.msra.mxu0 %v1540
    %1715 = vmatprep.subr.mxu0 0.0
    %1716 = vmatpush1.msra.mxu0 %v1711
    %1717 = vmatprep.subr.mxu0 0.0
    %1718 = vmatpush1.msra.mxu0 0.0
    %1719 = vmatprep.subr.mxu0 0.0
    %1720 = vmatpush1.msra.mxu0 0.0
    %1721 = vmatprep.subr.mxu0 0.0
    %1722 = vmatpush1.msra.mxu0 0.0
    %1723 = vmatprep.subr.mxu0 0.0
    %1724 = vmatpush1.msra.mxu0 0.0
    %1725 = vmatprep.subr.mxu0 0.0
    %1726 = vmatpush1.msra.mxu0 0.0
    %1727 = vmatprep.subr.mxu0 0.0
    %1728 = vmatpush1.msra.mxu0 0.0
    %1729 = vmatprep.subr.mxu0 0.0
    %1730 = vmatpush1.msra.mxu0 0.0
    %1731 = vmatprep.subr.mxu0 0.0
    %1732 = vmatpush1.msra.mxu0 0.0
    %1733 = vmatprep.subr.mxu0 0.0
    %1734 = vmatpush1.msra.mxu0 0.0
    %1735 = vmatprep.subr.mxu0 0.0
    %1736 = vmatpush1.msra.mxu0 0.0
    %1737 = vmatprep.subr.mxu0 0.0
    %1738 = vmatpush1.msra.mxu0 0.0
    %1739 = vmatprep.subr.mxu0 0.0
    %1740 = vmatpush1.msra.mxu0 0.0
    %1741 = vmatprep.subr.mxu0 0.0
    %1742 = vmatpush1.msra.mxu0 0.0
    %1743 = vmatprep.subr.mxu0 0.0
    %1744 = vmatpush1.msra.mxu0 0.0
    %1745 = vmatprep.subr.mxu0 0.0
    %1746 = vmatpush1.msra.mxu0 0.0
    %1747 = vmatprep.subr.mxu0 0.0
    %1748 = vmatpush1.msra.mxu0 0.0
    %1749 = vmatprep.subr.mxu0 0.0
    %1750 = vmatpush1.msra.mxu0 0.0
    %1751 = vmatprep.subr.mxu0 0.0
    %1752 = vmatpush1.msra.mxu0 0.0
    %1753 = vmatprep.subr.mxu0 0.0
    %1754 = vmatpush1.msra.mxu0 0.0
    %1755 = vmatprep.subr.mxu0 0.0
    %1756 = vmatpush1.msra.mxu0 0.0
    %1757 = vmatprep.subr.mxu0 0.0
    %1758 = vmatpush1.msra.mxu0 0.0
    %1759 = vmatprep.subr.mxu0 0.0
    %1760 = vmatpush1.msra.mxu0 0.0
    %1761 = vmatprep.subr.mxu0 0.0
    %1762 = vmatpush1.msra.mxu0 0.0
    %1763 = vmatprep.subr.mxu0 0.0
    %1764 = vmatpush1.msra.mxu0 0.0
    %1765 = vmatprep.subr.mxu0 0.0
    %1766 = vmatpush1.msra.mxu0 0.0
    %1767 = vmatprep.subr.mxu0 0.0
    %1768 = vmatpush1.msra.mxu0 0.0
    %1769 = vmatprep.subr.mxu0 0.0
    %1770 = vmatpush1.msra.mxu0 0.0
    %1771 = vmatprep.subr.mxu0 0.0
    %1772 = vmatpush1.msra.mxu0 0.0
    %1773 = vmatprep.subr.mxu0 0.0
    %1774 = vmatpush1.msra.mxu0 0.0
    %1775 = vmatprep.subr.mxu0 0.0
    %1776 = vmatpush1.msra.mxu0 0.0
    %1777 = vmatprep.mubr.f32.mxu0 0.0
    %1778 = vmatmul.mubr.f32.gmra.mrb[0].mxu0 %v1704
    %v1779 = vpop.f32.mrb[0].mxu0
    %v1780 = vadd.f32 %v1700, %v1779
    %v1781 = vpop.f32.mrb[0].mxu0
    %1782 = vmatprep.mubr.f32.mxu0 0.0
    %1783 = vmatmul.mubr.f32.gmra.mrb[0].mxu0 %v1707
    %v1784 = vpop.f32.mrb[0].mxu0
    %v1785 = vadd.f32 %v1700, %v1784
    %v1786 = vpop.f32.mrb[0].mxu0
    %1787 = vdwg.mxu0
    %v1790 = vcombine.high %v1780, %v1780
    %v1792 = vunpack.c.l.s4 1966171168
    %v1793 = vunpack.c.0.s8 %v1792
    %v1794 = vlaneseq
    %v1795 = vshrl.u32 %v1794, 7
    %v1796 = vsub.s32 %v1793, %v1795
    %v1797 = vrot.slane %v1780, %v1796
    %v1799 = vunpack.c.l.s4 1966171168
    %v1800 = vunpack.c.0.s8 %v1799
    %v1801 = vlaneseq
    %v1802 = vshrl.u32 %v1801, 7
    %v1803 = vsub.s32 %v1800, %v1802
    %v1804 = vrot.slane %v1790, %v1803
    %v1805 = vcombine.high %v1797, %v1797
    %v1806 = vcombine.high %v1804, %v1804
    %v1808 = vunpack.c.l.s4 1966171168
    %v1809 = vunpack.c.0.s8 %v1808
    %v1810 = vlaneseq
    %v1811 = vshrl.u32 %v1810, 7
    %v1812 = vsub.s32 %v1809, %v1811
    %v1813 = vrot.slane %v1797, %v1812
    %v1815 = vunpack.c.l.s4 1966171168
    %v1816 = vunpack.c.0.s8 %v1815
    %v1817 = vlaneseq
    %v1818 = vshrl.u32 %v1817, 7
    %v1819 = vsub.s32 %v1816, %v1818
    %v1820 = vrot.slane %v1804, %v1819
    %v1822 = vunpack.c.l.s4 1966171168
    %v1823 = vunpack.c.0.s8 %v1822
    %v1824 = vlaneseq
    %v1825 = vshrl.u32 %v1824, 7
    %v1826 = vsub.s32 %v1823, %v1825
    %v1827 = vrot.slane %v1805, %v1826
    %v1829 = vunpack.c.l.s4 1966171168
    %v1830 = vunpack.c.0.s8 %v1829
    %v1831 = vlaneseq
    %v1832 = vshrl.u32 %v1831, 7
    %v1833 = vsub.s32 %v1830, %v1832
    %v1834 = vrot.slane %v1806, %v1833
    %v1835 = vcombine.high %v1813, %v1813
    %v1836 = vcombine.high %v1820, %v1820
    %v1837 = vcombine.high %v1827, %v1827
    %v1838 = vcombine.high %v1834, %v1834
    %v1839 = vcombine.high %v1785, %v1785
    %v1841 = vunpack.c.l.s4 1966171168
    %v1842 = vunpack.c.0.s8 %v1841
    %v1843 = vlaneseq
    %v1844 = vshrl.u32 %v1843, 7
    %v1845 = vsub.s32 %v1842, %v1844
    %v1846 = vrot.slane %v1785, %v1845
    %v1848 = vunpack.c.l.s4 1966171168
    %v1849 = vunpack.c.0.s8 %v1848
    %v1850 = vlaneseq
    %v1851 = vshrl.u32 %v1850, 7
    %v1852 = vsub.s32 %v1849, %v1851
    %v1853 = vrot.slane %v1839, %v1852
    %v1854 = vcombine.high %v1846, %v1846
    %v1855 = vcombine.high %v1853, %v1853
    %v1857 = vunpack.c.l.s4 1966171168
    %v1858 = vunpack.c.0.s8 %v1857
    %v1859 = vlaneseq
    %v1860 = vshrl.u32 %v1859, 7
    %v1861 = vsub.s32 %v1858, %v1860
    %v1862 = vrot.slane %v1846, %v1861
    %v1864 = vunpack.c.l.s4 1966171168
    %v1865 = vunpack.c.0.s8 %v1864
    %v1866 = vlaneseq
    %v1867 = vshrl.u32 %v1866, 7
    %v1868 = vsub.s32 %v1865, %v1867
    %v1869 = vrot.slane %v1853, %v1868
    %v1871 = vunpack.c.l.s4 1966171168
    %v1872 = vunpack.c.0.s8 %v1871
    %v1873 = vlaneseq
    %v1874 = vshrl.u32 %v1873, 7
    %v1875 = vsub.s32 %v1872, %v1874
    %v1876 = vrot.slane %v1854, %v1875
    %v1878 = vunpack.c.l.s4 1966171168
    %v1879 = vunpack.c.0.s8 %v1878
    %v1880 = vlaneseq
    %v1881 = vshrl.u32 %v1880, 7
    %v1882 = vsub.s32 %v1879, %v1881
    %v1883 = vrot.slane %v1855, %v1882
    %v1884 = vcombine.high %v1862, %v1862
    %v1885 = vcombine.high %v1869, %v1869
    %v1886 = vcombine.high %v1876, %v1876
    %v1887 = vcombine.high %v1883, %v1883
    %v1888 = vlaneseq
    %v1889 = vshrl.u32 %v1888, 7
    %v1890 = vsub.s32 0, %v1889
    %v1891 = vrot.slane %v1813, %v1890
    %v1892 = vlaneseq
    %v1893 = vshrl.u32 %v1892, 7
    %v1894 = vsub.s32 0, %v1893
    %v1895 = vrot.slane %v1827, %v1894
    %v1896 = vlaneseq
    %v1897 = vshrl.u32 %v1896, 7
    %v1898 = vsub.s32 0, %v1897
    %v1899 = vrot.slane %v1835, %v1898
    %v1900 = vlaneseq
    %v1901 = vshrl.u32 %v1900, 7
    %v1902 = vsub.s32 0, %v1901
    %v1903 = vrot.slane %v1837, %v1902
    %v1904 = vlaneseq
    %v1905 = vshrl.u32 %v1904, 7
    %v1906 = vsub.s32 0, %v1905
    %v1907 = vrot.slane %v1820, %v1906
    %v1908 = vlaneseq
    %v1909 = vshrl.u32 %v1908, 7
    %v1910 = vsub.s32 0, %v1909
    %v1911 = vrot.slane %v1834, %v1910
    %v1912 = vlaneseq
    %v1913 = vshrl.u32 %v1912, 7
    %v1914 = vsub.s32 0, %v1913
    %v1915 = vrot.slane %v1836, %v1914
    %v1916 = vlaneseq
    %v1917 = vshrl.u32 %v1916, 7
    %v1918 = vsub.s32 0, %v1917
    %v1919 = vrot.slane %v1838, %v1918
    %v1920 = vlaneseq
    %v1921 = vshrl.u32 %v1920, 7
    %v1922 = vsub.s32 0, %v1921
    %v1923 = vrot.slane %v1862, %v1922
    %v1924 = vlaneseq
    %v1925 = vshrl.u32 %v1924, 7
    %v1926 = vsub.s32 0, %v1925
    %v1927 = vrot.slane %v1876, %v1926
    %v1928 = vlaneseq
    %v1929 = vshrl.u32 %v1928, 7
    %v1930 = vsub.s32 0, %v1929
    %v1931 = vrot.slane %v1884, %v1930
    %v1932 = vlaneseq
    %v1933 = vshrl.u32 %v1932, 7
    %v1934 = vsub.s32 0, %v1933
    %v1935 = vrot.slane %v1886, %v1934
    %v1936 = vlaneseq
    %v1937 = vshrl.u32 %v1936, 7
    %v1938 = vsub.s32 0, %v1937
    %v1939 = vrot.slane %v1869, %v1938
    %v1940 = vlaneseq
    %v1941 = vshrl.u32 %v1940, 7
    %v1942 = vsub.s32 0, %v1941
    %v1943 = vrot.slane %v1883, %v1942
    %v1944 = vlaneseq
    %v1945 = vshrl.u32 %v1944, 7
    %v1946 = vsub.s32 0, %v1945
    %v1947 = vrot.slane %v1885, %v1946
    %v1948 = vlaneseq
    %v1949 = vshrl.u32 %v1948, 7
    %v1950 = vsub.s32 0, %v1949
    %v1951 = vrot.slane %v1887, %v1950
    %1968 = vrot.lane.b32.xlu0 %v1780, 118
    %v1969 = vpop.permute.xlu0 %1968
    %1970 = vrot.lane.b32.xlu0 %v1785, 118
    %v1971 = vpop.permute.xlu0 %1970
    %v1974 = vmul.f32 %v1891, %v1969
    %v1975 = vmul.f32 %v1895, %v1969
    %v1976 = vmul.f32 %v1899, %v1969
    %v1977 = vmul.f32 %v1903, %v1969
    %v1978 = vmul.f32 %v1907, %v1969
    %v1979 = vmul.f32 %v1911, %v1969
    %v1980 = vmul.f32 %v1915, %v1969
    %v1981 = vmul.f32 %v1919, %v1969
    %v1982 = vmul.f32 %v1923, %v1971
    %v1983 = vmul.f32 %v1927, %v1971
    %v1984 = vmul.f32 %v1931, %v1971
    %v1985 = vmul.f32 %v1935, %v1971
    %v1986 = vmul.f32 %v1939, %v1971
    %v1987 = vmul.f32 %v1943, %v1971
    %v1988 = vmul.f32 %v1947, %v1971
    %v1989 = vmul.f32 %v1951, %v1971
    %v1990 = vsel %vm1702, %v1974, -inf
    %v1991 = vrot.slane %v1990, 4
    %v1992 = vmax.f32 %v1990, %v1991
    %v1993 = vrot.slane %v1992, 2
    %v1994 = vmax.f32 %v1992, %v1993
    %v1995 = vrot.slane %v1994, 1
    %v1996 = vmax.f32 %v1994, %v1995
    %v1997 = vsel %vm1702, %v1975, -inf
    %v1998 = vrot.slane %v1997, 4
    %v1999 = vmax.f32 %v1997, %v1998
    %v2000 = vrot.slane %v1999, 2
    %v2001 = vmax.f32 %v1999, %v2000
    %v2002 = vrot.slane %v2001, 1
    %v2003 = vmax.f32 %v2001, %v2002
    %v2004 = vsel %vm1702, %v1976, -inf
    %v2005 = vrot.slane %v2004, 4
    %v2006 = vmax.f32 %v2004, %v2005
    %v2007 = vrot.slane %v2006, 2
    %v2008 = vmax.f32 %v2006, %v2007
    %v2009 = vrot.slane %v2008, 1
    %v2010 = vmax.f32 %v2008, %v2009
    %v2011 = vsel %vm1702, %v1977, -inf
    %v2012 = vrot.slane %v2011, 4
    %v2013 = vmax.f32 %v2011, %v2012
    %v2014 = vrot.slane %v2013, 2
    %v2015 = vmax.f32 %v2013, %v2014
    %v2016 = vrot.slane %v2015, 1
    %v2017 = vmax.f32 %v2015, %v2016
    %v2018 = vsel %vm1702, %v1978, -inf
    %v2019 = vrot.slane %v2018, 4
    %v2020 = vmax.f32 %v2018, %v2019
    %v2021 = vrot.slane %v2020, 2
    %v2022 = vmax.f32 %v2020, %v2021
    %v2023 = vrot.slane %v2022, 1
    %v2024 = vmax.f32 %v2022, %v2023
    %v2025 = vsel %vm1702, %v1979, -inf
    %v2026 = vrot.slane %v2025, 4
    %v2027 = vmax.f32 %v2025, %v2026
    %v2028 = vrot.slane %v2027, 2
    %v2029 = vmax.f32 %v2027, %v2028
    %v2030 = vrot.slane %v2029, 1
    %v2031 = vmax.f32 %v2029, %v2030
    %v2032 = vsel %vm1702, %v1980, -inf
    %v2033 = vrot.slane %v2032, 4
    %v2034 = vmax.f32 %v2032, %v2033
    %v2035 = vrot.slane %v2034, 2
    %v2036 = vmax.f32 %v2034, %v2035
    %v2037 = vrot.slane %v2036, 1
    %v2038 = vmax.f32 %v2036, %v2037
    %v2039 = vsel %vm1702, %v1981, -inf
    %v2040 = vrot.slane %v2039, 4
    %v2041 = vmax.f32 %v2039, %v2040
    %v2042 = vrot.slane %v2041, 2
    %v2043 = vmax.f32 %v2041, %v2042
    %v2044 = vrot.slane %v2043, 1
    %v2045 = vmax.f32 %v2043, %v2044
    %v2046 = vsel %vm1702, %v1982, -inf
    %v2047 = vrot.slane %v2046, 4
    %v2048 = vmax.f32 %v2046, %v2047
    %v2049 = vrot.slane %v2048, 2
    %v2050 = vmax.f32 %v2048, %v2049
    %v2051 = vrot.slane %v2050, 1
    %v2052 = vmax.f32 %v2050, %v2051
    %v2053 = vsel %vm1702, %v1983, -inf
    %v2054 = vrot.slane %v2053, 4
    %v2055 = vmax.f32 %v2053, %v2054
    %v2056 = vrot.slane %v2055, 2
    %v2057 = vmax.f32 %v2055, %v2056
    %v2058 = vrot.slane %v2057, 1
    %v2059 = vmax.f32 %v2057, %v2058
    %v2060 = vsel %vm1702, %v1984, -inf
    %v2061 = vrot.slane %v2060, 4
    %v2062 = vmax.f32 %v2060, %v2061
    %v2063 = vrot.slane %v2062, 2
    %v2064 = vmax.f32 %v2062, %v2063
    %v2065 = vrot.slane %v2064, 1
    %v2066 = vmax.f32 %v2064, %v2065
    %v2067 = vsel %vm1702, %v1985, -inf
    %v2068 = vrot.slane %v2067, 4
    %v2069 = vmax.f32 %v2067, %v2068
    %v2070 = vrot.slane %v2069, 2
    %v2071 = vmax.f32 %v2069, %v2070
    %v2072 = vrot.slane %v2071, 1
    %v2073 = vmax.f32 %v2071, %v2072
    %v2074 = vsel %vm1702, %v1986, -inf
    %v2075 = vrot.slane %v2074, 4
    %v2076 = vmax.f32 %v2074, %v2075
    %v2077 = vrot.slane %v2076, 2
    %v2078 = vmax.f32 %v2076, %v2077
    %v2079 = vrot.slane %v2078, 1
    %v2080 = vmax.f32 %v2078, %v2079
    %v2081 = vsel %vm1702, %v1987, -inf
    %v2082 = vrot.slane %v2081, 4
    %v2083 = vmax.f32 %v2081, %v2082
    %v2084 = vrot.slane %v2083, 2
    %v2085 = vmax.f32 %v2083, %v2084
    %v2086 = vrot.slane %v2085, 1
    %v2087 = vmax.f32 %v2085, %v2086
    %v2088 = vsel %vm1702, %v1988, -inf
    %v2089 = vrot.slane %v2088, 4
    %v2090 = vmax.f32 %v2088, %v2089
    %v2091 = vrot.slane %v2090, 2
    %v2092 = vmax.f32 %v2090, %v2091
    %v2093 = vrot.slane %v2092, 1
    %v2094 = vmax.f32 %v2092, %v2093
    %v2095 = vsel %vm1702, %v1989, -inf
    %v2096 = vrot.slane %v2095, 4
    %v2097 = vmax.f32 %v2095, %v2096
    %v2098 = vrot.slane %v2097, 2
    %v2099 = vmax.f32 %v2097, %v2098
    %v2100 = vrot.slane %v2099, 1
    %v2101 = vmax.f32 %v2099, %v2100
    %v2102 = vsub.f32 %v1974, %v1996
    %v2103 = vsub.f32 %v1975, %v2003
    %v2104 = vsub.f32 %v1976, %v2010
    %v2105 = vsub.f32 %v1977, %v2017
    %v2106 = vsub.f32 %v1978, %v2024
    %v2107 = vsub.f32 %v1979, %v2031
    %v2108 = vsub.f32 %v1980, %v2038
    %v2109 = vsub.f32 %v1981, %v2045
    %v2110 = vsub.f32 %v1982, %v2052
    %v2111 = vsub.f32 %v1983, %v2059
    %v2112 = vsub.f32 %v1984, %v2066
    %v2113 = vsub.f32 %v1985, %v2073
    %v2114 = vsub.f32 %v1986, %v2080
    %v2115 = vsub.f32 %v1987, %v2087
    %v2116 = vsub.f32 %v1988, %v2094
    %v2117 = vsub.f32 %v1989, %v2101
    %v2118 = vmul.f32 %v2102, 1.442695
    %v2119 = vpow.pop %v2118
    %v2120 = vmul.f32 %v2103, 1.442695
    %v2121 = vpow.pop %v2120
    %v2122 = vmul.f32 %v2104, 1.442695
    %v2123 = vpow.pop %v2122
    %v2124 = vmul.f32 %v2105, 1.442695
    %v2125 = vpow.pop %v2124
    %v2126 = vmul.f32 %v2106, 1.442695
    %v2127 = vpow.pop %v2126
    %v2128 = vmul.f32 %v2107, 1.442695
    %v2129 = vpow.pop %v2128
    %v2130 = vmul.f32 %v2108, 1.442695
    %v2131 = vpow.pop %v2130
    %v2132 = vmul.f32 %v2109, 1.442695
    %v2133 = vpow.pop %v2132
    %v2134 = vmul.f32 %v2110, 1.442695
    %v2135 = vpow.pop %v2134
    %v2136 = vmul.f32 %v2111, 1.442695
    %v2137 = vpow.pop %v2136
    %v2138 = vmul.f32 %v2112, 1.442695
    %v2139 = vpow.pop %v2138
    %v2140 = vmul.f32 %v2113, 1.442695
    %v2141 = vpow.pop %v2140
    %v2142 = vmul.f32 %v2114, 1.442695
    %v2143 = vpow.pop %v2142
    %v2144 = vmul.f32 %v2115, 1.442695
    %v2145 = vpow.pop %v2144
    %v2146 = vmul.f32 %v2116, 1.442695
    %v2147 = vpow.pop %v2146
    %v2148 = vmul.f32 %v2117, 1.442695
    %v2149 = vpow.pop %v2148
    %2150 = vrot.lane.b32.xlu0 %v1780, 108
    %v2151 = vpop.permute.xlu0 %2150
    %2152 = vrot.lane.b32.xlu0 %v1785, 108
    %v2153 = vpop.permute.xlu0 %2152
    %v2156 = vmul.f32 %v2119, %v2151
    %v2157 = vmul.f32 %v2121, %v2151
    %v2158 = vmul.f32 %v2123, %v2151
    %v2159 = vmul.f32 %v2125, %v2151
    %v2160 = vmul.f32 %v2127, %v2151
    %v2161 = vmul.f32 %v2129, %v2151
    %v2162 = vmul.f32 %v2131, %v2151
    %v2163 = vmul.f32 %v2133, %v2151
    %v2164 = vmul.f32 %v2135, %v2153
    %v2165 = vmul.f32 %v2137, %v2153
    %v2166 = vmul.f32 %v2139, %v2153
    %v2167 = vmul.f32 %v2141, %v2153
    %v2168 = vmul.f32 %v2143, %v2153
    %v2169 = vmul.f32 %v2145, %v2153
    %v2170 = vmul.f32 %v2147, %v2153
    %v2171 = vmul.f32 %v2149, %v2153
    %v2172 = vsel %vm1702, %v2156, 0.0
    %v2173 = vrot.slane %v2172, 4
    %v2174 = vadd.f32 %v2172, %v2173
    %v2175 = vrot.slane %v2174, 2
    %v2176 = vadd.f32 %v2174, %v2175
    %v2177 = vrot.slane %v2176, 1
    %v2178 = vadd.f32 %v2176, %v2177
    %v2179 = vsel %vm1702, %v2157, 0.0
    %v2180 = vrot.slane %v2179, 4
    %v2181 = vadd.f32 %v2179, %v2180
    %v2182 = vrot.slane %v2181, 2
    %v2183 = vadd.f32 %v2181, %v2182
    %v2184 = vrot.slane %v2183, 1
    %v2185 = vadd.f32 %v2183, %v2184
    %v2186 = vsel %vm1702, %v2158, 0.0
    %v2187 = vrot.slane %v2186, 4
    %v2188 = vadd.f32 %v2186, %v2187
    %v2189 = vrot.slane %v2188, 2
    %v2190 = vadd.f32 %v2188, %v2189
    %v2191 = vrot.slane %v2190, 1
    %v2192 = vadd.f32 %v2190, %v2191
    %v2193 = vsel %vm1702, %v2159, 0.0
    %v2194 = vrot.slane %v2193, 4
    %v2195 = vadd.f32 %v2193, %v2194
    %v2196 = vrot.slane %v2195, 2
    %v2197 = vadd.f32 %v2195, %v2196
    %v2198 = vrot.slane %v2197, 1
    %v2199 = vadd.f32 %v2197, %v2198
    %v2200 = vsel %vm1702, %v2160, 0.0
    %v2201 = vrot.slane %v2200, 4
    %v2202 = vadd.f32 %v2200, %v2201
    %v2203 = vrot.slane %v2202, 2
    %v2204 = vadd.f32 %v2202, %v2203
    %v2205 = vrot.slane %v2204, 1
    %v2206 = vadd.f32 %v2204, %v2205
    %v2207 = vsel %vm1702, %v2161, 0.0
    %v2208 = vrot.slane %v2207, 4
    %v2209 = vadd.f32 %v2207, %v2208
    %v2210 = vrot.slane %v2209, 2
    %v2211 = vadd.f32 %v2209, %v2210
    %v2212 = vrot.slane %v2211, 1
    %v2213 = vadd.f32 %v2211, %v2212
    %v2214 = vsel %vm1702, %v2162, 0.0
    %v2215 = vrot.slane %v2214, 4
    %v2216 = vadd.f32 %v2214, %v2215
    %v2217 = vrot.slane %v2216, 2
    %v2218 = vadd.f32 %v2216, %v2217
    %v2219 = vrot.slane %v2218, 1
    %v2220 = vadd.f32 %v2218, %v2219
    %v2221 = vsel %vm1702, %v2163, 0.0
    %v2222 = vrot.slane %v2221, 4
    %v2223 = vadd.f32 %v2221, %v2222
    %v2224 = vrot.slane %v2223, 2
    %v2225 = vadd.f32 %v2223, %v2224
    %v2226 = vrot.slane %v2225, 1
    %v2227 = vadd.f32 %v2225, %v2226
    %v2228 = vsel %vm1702, %v2164, 0.0
    %v2229 = vrot.slane %v2228, 4
    %v2230 = vadd.f32 %v2228, %v2229
    %v2231 = vrot.slane %v2230, 2
    %v2232 = vadd.f32 %v2230, %v2231
    %v2233 = vrot.slane %v2232, 1
    %v2234 = vadd.f32 %v2232, %v2233
    %v2235 = vsel %vm1702, %v2165, 0.0
    %v2236 = vrot.slane %v2235, 4
    %v2237 = vadd.f32 %v2235, %v2236
    %v2238 = vrot.slane %v2237, 2
    %v2239 = vadd.f32 %v2237, %v2238
    %v2240 = vrot.slane %v2239, 1
    %v2241 = vadd.f32 %v2239, %v2240
    %v2242 = vsel %vm1702, %v2166, 0.0
    %v2243 = vrot.slane %v2242, 4
    %v2244 = vadd.f32 %v2242, %v2243
    %v2245 = vrot.slane %v2244, 2
    %v2246 = vadd.f32 %v2244, %v2245
    %v2247 = vrot.slane %v2246, 1
    %v2248 = vadd.f32 %v2246, %v2247
    %v2249 = vsel %vm1702, %v2167, 0.0
    %v2250 = vrot.slane %v2249, 4
    %v2251 = vadd.f32 %v2249, %v2250
    %v2252 = vrot.slane %v2251, 2
    %v2253 = vadd.f32 %v2251, %v2252
    %v2254 = vrot.slane %v2253, 1
    %v2255 = vadd.f32 %v2253, %v2254
    %v2256 = vsel %vm1702, %v2168, 0.0
    %v2257 = vrot.slane %v2256, 4
    %v2258 = vadd.f32 %v2256, %v2257
    %v2259 = vrot.slane %v2258, 2
    %v2260 = vadd.f32 %v2258, %v2259
    %v2261 = vrot.slane %v2260, 1
    %v2262 = vadd.f32 %v2260, %v2261
    %v2263 = vsel %vm1702, %v2169, 0.0
    %v2264 = vrot.slane %v2263, 4
    %v2265 = vadd.f32 %v2263, %v2264
    %v2266 = vrot.slane %v2265, 2
    %v2267 = vadd.f32 %v2265, %v2266
    %v2268 = vrot.slane %v2267, 1
    %v2269 = vadd.f32 %v2267, %v2268
    %v2270 = vsel %vm1702, %v2170, 0.0
    %v2271 = vrot.slane %v2270, 4
    %v2272 = vadd.f32 %v2270, %v2271
    %v2273 = vrot.slane %v2272, 2
    %v2274 = vadd.f32 %v2272, %v2273
    %v2275 = vrot.slane %v2274, 1
    %v2276 = vadd.f32 %v2274, %v2275
    %v2277 = vsel %vm1702, %v2171, 0.0
    %v2278 = vrot.slane %v2277, 4
    %v2279 = vadd.f32 %v2277, %v2278
    %v2280 = vrot.slane %v2279, 2
    %v2281 = vadd.f32 %v2279, %v2280
    %v2282 = vrot.slane %v2281, 1
    %v2283 = vadd.f32 %v2281, %v2282
    %v2284 = vsel %vm1702, %v2119, 0.0
    %v2285 = vrot.slane %v2284, 4
    %v2286 = vadd.f32 %v2284, %v2285
    %v2287 = vrot.slane %v2286, 2
    %v2288 = vadd.f32 %v2286, %v2287
    %v2289 = vrot.slane %v2288, 1
    %v2290 = vadd.f32 %v2288, %v2289
    %v2291 = vsel %vm1702, %v2121, 0.0
    %v2292 = vrot.slane %v2291, 4
    %v2293 = vadd.f32 %v2291, %v2292
    %v2294 = vrot.slane %v2293, 2
    %v2295 = vadd.f32 %v2293, %v2294
    %v2296 = vrot.slane %v2295, 1
    %v2297 = vadd.f32 %v2295, %v2296
    %v2298 = vsel %vm1702, %v2123, 0.0
    %v2299 = vrot.slane %v2298, 4
    %v2300 = vadd.f32 %v2298, %v2299
    %v2301 = vrot.slane %v2300, 2
    %v2302 = vadd.f32 %v2300, %v2301
    %v2303 = vrot.slane %v2302, 1
    %v2304 = vadd.f32 %v2302, %v2303
    %v2305 = vsel %vm1702, %v2125, 0.0
    %v2306 = vrot.slane %v2305, 4
    %v2307 = vadd.f32 %v2305, %v2306
    %v2308 = vrot.slane %v2307, 2
    %v2309 = vadd.f32 %v2307, %v2308
    %v2310 = vrot.slane %v2309, 1
    %v2311 = vadd.f32 %v2309, %v2310
    %v2312 = vsel %vm1702, %v2127, 0.0
    %v2313 = vrot.slane %v2312, 4
    %v2314 = vadd.f32 %v2312, %v2313
    %v2315 = vrot.slane %v2314, 2
    %v2316 = vadd.f32 %v2314, %v2315
    %v2317 = vrot.slane %v2316, 1
    %v2318 = vadd.f32 %v2316, %v2317
    %v2319 = vsel %vm1702, %v2129, 0.0
    %v2320 = vrot.slane %v2319, 4
    %v2321 = vadd.f32 %v2319, %v2320
    %v2322 = vrot.slane %v2321, 2
    %v2323 = vadd.f32 %v2321, %v2322
    %v2324 = vrot.slane %v2323, 1
    %v2325 = vadd.f32 %v2323, %v2324
    %v2326 = vsel %vm1702, %v2131, 0.0
    %v2327 = vrot.slane %v2326, 4
    %v2328 = vadd.f32 %v2326, %v2327
    %v2329 = vrot.slane %v2328, 2
    %v2330 = vadd.f32 %v2328, %v2329
    %v2331 = vrot.slane %v2330, 1
    %v2332 = vadd.f32 %v2330, %v2331
    %v2333 = vsel %vm1702, %v2133, 0.0
    %v2334 = vrot.slane %v2333, 4
    %v2335 = vadd.f32 %v2333, %v2334
    %v2336 = vrot.slane %v2335, 2
    %v2337 = vadd.f32 %v2335, %v2336
    %v2338 = vrot.slane %v2337, 1
    %v2339 = vadd.f32 %v2337, %v2338
    %v2340 = vsel %vm1702, %v2135, 0.0
    %v2341 = vrot.slane %v2340, 4
    %v2342 = vadd.f32 %v2340, %v2341
    %v2343 = vrot.slane %v2342, 2
    %v2344 = vadd.f32 %v2342, %v2343
    %v2345 = vrot.slane %v2344, 1
    %v2346 = vadd.f32 %v2344, %v2345
    %v2347 = vsel %vm1702, %v2137, 0.0
    %v2348 = vrot.slane %v2347, 4
    %v2349 = vadd.f32 %v2347, %v2348
    %v2350 = vrot.slane %v2349, 2
    %v2351 = vadd.f32 %v2349, %v2350
    %v2352 = vrot.slane %v2351, 1
    %v2353 = vadd.f32 %v2351, %v2352
    %v2354 = vsel %vm1702, %v2139, 0.0
    %v2355 = vrot.slane %v2354, 4
    %v2356 = vadd.f32 %v2354, %v2355
    %v2357 = vrot.slane %v2356, 2
    %v2358 = vadd.f32 %v2356, %v2357
    %v2359 = vrot.slane %v2358, 1
    %v2360 = vadd.f32 %v2358, %v2359
    %v2361 = vsel %vm1702, %v2141, 0.0
    %v2362 = vrot.slane %v2361, 4
    %v2363 = vadd.f32 %v2361, %v2362
    %v2364 = vrot.slane %v2363, 2
    %v2365 = vadd.f32 %v2363, %v2364
    %v2366 = vrot.slane %v2365, 1
    %v2367 = vadd.f32 %v2365, %v2366
    %v2368 = vsel %vm1702, %v2143, 0.0
    %v2369 = vrot.slane %v2368, 4
    %v2370 = vadd.f32 %v2368, %v2369
    %v2371 = vrot.slane %v2370, 2
    %v2372 = vadd.f32 %v2370, %v2371
    %v2373 = vrot.slane %v2372, 1
    %v2374 = vadd.f32 %v2372, %v2373
    %v2375 = vsel %vm1702, %v2145, 0.0
    %v2376 = vrot.slane %v2375, 4
    %v2377 = vadd.f32 %v2375, %v2376
    %v2378 = vrot.slane %v2377, 2
    %v2379 = vadd.f32 %v2377, %v2378
    %v2380 = vrot.slane %v2379, 1
    %v2381 = vadd.f32 %v2379, %v2380
    %v2382 = vsel %vm1702, %v2147, 0.0
    %v2383 = vrot.slane %v2382, 4
    %v2384 = vadd.f32 %v2382, %v2383
    %v2385 = vrot.slane %v2384, 2
    %v2386 = vadd.f32 %v2384, %v2385
    %v2387 = vrot.slane %v2386, 1
    %v2388 = vadd.f32 %v2386, %v2387
    %v2389 = vsel %vm1702, %v2149, 0.0
    %v2390 = vrot.slane %v2389, 4
    %v2391 = vadd.f32 %v2389, %v2390
    %v2392 = vrot.slane %v2391, 2
    %v2393 = vadd.f32 %v2391, %v2392
    %v2394 = vrot.slane %v2393, 1
    %v2395 = vadd.f32 %v2393, %v2394
    %v2396 = vrcp.pop %v2290
    %v2397 = vrcp.pop %v2297
    %v2398 = vrcp.pop %v2304
    %v2399 = vrcp.pop %v2311
    %v2400 = vrcp.pop %v2318
    %v2401 = vrcp.pop %v2325
    %v2402 = vrcp.pop %v2332
    %v2403 = vrcp.pop %v2339
    %v2404 = vrcp.pop %v2346
    %v2405 = vrcp.pop %v2353
    %v2406 = vrcp.pop %v2360
    %v2407 = vrcp.pop %v2367
    %v2408 = vrcp.pop %v2374
    %v2409 = vrcp.pop %v2381
    %v2410 = vrcp.pop %v2388
    %v2411 = vrcp.pop %v2395
    %v2412 = vmul.f32 %v2178, %v2396
    %v2413 = vmul.f32 %v2185, %v2397
    %v2414 = vmul.f32 %v2192, %v2398
    %v2415 = vmul.f32 %v2199, %v2399
    %v2416 = vmul.f32 %v2206, %v2400
    %v2417 = vmul.f32 %v2213, %v2401
    %v2418 = vmul.f32 %v2220, %v2402
    %v2419 = vmul.f32 %v2227, %v2403
    %v2420 = vmul.f32 %v2234, %v2404
    %v2421 = vmul.f32 %v2241, %v2405
    %v2422 = vmul.f32 %v2248, %v2406
    %v2423 = vmul.f32 %v2255, %v2407
    %v2424 = vmul.f32 %v2262, %v2408
    %v2425 = vmul.f32 %v2269, %v2409
    %v2426 = vmul.f32 %v2276, %v2410
    %v2427 = vmul.f32 %v2283, %v2411
    %v2429 = vlaneseq
    %v2430 = vshrl.u32 %v2429, 7
    %v2431 = vsub.s32 0, %v2430
    %v2432 = vrot.slane %v1545, %v2431
    %v2450 = vsel %vm989, %v2413, %v2412
    %v2451 = vsel %vm991, %v2414, %v2450
    %v2452 = vsel %vm993, %v2415, %v2451
    %v2453 = vsel %vm995, %v2416, %v2452
    %v2454 = vsel %vm997, %v2417, %v2453
    %v2455 = vsel %vm999, %v2418, %v2454
    %v2456 = vsel %vm1001, %v2419, %v2455
    %v2457 = vsel %vm989, %v2421, %v2420
    %v2458 = vsel %vm991, %v2422, %v2457
    %v2459 = vsel %vm993, %v2423, %v2458
    %v2460 = vsel %vm995, %v2424, %v2459
    %v2461 = vsel %vm997, %v2425, %v2460
    %v2462 = vsel %vm999, %v2426, %v2461
    %v2463 = vsel %vm1001, %v2427, %v2462
    %v2464 = vsel %vm1702, %v2456, 0
    %v2466 = vsel %vm1702, %v2463, 0
    %v2469 = vsel %vm1709, %v1544, 0
    %2471 = vmatprep.subr.mxu0 0.0
    %2472 = vmatpush1.msra.mxu0 %v1543
    %2473 = vmatprep.subr.mxu0 0.0
    %2474 = vmatpush1.msra.mxu0 %v2469
    %2475 = vmatprep.subr.mxu0 0.0
    %2476 = vmatpush1.msra.mxu0 0.0
    %2477 = vmatprep.subr.mxu0 0.0
    %2478 = vmatpush1.msra.mxu0 0.0
    %2479 = vmatprep.subr.mxu0 0.0
    %2480 = vmatpush1.msra.mxu0 0.0
    %2481 = vmatprep.subr.mxu0 0.0
    %2482 = vmatpush1.msra.mxu0 0.0
    %2483 = vmatprep.subr.mxu0 0.0
    %2484 = vmatpush1.msra.mxu0 0.0
    %2485 = vmatprep.subr.mxu0 0.0
    %2486 = vmatpush1.msra.mxu0 0.0
    %2487 = vmatprep.subr.mxu0 0.0
    %2488 = vmatpush1.msra.mxu0 0.0
    %2489 = vmatprep.subr.mxu0 0.0
    %2490 = vmatpush1.msra.mxu0 0.0
    %2491 = vmatprep.subr.mxu0 0.0
    %2492 = vmatpush1.msra.mxu0 0.0
    %2493 = vmatprep.subr.mxu0 0.0
    %2494 = vmatpush1.msra.mxu0 0.0
    %2495 = vmatprep.subr.mxu0 0.0
    %2496 = vmatpush1.msra.mxu0 0.0
    %2497 = vmatprep.subr.mxu0 0.0
    %2498 = vmatpush1.msra.mxu0 0.0
    %2499 = vmatprep.subr.mxu0 0.0
    %2500 = vmatpush1.msra.mxu0 0.0
    %2501 = vmatprep.subr.mxu0 0.0
    %2502 = vmatpush1.msra.mxu0 0.0
    %2503 = vmatprep.subr.mxu0 0.0
    %2504 = vmatpush1.msra.mxu0 0.0
    %2505 = vmatprep.subr.mxu0 0.0
    %2506 = vmatpush1.msra.mxu0 0.0
    %2507 = vmatprep.subr.mxu0 0.0
    %2508 = vmatpush1.msra.mxu0 0.0
    %2509 = vmatprep.subr.mxu0 0.0
    %2510 = vmatpush1.msra.mxu0 0.0
    %2511 = vmatprep.subr.mxu0 0.0
    %2512 = vmatpush1.msra.mxu0 0.0
    %2513 = vmatprep.subr.mxu0 0.0
    %2514 = vmatpush1.msra.mxu0 0.0
    %2515 = vmatprep.subr.mxu0 0.0
    %2516 = vmatpush1.msra.mxu0 0.0
    %2517 = vmatprep.subr.mxu0 0.0
    %2518 = vmatpush1.msra.mxu0 0.0
    %2519 = vmatprep.subr.mxu0 0.0
    %2520 = vmatpush1.msra.mxu0 0.0
    %2521 = vmatprep.subr.mxu0 0.0
    %2522 = vmatpush1.msra.mxu0 0.0
    %2523 = vmatprep.subr.mxu0 0.0
    %2524 = vmatpush1.msra.mxu0 0.0
    %2525 = vmatprep.subr.mxu0 0.0
    %2526 = vmatpush1.msra.mxu0 0.0
    %2527 = vmatprep.subr.mxu0 0.0
    %2528 = vmatpush1.msra.mxu0 0.0
    %2529 = vmatprep.subr.mxu0 0.0
    %2530 = vmatpush1.msra.mxu0 0.0
    %2531 = vmatprep.subr.mxu0 0.0
    %2532 = vmatpush1.msra.mxu0 0.0
    %2533 = vmatprep.subr.mxu0 0.0
    %2534 = vmatpush1.msra.mxu0 0.0
    %2535 = vmatprep.mubr.f32.mxu0 0.0
    %2536 = vmatmul.mubr.f32.gmra.mrb[0].mxu0 %v2464
    %v2537 = vpop.f32.mrb[0].mxu0
    %v2538 = vadd.f32 %v2432, %v2537
    %v2539 = vpop.f32.mrb[0].mxu0
    %2540 = vmatprep.mubr.f32.mxu0 0.0
    %2541 = vmatmul.mubr.f32.gmra.mrb[0].mxu0 %v2466
    %v2542 = vpop.f32.mrb[0].mxu0
    %v2543 = vadd.f32 %v2432, %v2542
    %v2544 = vpop.f32.mrb[0].mxu0
    %2545 = vdwg.mxu0
    %v2546 = vadd.f32 %v1538, %v2538
    %v2547 = vadd.f32 %v1539, %v2543
    %v2548 = vsel %vm1702, %v2546, 0.0
    %2549 = vadd.xlane.f32.xlu0 %v2548
    %v2550 = vpop.xlane.xlu0 %2549
    %v2551 = vsel %vm1702, %v2547, 0.0
    %2552 = vadd.xlane.f32.xlu0 %v2551
    %v2553 = vpop.xlane.xlu0 %2552
    %v2554 = vrcp.pop 10.0
    %v2555 = vmul.f32 %v2550, %v2554
    %v2556 = vmul.f32 %v2553, %v2554
    %v2557 = vsub.f32 %v2546, %v2555
    %v2558 = vsub.f32 %v2547, %v2556
    %v2559 = vmul.f32 %v2557, %v2557
    %v2560 = vmul.f32 %v2558, %v2558
    %v2561 = vsel %vm1702, %v2559, 0.0
    %2562 = vadd.xlane.f32.xlu0 %v2561
    %v2563 = vpop.xlane.xlu0 %2562
    %v2564 = vsel %vm1702, %v2560, 0.0
    %2565 = vadd.xlane.f32.xlu0 %v2564
    %v2566 = vpop.xlane.xlu0 %2565
    %v2567 = vmul.f32 %v2563, %v2554
    %v2568 = vmul.f32 %v2566, %v2554
    %v2569 = vadd.f32 %v2567, 1e-05
    %v2570 = vadd.f32 %v2568, 1e-05
    %v2571 = vrsqrt.pop %v2569
    %v2572 = vrsqrt.pop %v2570
    %v2573 = vmul.f32 %v2557, %v2571
    %v2574 = vmul.f32 %v2558, %v2572
    %v2576 = vlaneseq
    %v2577 = vshrl.u32 %v2576, 7
    %v2578 = vsub.s32 0, %v2577
    %v2579 = vrot.slane %v1546, %v2578
    %v2581 = vmul.f32 %v2573, %v2579
    %v2582 = vmul.f32 %v2574, %v2579
    %v2584 = vlaneseq
    %v2585 = vshrl.u32 %v2584, 7
    %v2586 = vsub.s32 0, %v2585
    %v2587 = vrot.slane %v1547, %v2586
    %v2589 = vadd.f32 %v2581, %v2587
    %v2590 = vadd.f32 %v2582, %v2587
    %v2592 = vlaneseq
    %v2593 = vshrl.u32 %v2592, 7
    %v2594 = vsub.s32 0, %v2593
    %v2595 = vrot.slane %v1564, %v2594
    %v2596 = vlaneseq
    %v2597 = vshrl.u32 %v2596, 7
    %v2598 = vsub.s32 1, %v2597
    %v2599 = vrot.slane %v1564, %v2598
    %v2600 = vlaneseq
    %v2601 = vshrl.u32 %v2600, 7
    %v2602 = vsub.s32 2, %v2601
    %v2603 = vrot.slane %v1564, %v2602
    %v2604 = vlaneseq
    %v2605 = vshrl.u32 %v2604, 7
    %v2606 = vsub.s32 3, %v2605
    %v2607 = vrot.slane %v1564, %v2606
    %v2608 = vlaneseq
    %v2609 = vshrl.u32 %v2608, 7
    %v2610 = vsub.s32 4, %v2609
    %v2611 = vrot.slane %v1564, %v2610
    %v2612 = vlaneseq
    %v2613 = vshrl.u32 %v2612, 7
    %v2614 = vsub.s32 5, %v2613
    %v2615 = vrot.slane %v1564, %v2614
    %v2616 = vlaneseq
    %v2617 = vshrl.u32 %v2616, 7
    %v2618 = vsub.s32 6, %v2617
    %v2619 = vrot.slane %v1564, %v2618
    %v2620 = vlaneseq
    %v2621 = vshrl.u32 %v2620, 7
    %v2622 = vsub.s32 7, %v2621
    %v2623 = vrot.slane %v1564, %v2622
    %v2633 = vsel %vm1702, %v2589, 0
    %v2636 = vsel %vm1702, %v2590, 0
    %v2639 = vsel %vm1709, %v1556, 0
    %v2642 = vsel %vm1709, %v1557, 0
    %v2645 = vsel %vm1709, %v1558, 0
    %v2648 = vsel %vm1709, %v1559, 0
    %v2651 = vsel %vm1709, %v1560, 0
    %v2654 = vsel %vm1709, %v1561, 0
    %v2657 = vsel %vm1709, %v1562, 0
    %v2660 = vsel %vm1709, %v1563, 0
    %2662 = vmatprep.subr.mxu0 %v1549
    %2663 = vmatpush1.msra.mxu0 %v1548
    %2664 = vmatprep.subr.mxu0 %v2642
    %2665 = vmatpush1.msra.mxu0 %v2639
    %2666 = vmatprep.subr.mxu0 0.0
    %2667 = vmatpush1.msra.mxu0 0.0
    %2668 = vmatprep.subr.mxu0 0.0
    %2669 = vmatpush1.msra.mxu0 0.0
    %2670 = vmatprep.subr.mxu0 0.0
    %2671 = vmatpush1.msra.mxu0 0.0
    %2672 = vmatprep.subr.mxu0 0.0
    %2673 = vmatpush1.msra.mxu0 0.0
    %2674 = vmatprep.subr.mxu0 0.0
    %2675 = vmatpush1.msra.mxu0 0.0
    %2676 = vmatprep.subr.mxu0 0.0
    %2677 = vmatpush1.msra.mxu0 0.0
    %2678 = vmatprep.subr.mxu0 0.0
    %2679 = vmatpush1.msra.mxu0 0.0
    %2680 = vmatprep.subr.mxu0 0.0
    %2681 = vmatpush1.msra.mxu0 0.0
    %2682 = vmatprep.subr.mxu0 0.0
    %2683 = vmatpush1.msra.mxu0 0.0
    %2684 = vmatprep.subr.mxu0 0.0
    %2685 = vmatpush1.msra.mxu0 0.0
    %2686 = vmatprep.subr.mxu0 0.0
    %2687 = vmatpush1.msra.mxu0 0.0
    %2688 = vmatprep.subr.mxu0 0.0
    %2689 = vmatpush1.msra.mxu0 0.0
    %2690 = vmatprep.subr.mxu0 0.0
    %2691 = vmatpush1.msra.mxu0 0.0
    %2692 = vmatprep.subr.mxu0 0.0
    %2693 = vmatpush1.msra.mxu0 0.0
    %2694 = vmatprep.subr.mxu0 0.0
    %2695 = vmatpush1.msra.mxu0 0.0
    %2696 = vmatprep.subr.mxu0 0.0
    %2697 = vmatpush1.msra.mxu0 0.0
    %2698 = vmatprep.subr.mxu0 0.0
    %2699 = vmatpush1.msra.mxu0 0.0
    %2700 = vmatprep.subr.mxu0 0.0
    %2701 = vmatpush1.msra.mxu0 0.0
    %2702 = vmatprep.subr.mxu0 0.0
    %2703 = vmatpush1.msra.mxu0 0.0
    %2704 = vmatprep.subr.mxu0 0.0
    %2705 = vmatpush1.msra.mxu0 0.0
    %2706 = vmatprep.subr.mxu0 0.0
    %2707 = vmatpush1.msra.mxu0 0.0
    %2708 = vmatprep.subr.mxu0 0.0
    %2709 = vmatpush1.msra.mxu0 0.0
    %2710 = vmatprep.subr.mxu0 0.0
    %2711 = vmatpush1.msra.mxu0 0.0
    %2712 = vmatprep.subr.mxu0 0.0
    %2713 = vmatpush1.msra.mxu0 0.0
    %2714 = vmatprep.subr.mxu0 0.0
    %2715 = vmatpush1.msra.mxu0 0.0
    %2716 = vmatprep.subr.mxu0 0.0
    %2717 = vmatpush1.msra.mxu0 0.0
    %2718 = vmatprep.subr.mxu0 0.0
    %2719 = vmatpush1.msra.mxu0 0.0
    %2720 = vmatprep.subr.mxu0 0.0
    %2721 = vmatpush1.msra.mxu0 0.0
    %2722 = vmatprep.subr.mxu0 0.0
    %2723 = vmatpush1.msra.mxu0 0.0
    %2724 = vmatprep.subr.mxu0 0.0
    %2725 = vmatpush1.msra.mxu0 0.0
    %2726 = vmatprep.mubr.f32.mxu0 0.0
    %2727 = vmatmul.mubr.f32.gmra.mrb[0].mxu0 %v2633
    %v2728 = vpop.f32.mrb[0].mxu0
    %v2729 = vadd.f32 %v2595, %v2728
    %v2730 = vpop.f32.mrb[0].mxu0
    %v2731 = vadd.f32 %v2599, %v2730
    %2732 = vmatprep.mubr.f32.mxu0 0.0
    %2733 = vmatmul.mubr.f32.gmra.mrb[0].mxu0 %v2636
    %v2734 = vpop.f32.mrb[0].mxu0
    %v2735 = vadd.f32 %v2595, %v2734
    %v2736 = vpop.f32.mrb[0].mxu0
    %v2737 = vadd.f32 %v2599, %v2736
    %2738 = vdwg.mxu0
    %2739 = vmatprep.subr.mxu0 %v1551
    %2740 = vmatpush1.msra.mxu0 %v1550
    %2741 = vmatprep.subr.mxu0 %v2648
    %2742 = vmatpush1.msra.mxu0 %v2645
    %2743 = vmatprep.subr.mxu0 0.0
    %2744 = vmatpush1.msra.mxu0 0.0
    %2745 = vmatprep.subr.mxu0 0.0
    %2746 = vmatpush1.msra.mxu0 0.0
    %2747 = vmatprep.subr.mxu0 0.0
    %2748 = vmatpush1.msra.mxu0 0.0
    %2749 = vmatprep.subr.mxu0 0.0
    %2750 = vmatpush1.msra.mxu0 0.0
    %2751 = vmatprep.subr.mxu0 0.0
    %2752 = vmatpush1.msra.mxu0 0.0
    %2753 = vmatprep.subr.mxu0 0.0
    %2754 = vmatpush1.msra.mxu0 0.0
    %2755 = vmatprep.subr.mxu0 0.0
    %2756 = vmatpush1.msra.mxu0 0.0
    %2757 = vmatprep.subr.mxu0 0.0
    %2758 = vmatpush1.msra.mxu0 0.0
    %2759 = vmatprep.subr.mxu0 0.0
    %2760 = vmatpush1.msra.mxu0 0.0
    %2761 = vmatprep.subr.mxu0 0.0
    %2762 = vmatpush1.msra.mxu0 0.0
    %2763 = vmatprep.subr.mxu0 0.0
    %2764 = vmatpush1.msra.mxu0 0.0
    %2765 = vmatprep.subr.mxu0 0.0
    %2766 = vmatpush1.msra.mxu0 0.0
    %2767 = vmatprep.subr.mxu0 0.0
    %2768 = vmatpush1.msra.mxu0 0.0
    %2769 = vmatprep.subr.mxu0 0.0
    %2770 = vmatpush1.msra.mxu0 0.0
    %2771 = vmatprep.subr.mxu0 0.0
    %2772 = vmatpush1.msra.mxu0 0.0
    %2773 = vmatprep.subr.mxu0 0.0
    %2774 = vmatpush1.msra.mxu0 0.0
    %2775 = vmatprep.subr.mxu0 0.0
    %2776 = vmatpush1.msra.mxu0 0.0
    %2777 = vmatprep.subr.mxu0 0.0
    %2778 = vmatpush1.msra.mxu0 0.0
    %2779 = vmatprep.subr.mxu0 0.0
    %2780 = vmatpush1.msra.mxu0 0.0
    %2781 = vmatprep.subr.mxu0 0.0
    %2782 = vmatpush1.msra.mxu0 0.0
    %2783 = vmatprep.subr.mxu0 0.0
    %2784 = vmatpush1.msra.mxu0 0.0
    %2785 = vmatprep.subr.mxu0 0.0
    %2786 = vmatpush1.msra.mxu0 0.0
    %2787 = vmatprep.subr.mxu0 0.0
    %2788 = vmatpush1.msra.mxu0 0.0
    %2789 = vmatprep.subr.mxu0 0.0
    %2790 = vmatpush1.msra.mxu0 0.0
    %2791 = vmatprep.subr.mxu0 0.0
    %2792 = vmatpush1.msra.mxu0 0.0
    %2793 = vmatprep.subr.mxu0 0.0
    %2794 = vmatpush1.msra.mxu0 0.0
    %2795 = vmatprep.subr.mxu0 0.0
    %2796 = vmatpush1.msra.mxu0 0.0
    %2797 = vmatprep.subr.mxu0 0.0
    %2798 = vmatpush1.msra.mxu0 0.0
    %2799 = vmatprep.subr.mxu0 0.0
    %2800 = vmatpush1.msra.mxu0 0.0
    %2801 = vmatprep.subr.mxu0 0.0
    %2802 = vmatpush1.msra.mxu0 0.0
    %2803 = vmatprep.mubr.f32.mxu0 0.0
    %2804 = vmatmul.mubr.f32.gmra.mrb[0].mxu0 %v2633
    %v2805 = vpop.f32.mrb[0].mxu0
    %v2806 = vadd.f32 %v2603, %v2805
    %v2807 = vpop.f32.mrb[0].mxu0
    %v2808 = vadd.f32 %v2607, %v2807
    %2809 = vmatprep.mubr.f32.mxu0 0.0
    %2810 = vmatmul.mubr.f32.gmra.mrb[0].mxu0 %v2636
    %v2811 = vpop.f32.mrb[0].mxu0
    %v2812 = vadd.f32 %v2603, %v2811
    %v2813 = vpop.f32.mrb[0].mxu0
    %v2814 = vadd.f32 %v2607, %v2813
    %2815 = vdwg.mxu0
    %2816 = vmatprep.subr.mxu0 %v1553
    %2817 = vmatpush1.msra.mxu0 %v1552
    %2818 = vmatprep.subr.mxu0 %v2654
    %2819 = vmatpush1.msra.mxu0 %v2651
    %2820 = vmatprep.subr.mxu0 0.0
    %2821 = vmatpush1.msra.mxu0 0.0
    %2822 = vmatprep.subr.mxu0 0.0
    %2823 = vmatpush1.msra.mxu0 0.0
    %2824 = vmatprep.subr.mxu0 0.0
    %2825 = vmatpush1.msra.mxu0 0.0
    %2826 = vmatprep.subr.mxu0 0.0
    %2827 = vmatpush1.msra.mxu0 0.0
    %2828 = vmatprep.subr.mxu0 0.0
    %2829 = vmatpush1.msra.mxu0 0.0
    %2830 = vmatprep.subr.mxu0 0.0
    %2831 = vmatpush1.msra.mxu0 0.0
    %2832 = vmatprep.subr.mxu0 0.0
    %2833 = vmatpush1.msra.mxu0 0.0
    %2834 = vmatprep.subr.mxu0 0.0
    %2835 = vmatpush1.msra.mxu0 0.0
    %2836 = vmatprep.subr.mxu0 0.0
    %2837 = vmatpush1.msra.mxu0 0.0
    %2838 = vmatprep.subr.mxu0 0.0
    %2839 = vmatpush1.msra.mxu0 0.0
    %2840 = vmatprep.subr.mxu0 0.0
    %2841 = vmatpush1.msra.mxu0 0.0
    %2842 = vmatprep.subr.mxu0 0.0
    %2843 = vmatpush1.msra.mxu0 0.0
    %2844 = vmatprep.subr.mxu0 0.0
    %2845 = vmatpush1.msra.mxu0 0.0
    %2846 = vmatprep.subr.mxu0 0.0
    %2847 = vmatpush1.msra.mxu0 0.0
    %2848 = vmatprep.subr.mxu0 0.0
    %2849 = vmatpush1.msra.mxu0 0.0
    %2850 = vmatprep.subr.mxu0 0.0
    %2851 = vmatpush1.msra.mxu0 0.0
    %2852 = vmatprep.subr.mxu0 0.0
    %2853 = vmatpush1.msra.mxu0 0.0
    %2854 = vmatprep.subr.mxu0 0.0
    %2855 = vmatpush1.msra.mxu0 0.0
    %2856 = vmatprep.subr.mxu0 0.0
    %2857 = vmatpush1.msra.mxu0 0.0
    %2858 = vmatprep.subr.mxu0 0.0
    %2859 = vmatpush1.msra.mxu0 0.0
    %2860 = vmatprep.subr.mxu0 0.0
    %2861 = vmatpush1.msra.mxu0 0.0
    %2862 = vmatprep.subr.mxu0 0.0
    %2863 = vmatpush1.msra.mxu0 0.0
    %2864 = vmatprep.subr.mxu0 0.0
    %2865 = vmatpush1.msra.mxu0 0.0
    %2866 = vmatprep.subr.mxu0 0.0
    %2867 = vmatpush1.msra.mxu0 0.0
    %2868 = vmatprep.subr.mxu0 0.0
    %2869 = vmatpush1.msra.mxu0 0.0
    %2870 = vmatprep.subr.mxu0 0.0
    %2871 = vmatpush1.msra.mxu0 0.0
    %2872 = vmatprep.subr.mxu0 0.0
    %2873 = vmatpush1.msra.mxu0 0.0
    %2874 = vmatprep.subr.mxu0 0.0
    %2875 = vmatpush1.msra.mxu0 0.0
    %2876 = vmatprep.subr.mxu0 0.0
    %2877 = vmatpush1.msra.mxu0 0.0
    %2878 = vmatprep.subr.mxu0 0.0
    %2879 = vmatpush1.msra.mxu0 0.0
    %2880 = vmatprep.mubr.f32.mxu0 0.0
    %2881 = vmatmul.mubr.f32.gmra.mrb[0].mxu0 %v2633
    %v2882 = vpop.f32.mrb[0].mxu0
    %v2883 = vadd.f32 %v2611, %v2882
    %v2884 = vpop.f32.mrb[0].mxu0
    %v2885 = vadd.f32 %v2615, %v2884
    %2886 = vmatprep.mubr.f32.mxu0 0.0
    %2887 = vmatmul.mubr.f32.gmra.mrb[0].mxu0 %v2636
    %v2888 = vpop.f32.mrb[0].mxu0
    %v2889 = vadd.f32 %v2611, %v2888
    %v2890 = vpop.f32.mrb[0].mxu0
    %v2891 = vadd.f32 %v2615, %v2890
    %2892 = vdwg.mxu0
    %2893 = vmatprep.subr.mxu0 %v1555
    %2894 = vmatpush1.msra.mxu0 %v1554
    %2895 = vmatprep.subr.mxu0 %v2660
    %2896 = vmatpush1.msra.mxu0 %v2657
    %2897 = vmatprep.subr.mxu0 0.0
    %2898 = vmatpush1.msra.mxu0 0.0
    %2899 = vmatprep.subr.mxu0 0.0
    %2900 = vmatpush1.msra.mxu0 0.0
    %2901 = vmatprep.subr.mxu0 0.0
    %2902 = vmatpush1.msra.mxu0 0.0
    %2903 = vmatprep.subr.mxu0 0.0
    %2904 = vmatpush1.msra.mxu0 0.0
    %2905 = vmatprep.subr.mxu0 0.0
    %2906 = vmatpush1.msra.mxu0 0.0
    %2907 = vmatprep.subr.mxu0 0.0
    %2908 = vmatpush1.msra.mxu0 0.0
    %2909 = vmatprep.subr.mxu0 0.0
    %2910 = vmatpush1.msra.mxu0 0.0
    %2911 = vmatprep.subr.mxu0 0.0
    %2912 = vmatpush1.msra.mxu0 0.0
    %2913 = vmatprep.subr.mxu0 0.0
    %2914 = vmatpush1.msra.mxu0 0.0
    %2915 = vmatprep.subr.mxu0 0.0
    %2916 = vmatpush1.msra.mxu0 0.0
    %2917 = vmatprep.subr.mxu0 0.0
    %2918 = vmatpush1.msra.mxu0 0.0
    %2919 = vmatprep.subr.mxu0 0.0
    %2920 = vmatpush1.msra.mxu0 0.0
    %2921 = vmatprep.subr.mxu0 0.0
    %2922 = vmatpush1.msra.mxu0 0.0
    %2923 = vmatprep.subr.mxu0 0.0
    %2924 = vmatpush1.msra.mxu0 0.0
    %2925 = vmatprep.subr.mxu0 0.0
    %2926 = vmatpush1.msra.mxu0 0.0
    %2927 = vmatprep.subr.mxu0 0.0
    %2928 = vmatpush1.msra.mxu0 0.0
    %2929 = vmatprep.subr.mxu0 0.0
    %2930 = vmatpush1.msra.mxu0 0.0
    %2931 = vmatprep.subr.mxu0 0.0
    %2932 = vmatpush1.msra.mxu0 0.0
    %2933 = vmatprep.subr.mxu0 0.0
    %2934 = vmatpush1.msra.mxu0 0.0
    %2935 = vmatprep.subr.mxu0 0.0
    %2936 = vmatpush1.msra.mxu0 0.0
    %2937 = vmatprep.subr.mxu0 0.0
    %2938 = vmatpush1.msra.mxu0 0.0
    %2939 = vmatprep.subr.mxu0 0.0
    %2940 = vmatpush1.msra.mxu0 0.0
    %2941 = vmatprep.subr.mxu0 0.0
    %2942 = vmatpush1.msra.mxu0 0.0
    %2943 = vmatprep.subr.mxu0 0.0
    %2944 = vmatpush1.msra.mxu0 0.0
    %2945 = vmatprep.subr.mxu0 0.0
    %2946 = vmatpush1.msra.mxu0 0.0
    %2947 = vmatprep.subr.mxu0 0.0
    %2948 = vmatpush1.msra.mxu0 0.0
    %2949 = vmatprep.subr.mxu0 0.0
    %2950 = vmatpush1.msra.mxu0 0.0
    %2951 = vmatprep.subr.mxu0 0.0
    %2952 = vmatpush1.msra.mxu0 0.0
    %2953 = vmatprep.subr.mxu0 0.0
    %2954 = vmatpush1.msra.mxu0 0.0
    %2955 = vmatprep.subr.mxu0 0.0
    %2956 = vmatpush1.msra.mxu0 0.0
    %2957 = vmatprep.mubr.f32.mxu0 0.0
    %2958 = vmatmul.mubr.f32.gmra.mrb[0].mxu0 %v2633
    %v2959 = vpop.f32.mrb[0].mxu0
    %v2960 = vadd.f32 %v2619, %v2959
    %v2961 = vpop.f32.mrb[0].mxu0
    %v2962 = vadd.f32 %v2623, %v2961
    %2963 = vmatprep.mubr.f32.mxu0 0.0
    %2964 = vmatmul.mubr.f32.gmra.mrb[0].mxu0 %v2636
    %v2965 = vpop.f32.mrb[0].mxu0
    %v2966 = vadd.f32 %v2619, %v2965
    %v2967 = vpop.f32.mrb[0].mxu0
    %v2968 = vadd.f32 %v2623, %v2967
    %2969 = vdwg.mxu0
    %v2970 = vmax.f32 %v2729, 0.0
    %v2971 = vmax.f32 %v2731, 0.0
    %v2972 = vmax.f32 %v2806, 0.0
    %v2973 = vmax.f32 %v2808, 0.0
    %v2974 = vmax.f32 %v2883, 0.0
    %v2975 = vmax.f32 %v2885, 0.0
    %v2976 = vmax.f32 %v2960, 0.0
    %v2977 = vmax.f32 %v2962, 0.0
    %v2978 = vmax.f32 %v2735, 0.0
    %v2979 = vmax.f32 %v2737, 0.0
    %v2980 = vmax.f32 %v2812, 0.0
    %v2981 = vmax.f32 %v2814, 0.0
    %v2982 = vmax.f32 %v2889, 0.0
    %v2983 = vmax.f32 %v2891, 0.0
    %v2984 = vmax.f32 %v2966, 0.0
    %v2985 = vmax.f32 %v2968, 0.0
    %v2987 = vlaneseq
    %v2988 = vshrl.u32 %v2987, 7
    %v2989 = vsub.s32 0, %v2988
    %v2990 = vrot.slane %v1693, %v2989
    %2992 = vmatprep.subr.mxu0 0.0
    %2993 = vmatpush1.msra.mxu0 %v1565
    %2994 = vmatprep.subr.mxu0 0.0
    %2995 = vmatpush1.msra.mxu0 %v1566
    %2996 = vmatprep.subr.mxu0 0.0
    %2997 = vmatpush1.msra.mxu0 %v1567
    %2998 = vmatprep.subr.mxu0 0.0
    %2999 = vmatpush1.msra.mxu0 %v1568
    %3000 = vmatprep.subr.mxu0 0.0
    %3001 = vmatpush1.msra.mxu0 %v1569
    %3002 = vmatprep.subr.mxu0 0.0
    %3003 = vmatpush1.msra.mxu0 %v1570
    %3004 = vmatprep.subr.mxu0 0.0
    %3005 = vmatpush1.msra.mxu0 %v1571
    %3006 = vmatprep.subr.mxu0 0.0
    %3007 = vmatpush1.msra.mxu0 %v1572
    %3008 = vmatprep.subr.mxu0 0.0
    %3009 = vmatpush1.msra.mxu0 %v1573
    %3010 = vmatprep.subr.mxu0 0.0
    %3011 = vmatpush1.msra.mxu0 %v1574
    %3012 = vmatprep.subr.mxu0 0.0
    %3013 = vmatpush1.msra.mxu0 %v1575
    %3014 = vmatprep.subr.mxu0 0.0
    %3015 = vmatpush1.msra.mxu0 %v1576
    %3016 = vmatprep.subr.mxu0 0.0
    %3017 = vmatpush1.msra.mxu0 %v1577
    %3018 = vmatprep.subr.mxu0 0.0
    %3019 = vmatpush1.msra.mxu0 %v1578
    %3020 = vmatprep.subr.mxu0 0.0
    %3021 = vmatpush1.msra.mxu0 %v1579
    %3022 = vmatprep.subr.mxu0 0.0
    %3023 = vmatpush1.msra.mxu0 %v1580
    %3024 = vmatprep.subr.mxu0 0.0
    %3025 = vmatpush1.msra.mxu0 %v1581
    %3026 = vmatprep.subr.mxu0 0.0
    %3027 = vmatpush1.msra.mxu0 %v1582
    %3028 = vmatprep.subr.mxu0 0.0
    %3029 = vmatpush1.msra.mxu0 %v1583
    %3030 = vmatprep.subr.mxu0 0.0
    %3031 = vmatpush1.msra.mxu0 %v1584
    %3032 = vmatprep.subr.mxu0 0.0
    %3033 = vmatpush1.msra.mxu0 %v1585
    %3034 = vmatprep.subr.mxu0 0.0
    %3035 = vmatpush1.msra.mxu0 %v1586
    %3036 = vmatprep.subr.mxu0 0.0
    %3037 = vmatpush1.msra.mxu0 %v1587
    %3038 = vmatprep.subr.mxu0 0.0
    %3039 = vmatpush1.msra.mxu0 %v1588
    %3040 = vmatprep.subr.mxu0 0.0
    %3041 = vmatpush1.msra.mxu0 %v1589
    %3042 = vmatprep.subr.mxu0 0.0
    %3043 = vmatpush1.msra.mxu0 %v1590
    %3044 = vmatprep.subr.mxu0 0.0
    %3045 = vmatpush1.msra.mxu0 %v1591
    %3046 = vmatprep.subr.mxu0 0.0
    %3047 = vmatpush1.msra.mxu0 %v1592
    %3048 = vmatprep.subr.mxu0 0.0
    %3049 = vmatpush1.msra.mxu0 %v1593
    %3050 = vmatprep.subr.mxu0 0.0
    %3051 = vmatpush1.msra.mxu0 %v1594
    %3052 = vmatprep.subr.mxu0 0.0
    %3053 = vmatpush1.msra.mxu0 %v1595
    %3054 = vmatprep.subr.mxu0 0.0
    %3055 = vmatpush1.msra.mxu0 %v1596
    %3056 = vmatprep.mubr.f32.mxu0 %v2971
    %3057 = vmatmul.mubr.f32.gmra.mrb[0].mxu0 %v2970
    %v3058 = vpop.f32.mrb[0].mxu0
    %v3059 = vadd.f32 %v2990, %v3058
    %v3060 = vpop.f32.mrb[0].mxu0
    %3061 = vmatprep.mubr.f32.mxu0 %v2979
    %3062 = vmatmul.mubr.f32.gmra.mrb[0].mxu0 %v2978
    %v3063 = vpop.f32.mrb[0].mxu0
    %v3064 = vadd.f32 %v2990, %v3063
    %v3065 = vpop.f32.mrb[0].mxu0
    %3066 = vdwg.mxu0
    %3067 = vmatprep.subr.mxu0 0.0
    %3068 = vmatpush1.msra.mxu0 %v1597
    %3069 = vmatprep.subr.mxu0 0.0
    %3070 = vmatpush1.msra.mxu0 %v1598
    %3071 = vmatprep.subr.mxu0 0.0
    %3072 = vmatpush1.msra.mxu0 %v1599
    %3073 = vmatprep.subr.mxu0 0.0
    %3074 = vmatpush1.msra.mxu0 %v1600
    %3075 = vmatprep.subr.mxu0 0.0
    %3076 = vmatpush1.msra.mxu0 %v1601
    %3077 = vmatprep.subr.mxu0 0.0
    %3078 = vmatpush1.msra.mxu0 %v1602
    %3079 = vmatprep.subr.mxu0 0.0
    %3080 = vmatpush1.msra.mxu0 %v1603
    %3081 = vmatprep.subr.mxu0 0.0
    %3082 = vmatpush1.msra.mxu0 %v1604
    %3083 = vmatprep.subr.mxu0 0.0
    %3084 = vmatpush1.msra.mxu0 %v1605
    %3085 = vmatprep.subr.mxu0 0.0
    %3086 = vmatpush1.msra.mxu0 %v1606
    %3087 = vmatprep.subr.mxu0 0.0
    %3088 = vmatpush1.msra.mxu0 %v1607
    %3089 = vmatprep.subr.mxu0 0.0
    %3090 = vmatpush1.msra.mxu0 %v1608
    %3091 = vmatprep.subr.mxu0 0.0
    %3092 = vmatpush1.msra.mxu0 %v1609
    %3093 = vmatprep.subr.mxu0 0.0
    %3094 = vmatpush1.msra.mxu0 %v1610
    %3095 = vmatprep.subr.mxu0 0.0
    %3096 = vmatpush1.msra.mxu0 %v1611
    %3097 = vmatprep.subr.mxu0 0.0
    %3098 = vmatpush1.msra.mxu0 %v1612
    %3099 = vmatprep.subr.mxu0 0.0
    %3100 = vmatpush1.msra.mxu0 %v1613
    %3101 = vmatprep.subr.mxu0 0.0
    %3102 = vmatpush1.msra.mxu0 %v1614
    %3103 = vmatprep.subr.mxu0 0.0
    %3104 = vmatpush1.msra.mxu0 %v1615
    %3105 = vmatprep.subr.mxu0 0.0
    %3106 = vmatpush1.msra.mxu0 %v1616
    %3107 = vmatprep.subr.mxu0 0.0
    %3108 = vmatpush1.msra.mxu0 %v1617
    %3109 = vmatprep.subr.mxu0 0.0
    %3110 = vmatpush1.msra.mxu0 %v1618
    %3111 = vmatprep.subr.mxu0 0.0
    %3112 = vmatpush1.msra.mxu0 %v1619
    %3113 = vmatprep.subr.mxu0 0.0
    %3114 = vmatpush1.msra.mxu0 %v1620
    %3115 = vmatprep.subr.mxu0 0.0
    %3116 = vmatpush1.msra.mxu0 %v1621
    %3117 = vmatprep.subr.mxu0 0.0
    %3118 = vmatpush1.msra.mxu0 %v1622
    %3119 = vmatprep.subr.mxu0 0.0
    %3120 = vmatpush1.msra.mxu0 %v1623
    %3121 = vmatprep.subr.mxu0 0.0
    %3122 = vmatpush1.msra.mxu0 %v1624
    %3123 = vmatprep.subr.mxu0 0.0
    %3124 = vmatpush1.msra.mxu0 %v1625
    %3125 = vmatprep.subr.mxu0 0.0
    %3126 = vmatpush1.msra.mxu0 %v1626
    %3127 = vmatprep.subr.mxu0 0.0
    %3128 = vmatpush1.msra.mxu0 %v1627
    %3129 = vmatprep.subr.mxu0 0.0
    %3130 = vmatpush1.msra.mxu0 %v1628
    %3131 = vmatprep.mubr.f32.mxu0 %v2973
    %3132 = vmatmul.mubr.f32.gmra.mrb[0].mxu0 %v2972
    %v3133 = vpop.f32.mrb[0].mxu0
    %v3134 = vadd.f32 %v3059, %v3133
    %v3135 = vpop.f32.mrb[0].mxu0
    %3136 = vmatprep.mubr.f32.mxu0 %v2981
    %3137 = vmatmul.mubr.f32.gmra.mrb[0].mxu0 %v2980
    %v3138 = vpop.f32.mrb[0].mxu0
    %v3139 = vadd.f32 %v3064, %v3138
    %v3140 = vpop.f32.mrb[0].mxu0
    %3141 = vdwg.mxu0
    %3142 = vmatprep.subr.mxu0 0.0
    %3143 = vmatpush1.msra.mxu0 %v1629
    %3144 = vmatprep.subr.mxu0 0.0
    %3145 = vmatpush1.msra.mxu0 %v1630
    %3146 = vmatprep.subr.mxu0 0.0
    %3147 = vmatpush1.msra.mxu0 %v1631
    %3148 = vmatprep.subr.mxu0 0.0
    %3149 = vmatpush1.msra.mxu0 %v1632
    %3150 = vmatprep.subr.mxu0 0.0
    %3151 = vmatpush1.msra.mxu0 %v1633
    %3152 = vmatprep.subr.mxu0 0.0
    %3153 = vmatpush1.msra.mxu0 %v1634
    %3154 = vmatprep.subr.mxu0 0.0
    %3155 = vmatpush1.msra.mxu0 %v1635
    %3156 = vmatprep.subr.mxu0 0.0
    %3157 = vmatpush1.msra.mxu0 %v1636
    %3158 = vmatprep.subr.mxu0 0.0
    %3159 = vmatpush1.msra.mxu0 %v1637
    %3160 = vmatprep.subr.mxu0 0.0
    %3161 = vmatpush1.msra.mxu0 %v1638
    %3162 = vmatprep.subr.mxu0 0.0
    %3163 = vmatpush1.msra.mxu0 %v1639
    %3164 = vmatprep.subr.mxu0 0.0
    %3165 = vmatpush1.msra.mxu0 %v1640
    %3166 = vmatprep.subr.mxu0 0.0
    %3167 = vmatpush1.msra.mxu0 %v1641
    %3168 = vmatprep.subr.mxu0 0.0
    %3169 = vmatpush1.msra.mxu0 %v1642
    %3170 = vmatprep.subr.mxu0 0.0
    %3171 = vmatpush1.msra.mxu0 %v1643
    %3172 = vmatprep.subr.mxu0 0.0
    %3173 = vmatpush1.msra.mxu0 %v1644
    %3174 = vmatprep.subr.mxu0 0.0
    %3175 = vmatpush1.msra.mxu0 %v1645
    %3176 = vmatprep.subr.mxu0 0.0
    %3177 = vmatpush1.msra.mxu0 %v1646
    %3178 = vmatprep.subr.mxu0 0.0
    %3179 = vmatpush1.msra.mxu0 %v1647
    %3180 = vmatprep.subr.mxu0 0.0
    %3181 = vmatpush1.msra.mxu0 %v1648
    %3182 = vmatprep.subr.mxu0 0.0
    %3183 = vmatpush1.msra.mxu0 %v1649
    %3184 = vmatprep.subr.mxu0 0.0
    %3185 = vmatpush1.msra.mxu0 %v1650
    %3186 = vmatprep.subr.mxu0 0.0
    %3187 = vmatpush1.msra.mxu0 %v1651
    %3188 = vmatprep.subr.mxu0 0.0
    %3189 = vmatpush1.msra.mxu0 %v1652
    %3190 = vmatprep.subr.mxu0 0.0
    %3191 = vmatpush1.msra.mxu0 %v1653
    %3192 = vmatprep.subr.mxu0 0.0
    %3193 = vmatpush1.msra.mxu0 %v1654
    %3194 = vmatprep.subr.mxu0 0.0
    %3195 = vmatpush1.msra.mxu0 %v1655
    %3196 = vmatprep.subr.mxu0 0.0
    %3197 = vmatpush1.msra.mxu0 %v1656
    %3198 = vmatprep.subr.mxu0 0.0
    %3199 = vmatpush1.msra.mxu0 %v1657
    %3200 = vmatprep.subr.mxu0 0.0
    %3201 = vmatpush1.msra.mxu0 %v1658
    %3202 = vmatprep.subr.mxu0 0.0
    %3203 = vmatpush1.msra.mxu0 %v1659
    %3204 = vmatprep.subr.mxu0 0.0
    %3205 = vmatpush1.msra.mxu0 %v1660
    %3206 = vmatprep.mubr.f32.mxu0 %v2975
    %3207 = vmatmul.mubr.f32.gmra.mrb[0].mxu0 %v2974
    %v3208 = vpop.f32.mrb[0].mxu0
    %v3209 = vadd.f32 %v3134, %v3208
    %v3210 = vpop.f32.mrb[0].mxu0
    %3211 = vmatprep.mubr.f32.mxu0 %v2983
    %3212 = vmatmul.mubr.f32.gmra.mrb[0].mxu0 %v2982
    %v3213 = vpop.f32.mrb[0].mxu0
    %v3214 = vadd.f32 %v3139, %v3213
    %v3215 = vpop.f32.mrb[0].mxu0
    %3216 = vdwg.mxu0
    %3217 = vmatprep.subr.mxu0 0.0
    %3218 = vmatpush1.msra.mxu0 %v1661
    %3219 = vmatprep.subr.mxu0 0.0
    %3220 = vmatpush1.msra.mxu0 %v1662
    %3221 = vmatprep.subr.mxu0 0.0
    %3222 = vmatpush1.msra.mxu0 %v1663
    %3223 = vmatprep.subr.mxu0 0.0
    %3224 = vmatpush1.msra.mxu0 %v1664
    %3225 = vmatprep.subr.mxu0 0.0
    %3226 = vmatpush1.msra.mxu0 %v1665
    %3227 = vmatprep.subr.mxu0 0.0
    %3228 = vmatpush1.msra.mxu0 %v1666
    %3229 = vmatprep.subr.mxu0 0.0
    %3230 = vmatpush1.msra.mxu0 %v1667
    %3231 = vmatprep.subr.mxu0 0.0
    %3232 = vmatpush1.msra.mxu0 %v1668
    %3233 = vmatprep.subr.mxu0 0.0
    %3234 = vmatpush1.msra.mxu0 %v1669
    %3235 = vmatprep.subr.mxu0 0.0
    %3236 = vmatpush1.msra.mxu0 %v1670
    %3237 = vmatprep.subr.mxu0 0.0
    %3238 = vmatpush1.msra.mxu0 %v1671
    %3239 = vmatprep.subr.mxu0 0.0
    %3240 = vmatpush1.msra.mxu0 %v1672
    %3241 = vmatprep.subr.mxu0 0.0
    %3242 = vmatpush1.msra.mxu0 %v1673
    %3243 = vmatprep.subr.mxu0 0.0
    %3244 = vmatpush1.msra.mxu0 %v1674
    %3245 = vmatprep.subr.mxu0 0.0
    %3246 = vmatpush1.msra.mxu0 %v1675
    %3247 = vmatprep.subr.mxu0 0.0
    %3248 = vmatpush1.msra.mxu0 %v1676
    %3249 = vmatprep.subr.mxu0 0.0
    %3250 = vmatpush1.msra.mxu0 %v1677
    %3251 = vmatprep.subr.mxu0 0.0
    %3252 = vmatpush1.msra.mxu0 %v1678
    %3253 = vmatprep.subr.mxu0 0.0
    %3254 = vmatpush1.msra.mxu0 %v1679
    %3255 = vmatprep.subr.mxu0 0.0
    %3256 = vmatpush1.msra.mxu0 %v1680
    %3257 = vmatprep.subr.mxu0 0.0
    %3258 = vmatpush1.msra.mxu0 %v1681
    %3259 = vmatprep.subr.mxu0 0.0
    %3260 = vmatpush1.msra.mxu0 %v1682
    %3261 = vmatprep.subr.mxu0 0.0
    %3262 = vmatpush1.msra.mxu0 %v1683
    %3263 = vmatprep.subr.mxu0 0.0
    %3264 = vmatpush1.msra.mxu0 %v1684
    %3265 = vmatprep.subr.mxu0 0.0
    %3266 = vmatpush1.msra.mxu0 %v1685
    %3267 = vmatprep.subr.mxu0 0.0
    %3268 = vmatpush1.msra.mxu0 %v1686
    %3269 = vmatprep.subr.mxu0 0.0
    %3270 = vmatpush1.msra.mxu0 %v1687
    %3271 = vmatprep.subr.mxu0 0.0
    %3272 = vmatpush1.msra.mxu0 %v1688
    %3273 = vmatprep.subr.mxu0 0.0
    %3274 = vmatpush1.msra.mxu0 %v1689
    %3275 = vmatprep.subr.mxu0 0.0
    %3276 = vmatpush1.msra.mxu0 %v1690
    %3277 = vmatprep.subr.mxu0 0.0
    %3278 = vmatpush1.msra.mxu0 %v1691
    %3279 = vmatprep.subr.mxu0 0.0
    %3280 = vmatpush1.msra.mxu0 %v1692
    %3281 = vmatprep.mubr.f32.mxu0 %v2977
    %3282 = vmatmul.mubr.f32.gmra.mrb[0].mxu0 %v2976
    %v3283 = vpop.f32.mrb[0].mxu0
    %v3284 = vadd.f32 %v3209, %v3283
    %v3285 = vpop.f32.mrb[0].mxu0
    %3286 = vmatprep.mubr.f32.mxu0 %v2985
    %3287 = vmatmul.mubr.f32.gmra.mrb[0].mxu0 %v2984
    %v3288 = vpop.f32.mrb[0].mxu0
    %v3289 = vadd.f32 %v3214, %v3288
    %v3290 = vpop.f32.mrb[0].mxu0
    %3291 = vdwg.mxu0
    %v3292 = vadd.f32 %v2589, %v3284
    %v3293 = vadd.f32 %v2590, %v3289
    %v3294 = vsel %vm1702, %v3292, 0.0
    %3295 = vadd.xlane.f32.xlu0 %v3294
    %v3296 = vpop.xlane.xlu0 %3295
    %v3297 = vsel %vm1702, %v3293, 0.0
    %3298 = vadd.xlane.f32.xlu0 %v3297
    %v3299 = vpop.xlane.xlu0 %3298
    %v3300 = vmul.f32 %v3296, %v2554
    %v3301 = vmul.f32 %v3299, %v2554
    %v3302 = vsub.f32 %v3292, %v3300
    %v3303 = vsub.f32 %v3293, %v3301
    %v3304 = vmul.f32 %v3302, %v3302
    %v3305 = vmul.f32 %v3303, %v3303
    %v3306 = vsel %vm1702, %v3304, 0.0
    %3307 = vadd.xlane.f32.xlu0 %v3306
    %v3308 = vpop.xlane.xlu0 %3307
    %v3309 = vsel %vm1702, %v3305, 0.0
    %3310 = vadd.xlane.f32.xlu0 %v3309
    %v3311 = vpop.xlane.xlu0 %3310
    %v3312 = vmul.f32 %v3308, %v2554
    %v3313 = vmul.f32 %v3311, %v2554
    %v3314 = vadd.f32 %v3312, 1e-05
    %v3315 = vadd.f32 %v3313, 1e-05
    %v3316 = vrsqrt.pop %v3314
    %v3317 = vrsqrt.pop %v3315
    %v3318 = vmul.f32 %v3302, %v3316
    %v3319 = vmul.f32 %v3303, %v3317
    %v3321 = vlaneseq
    %v3322 = vshrl.u32 %v3321, 7
    %v3323 = vsub.s32 0, %v3322
    %v3324 = vrot.slane %v1694, %v3323
    %v3326 = vmul.f32 %v3318, %v3324
    %v3327 = vmul.f32 %v3319, %v3324
    %v3329 = vlaneseq
    %v3330 = vshrl.u32 %v3329, 7
    %v3331 = vsub.s32 0, %v3330
    %v3332 = vrot.slane %v1695, %v3331
    %v3334 = vadd.f32 %v3326, %v3332
    %v3335 = vadd.f32 %v3327, %v3332
    %v3338 = vrot.slane %v1537, 7
    %vm3341 = vcmask 56327
    %3342 = vst.msk [vmem:[#allocation3 - $0x7] sm:$0x80] %vm3341, %v1536
    %vm3343 = vcmask 49152
    %3344 = vst.msk [vmem:[#allocation3 + $0x1] sm:$0x1] %vm3343, %v3338
    %v3347 = vrot.slane %v3335, 7
    %vm3350 = vcmask 80903
    %3351 = vst.msk [vmem:[#allocation5 - $0x7] sm:$0x80] %vm3350, %v3334
    %vm3352 = vcmask 73728
    %3353 = vst.msk [vmem:[#allocation5 + $0x1] sm:$0x1] %vm3352, %v3347
    %v3354 = vld [vmem:[%s53] sm:$0x7f]
    %v3355 = vld [vmem:[%s55] sm:$0xff]
    %v3356 = vld [vmem:[%s55 + $0x8] sm:$0x3]
    %v3357 = vrot.slane %v3334, 7
    %v3358 = vrot.slane %v3335, 6
    %v3359 = vsel %vm989, %v3358, %v3357
    %v3360 = vsel %vm1702, %v3359, 0
    %v3363 = vsel %vm1709, %v3356, 0
    %3365 = vmatprep.subr.mxu0 0.0
    %3366 = vmatpush1.msra.mxu0 %v3355
    %3367 = vmatprep.subr.mxu0 0.0
    %3368 = vmatpush1.msra.mxu0 %v3363
    %3369 = vmatprep.subr.mxu0 0.0
    %3370 = vmatpush1.msra.mxu0 0.0
    %3371 = vmatprep.subr.mxu0 0.0
    %3372 = vmatpush1.msra.mxu0 0.0
    %3373 = vmatprep.subr.mxu0 0.0
    %3374 = vmatpush1.msra.mxu0 0.0
    %3375 = vmatprep.subr.mxu0 0.0
    %3376 = vmatpush1.msra.mxu0 0.0
    %3377 = vmatprep.subr.mxu0 0.0
    %3378 = vmatpush1.msra.mxu0 0.0
    %3379 = vmatprep.subr.mxu0 0.0
    %3380 = vmatpush1.msra.mxu0 0.0
    %3381 = vmatprep.subr.mxu0 0.0
    %3382 = vmatpush1.msra.mxu0 0.0
    %3383 = vmatprep.subr.mxu0 0.0
    %3384 = vmatpush1.msra.mxu0 0.0
    %3385 = vmatprep.subr.mxu0 0.0
    %3386 = vmatpush1.msra.mxu0 0.0
    %3387 = vmatprep.subr.mxu0 0.0
    %3388 = vmatpush1.msra.mxu0 0.0
    %3389 = vmatprep.subr.mxu0 0.0
    %3390 = vmatpush1.msra.mxu0 0.0
    %3391 = vmatprep.subr.mxu0 0.0
    %3392 = vmatpush1.msra.mxu0 0.0
    %3393 = vmatprep.subr.mxu0 0.0
    %3394 = vmatpush1.msra.mxu0 0.0
    %3395 = vmatprep.subr.mxu0 0.0
    %3396 = vmatpush1.msra.mxu0 0.0
    %3397 = vmatprep.subr.mxu0 0.0
    %3398 = vmatpush1.msra.mxu0 0.0
    %3399 = vmatprep.subr.mxu0 0.0
    %3400 = vmatpush1.msra.mxu0 0.0
    %3401 = vmatprep.subr.mxu0 0.0
    %3402 = vmatpush1.msra.mxu0 0.0
    %3403 = vmatprep.subr.mxu0 0.0
    %3404 = vmatpush1.msra.mxu0 0.0
    %3405 = vmatprep.subr.mxu0 0.0
    %3406 = vmatpush1.msra.mxu0 0.0
    %3407 = vmatprep.subr.mxu0 0.0
    %3408 = vmatpush1.msra.mxu0 0.0
    %3409 = vmatprep.subr.mxu0 0.0
    %3410 = vmatpush1.msra.mxu0 0.0
    %3411 = vmatprep.subr.mxu0 0.0
    %3412 = vmatpush1.msra.mxu0 0.0
    %3413 = vmatprep.subr.mxu0 0.0
    %3414 = vmatpush1.msra.mxu0 0.0
    %3415 = vmatprep.subr.mxu0 0.0
    %3416 = vmatpush1.msra.mxu0 0.0
    %3417 = vmatprep.subr.mxu0 0.0
    %3418 = vmatpush1.msra.mxu0 0.0
    %3419 = vmatprep.subr.mxu0 0.0
    %3420 = vmatpush1.msra.mxu0 0.0
    %3421 = vmatprep.subr.mxu0 0.0
    %3422 = vmatpush1.msra.mxu0 0.0
    %3423 = vmatprep.subr.mxu0 0.0
    %3424 = vmatpush1.msra.mxu0 0.0
    %3425 = vmatprep.subr.mxu0 0.0
    %3426 = vmatpush1.msra.mxu0 0.0
    %3427 = vmatprep.subr.mxu0 0.0
    %3428 = vmatpush1.msra.mxu0 0.0
    %3429 = vmatprep.mubr.f32.mxu0 0.0
    %3430 = vmatmul.mubr.f32.gmra.mrb[0].mxu0 %v3360
    %v3431 = vpop.f32.mrb[0].mxu0
    %v3432 = vadd.f32 0.0, %v3431
    %v3433 = vpop.f32.mrb[0].mxu0
    %3434 = vdwg.mxu0
    %v3435 = vrot.slane %v1536, 7
    %v3436 = vrot.slane %v1537, 6
    %v3437 = vsel %vm989, %v3436, %v3435
    %v3438 = vsel %vm241, %v3437, 0
    %v3441 = vsel %vm248, %v3354, 0
    %3443 = vmatprep.subr.mxu0 0.0
    %3444 = vmatpush1.msra.mxu0 %v3441
    %3445 = vmatprep.subr.mxu0 0.0
    %3446 = vmatpush1.msra.mxu0 0.0
    %3447 = vmatprep.subr.mxu0 0.0
    %3448 = vmatpush1.msra.mxu0 0.0
    %3449 = vmatprep.subr.mxu0 0.0
    %3450 = vmatpush1.msra.mxu0 0.0
    %3451 = vmatprep.subr.mxu0 0.0
    %3452 = vmatpush1.msra.mxu0 0.0
    %3453 = vmatprep.subr.mxu0 0.0
    %3454 = vmatpush1.msra.mxu0 0.0
    %3455 = vmatprep.subr.mxu0 0.0
    %3456 = vmatpush1.msra.mxu0 0.0
    %3457 = vmatprep.subr.mxu0 0.0
    %3458 = vmatpush1.msra.mxu0 0.0
    %3459 = vmatprep.subr.mxu0 0.0
    %3460 = vmatpush1.msra.mxu0 0.0
    %3461 = vmatprep.subr.mxu0 0.0
    %3462 = vmatpush1.msra.mxu0 0.0
    %3463 = vmatprep.subr.mxu0 0.0
    %3464 = vmatpush1.msra.mxu0 0.0
    %3465 = vmatprep.subr.mxu0 0.0
    %3466 = vmatpush1.msra.mxu0 0.0
    %3467 = vmatprep.subr.mxu0 0.0
    %3468 = vmatpush1.msra.mxu0 0.0
    %3469 = vmatprep.subr.mxu0 0.0
    %3470 = vmatpush1.msra.mxu0 0.0
    %3471 = vmatprep.subr.mxu0 0.0
    %3472 = vmatpush1.msra.mxu0 0.0
    %3473 = vmatprep.subr.mxu0 0.0
    %3474 = vmatpush1.msra.mxu0 0.0
    %3475 = vmatprep.subr.mxu0 0.0
    %3476 = vmatpush1.msra.mxu0 0.0
    %3477 = vmatprep.subr.mxu0 0.0
    %3478 = vmatpush1.msra.mxu0 0.0
    %3479 = vmatprep.subr.mxu0 0.0
    %3480 = vmatpush1.msra.mxu0 0.0
    %3481 = vmatprep.subr.mxu0 0.0
    %3482 = vmatpush1.msra.mxu0 0.0
    %3483 = vmatprep.subr.mxu0 0.0
    %3484 = vmatpush1.msra.mxu0 0.0
    %3485 = vmatprep.subr.mxu0 0.0
    %3486 = vmatpush1.msra.mxu0 0.0
    %3487 = vmatprep.subr.mxu0 0.0
    %3488 = vmatpush1.msra.mxu0 0.0
    %3489 = vmatprep.subr.mxu0 0.0
    %3490 = vmatpush1.msra.mxu0 0.0
    %3491 = vmatprep.subr.mxu0 0.0
    %3492 = vmatpush1.msra.mxu0 0.0
    %3493 = vmatprep.subr.mxu0 0.0
    %3494 = vmatpush1.msra.mxu0 0.0
    %3495 = vmatprep.subr.mxu0 0.0
    %3496 = vmatpush1.msra.mxu0 0.0
    %3497 = vmatprep.subr.mxu0 0.0
    %3498 = vmatpush1.msra.mxu0 0.0
    %3499 = vmatprep.subr.mxu0 0.0
    %3500 = vmatpush1.msra.mxu0 0.0
    %3501 = vmatprep.subr.mxu0 0.0
    %3502 = vmatpush1.msra.mxu0 0.0
    %3503 = vmatprep.subr.mxu0 0.0
    %3504 = vmatpush1.msra.mxu0 0.0
    %3505 = vmatprep.subr.mxu0 0.0
    %3506 = vmatpush1.msra.mxu0 0.0
    %3507 = vmatprep.mubr.f32.mxu0 0.0
    %3508 = vmatmul.mubr.f32.gmra.mrb[0].mxu0 %v3438
    %v3509 = vpop.f32.mrb[0].mxu0
    %v3510 = vadd.f32 %v3432, %v3509
    %v3511 = vpop.f32.mrb[0].mxu0
    %3512 = vdwg.mxu0
    %v3513 = vld [vmem:[%s57] sm:$0x1]
    %v3515 = vlaneseq
    %v3516 = vshrl.u32 %v3515, 7
    %v3517 = vsub.s32 0, %v3516
    %v3518 = vrot.slane %v3513, %v3517
    %v3520 = vadd.f32 %v3510, %v3518
    %v3521 = vmax.f32 %v3520, 0.0
    %v3522 = vld [vmem:[%s59] sm:$0xff]
    %v3523 = vld [vmem:[%s59 + $0x8] sm:$0xff]
    %v3524 = vld [vmem:[%s59 + $0x10] sm:$0xff]
    %v3525 = vld [vmem:[%s59 + $0x18] sm:$0xff]
    %v3526 = vld [vmem:[%s61] sm:$0x1]
    %v3528 = vlaneseq
    %v3529 = vshrl.u32 %v3528, 7
    %v3530 = vsub.s32 0, %v3529
    %v3531 = vrot.slane %v3526, %v3530
    %vm3533 = vcmask 261120
    %v3535 = vsel %vm3533, %v3521, 0
    %3537 = vmatprep.subr.mxu0 0.0
    %3538 = vmatpush1.msra.mxu0 %v3522
    %3539 = vmatprep.subr.mxu0 0.0
    %3540 = vmatpush1.msra.mxu0 %v3523
    %3541 = vmatprep.subr.mxu0 0.0
    %3542 = vmatpush1.msra.mxu0 %v3524
    %3543 = vmatprep.subr.mxu0 0.0
    %3544 = vmatpush1.msra.mxu0 %v3525
    %3545 = vmatprep.subr.mxu0 0.0
    %3546 = vmatpush1.msra.mxu0 0.0
    %3547 = vmatprep.subr.mxu0 0.0
    %3548 = vmatpush1.msra.mxu0 0.0
    %3549 = vmatprep.subr.mxu0 0.0
    %3550 = vmatpush1.msra.mxu0 0.0
    %3551 = vmatprep.subr.mxu0 0.0
    %3552 = vmatpush1.msra.mxu0 0.0
    %3553 = vmatprep.subr.mxu0 0.0
    %3554 = vmatpush1.msra.mxu0 0.0
    %3555 = vmatprep.subr.mxu0 0.0
    %3556 = vmatpush1.msra.mxu0 0.0
    %3557 = vmatprep.subr.mxu0 0.0
    %3558 = vmatpush1.msra.mxu0 0.0
    %3559 = vmatprep.subr.mxu0 0.0
    %3560 = vmatpush1.msra.mxu0 0.0
    %3561 = vmatprep.subr.mxu0 0.0
    %3562 = vmatpush1.msra.mxu0 0.0
    %3563 = vmatprep.subr.mxu0 0.0
    %3564 = vmatpush1.msra.mxu0 0.0
    %3565 = vmatprep.subr.mxu0 0.0
    %3566 = vmatpush1.msra.mxu0 0.0
    %3567 = vmatprep.subr.mxu0 0.0
    %3568 = vmatpush1.msra.mxu0 0.0
    %3569 = vmatprep.subr.mxu0 0.0
    %3570 = vmatpush1.msra.mxu0 0.0
    %3571 = vmatprep.subr.mxu0 0.0
    %3572 = vmatpush1.msra.mxu0 0.0
    %3573 = vmatprep.subr.mxu0 0.0
    %3574 = vmatpush1.msra.mxu0 0.0
    %3575 = vmatprep.subr.mxu0 0.0
    %3576 = vmatpush1.msra.mxu0 0.0
    %3577 = vmatprep.subr.mxu0 0.0
    %3578 = vmatpush1.msra.mxu0 0.0
    %3579 = vmatprep.subr.mxu0 0.0
    %3580 = vmatpush1.msra.mxu0 0.0
    %3581 = vmatprep.subr.mxu0 0.0
    %3582 = vmatpush1.msra.mxu0 0.0
    %3583 = vmatprep.subr.mxu0 0.0
    %3584 = vmatpush1.msra.mxu0 0.0
    %3585 = vmatprep.subr.mxu0 0.0
    %3586 = vmatpush1.msra.mxu0 0.0
    %3587 = vmatprep.subr.mxu0 0.0
    %3588 = vmatpush1.msra.mxu0 0.0
    %3589 = vmatprep.subr.mxu0 0.0
    %3590 = vmatpush1.msra.mxu0 0.0
    %3591 = vmatprep.subr.mxu0 0.0
    %3592 = vmatpush1.msra.mxu0 0.0
    %3593 = vmatprep.subr.mxu0 0.0
    %3594 = vmatpush1.msra.mxu0 0.0
    %3595 = vmatprep.subr.mxu0 0.0
    %3596 = vmatpush1.msra.mxu0 0.0
    %3597 = vmatprep.subr.mxu0 0.0
    %3598 = vmatpush1.msra.mxu0 0.0
    %3599 = vmatprep.subr.mxu0 0.0
    %3600 = vmatpush1.msra.mxu0 0.0
    %3601 = vmatprep.mubr.f32.mxu0 0.0
    %3602 = vmatmul.mubr.f32.gmra.mrb[0].mxu0 %v3535
    %v3603 = vpop.f32.mrb[0].mxu0
    %v3604 = vadd.f32 %v3531, %v3603
    %v3605 = vpop.f32.mrb[0].mxu0
    %3606 = vdwg.mxu0
    %v3607 = vmax.f32 %v3604, 0.0
    %v3608 = vld [vmem:[%s63] sm:$0xff]
    %v3609 = vld [vmem:[%s63 + $0x8] sm:$0xff]
    %v3610 = vld [vmem:[%s65] sm:$0x1]
    %v3612 = vlaneseq
    %v3613 = vshrl.u32 %v3612, 7
    %v3614 = vsub.s32 0, %v3613
    %v3615 = vrot.slane %v3610, %v3614
    %vm3617 = vcmask 130048
    %v3619 = vsel %vm3617, %v3607, 0
    %3621 = vmatprep.subr.mxu0 0.0
    %3622 = vmatpush1.msra.mxu0 %v3608
    %3623 = vmatprep.subr.mxu0 0.0
    %3624 = vmatpush1.msra.mxu0 %v3609
    %3625 = vmatprep.subr.mxu0 0.0
    %3626 = vmatpush1.msra.mxu0 0.0
    %3627 = vmatprep.subr.mxu0 0.0
    %3628 = vmatpush1.msra.mxu0 0.0
    %3629 = vmatprep.subr.mxu0 0.0
    %3630 = vmatpush1.msra.mxu0 0.0
    %3631 = vmatprep.subr.mxu0 0.0
    %3632 = vmatpush1.msra.mxu0 0.0
    %3633 = vmatprep.subr.mxu0 0.0
    %3634 = vmatpush1.msra.mxu0 0.0
    %3635 = vmatprep.subr.mxu0 0.0
    %3636 = vmatpush1.msra.mxu0 0.0
    %3637 = vmatprep.subr.mxu0 0.0
    %3638 = vmatpush1.msra.mxu0 0.0
    %3639 = vmatprep.subr.mxu0 0.0
    %3640 = vmatpush1.msra.mxu0 0.0
    %3641 = vmatprep.subr.mxu0 0.0
    %3642 = vmatpush1.msra.mxu0 0.0
    %3643 = vmatprep.subr.mxu0 0.0
    %3644 = vmatpush1.msra.mxu0 0.0
    %3645 = vmatprep.subr.mxu0 0.0
    %3646 = vmatpush1.msra.mxu0 0.0
    %3647 = vmatprep.subr.mxu0 0.0
    %3648 = vmatpush1.msra.mxu0 0.0
    %3649 = vmatprep.subr.mxu0 0.0
    %3650 = vmatpush1.msra.mxu0 0.0
    %3651 = vmatprep.subr.mxu0 0.0
    %3652 = vmatpush1.msra.mxu0 0.0
    %3653 = vmatprep.subr.mxu0 0.0
    %3654 = vmatpush1.msra.mxu0 0.0
    %3655 = vmatprep.subr.mxu0 0.0
    %3656 = vmatpush1.msra.mxu0 0.0
    %3657 = vmatprep.subr.mxu0 0.0
    %3658 = vmatpush1.msra.mxu0 0.0
    %3659 = vmatprep.subr.mxu0 0.0
    %3660 = vmatpush1.msra.mxu0 0.0
    %3661 = vmatprep.subr.mxu0 0.0
    %3662 = vmatpush1.msra.mxu0 0.0
    %3663 = vmatprep.subr.mxu0 0.0
    %3664 = vmatpush1.msra.mxu0 0.0
    %3665 = vmatprep.subr.mxu0 0.0
    %3666 = vmatpush1.msra.mxu0 0.0
    %3667 = vmatprep.subr.mxu0 0.0
    %3668 = vmatpush1.msra.mxu0 0.0
    %3669 = vmatprep.subr.mxu0 0.0
    %3670 = vmatpush1.msra.mxu0 0.0
    %3671 = vmatprep.subr.mxu0 0.0
    %3672 = vmatpush1.msra.mxu0 0.0
    %3673 = vmatprep.subr.mxu0 0.0
    %3674 = vmatpush1.msra.mxu0 0.0
    %3675 = vmatprep.subr.mxu0 0.0
    %3676 = vmatpush1.msra.mxu0 0.0
    %3677 = vmatprep.subr.mxu0 0.0
    %3678 = vmatpush1.msra.mxu0 0.0
    %3679 = vmatprep.subr.mxu0 0.0
    %3680 = vmatpush1.msra.mxu0 0.0
    %3681 = vmatprep.subr.mxu0 0.0
    %3682 = vmatpush1.msra.mxu0 0.0
    %3683 = vmatprep.subr.mxu0 0.0
    %3684 = vmatpush1.msra.mxu0 0.0
    %3685 = vmatprep.mubr.f32.mxu0 0.0
    %3686 = vmatmul.mubr.f32.gmra.mrb[0].mxu0 %v3619
    %v3687 = vpop.f32.mrb[0].mxu0
    %v3688 = vadd.f32 %v3615, %v3687
    %v3689 = vpop.f32.mrb[0].mxu0
    %3690 = vdwg.mxu0
    %v3691 = vmax.f32 %v3688, 0.0
    %v3692 = vld [vmem:[%s67] sm:$0xff]
    %v3693 = vld [vmem:[#allocation2] sm:$0x1]
    %v3695 = vlaneseq
    %v3696 = vshrl.u32 %v3695, 7
    %v3697 = vsub.s32 0, %v3696
    %v3698 = vrot.slane %v3693, %v3697
    %vm3700 = vcmask 64512
    %v3702 = vsel %vm3700, %v3691, 0
    %3704 = vmatprep.subr.mxu0 0.0
    %3705 = vmatpush1.msra.mxu0 %v3692
    %3706 = vmatprep.subr.mxu0 0.0
    %3707 = vmatpush1.msra.mxu0 0.0
    %3708 = vmatprep.subr.mxu0 0.0
    %3709 = vmatpush1.msra.mxu0 0.0
    %3710 = vmatprep.subr.mxu0 0.0
    %3711 = vmatpush1.msra.mxu0 0.0
    %3712 = vmatprep.subr.mxu0 0.0
    %3713 = vmatpush1.msra.mxu0 0.0
    %3714 = vmatprep.subr.mxu0 0.0
    %3715 = vmatpush1.msra.mxu0 0.0
    %3716 = vmatprep.subr.mxu0 0.0
    %3717 = vmatpush1.msra.mxu0 0.0
    %3718 = vmatprep.subr.mxu0 0.0
    %3719 = vmatpush1.msra.mxu0 0.0
    %3720 = vmatprep.subr.mxu0 0.0
    %3721 = vmatpush1.msra.mxu0 0.0
    %3722 = vmatprep.subr.mxu0 0.0
    %3723 = vmatpush1.msra.mxu0 0.0
    %3724 = vmatprep.subr.mxu0 0.0
    %3725 = vmatpush1.msra.mxu0 0.0
    %3726 = vmatprep.subr.mxu0 0.0
    %3727 = vmatpush1.msra.mxu0 0.0
    %3728 = vmatprep.subr.mxu0 0.0
    %3729 = vmatpush1.msra.mxu0 0.0
    %3730 = vmatprep.subr.mxu0 0.0
    %3731 = vmatpush1.msra.mxu0 0.0
    %3732 = vmatprep.subr.mxu0 0.0
    %3733 = vmatpush1.msra.mxu0 0.0
    %3734 = vmatprep.subr.mxu0 0.0
    %3735 = vmatpush1.msra.mxu0 0.0
    %3736 = vmatprep.subr.mxu0 0.0
    %3737 = vmatpush1.msra.mxu0 0.0
    %3738 = vmatprep.subr.mxu0 0.0
    %3739 = vmatpush1.msra.mxu0 0.0
    %3740 = vmatprep.subr.mxu0 0.0
    %3741 = vmatpush1.msra.mxu0 0.0
    %3742 = vmatprep.subr.mxu0 0.0
    %3743 = vmatpush1.msra.mxu0 0.0
    %3744 = vmatprep.subr.mxu0 0.0
    %3745 = vmatpush1.msra.mxu0 0.0
    %3746 = vmatprep.subr.mxu0 0.0
    %3747 = vmatpush1.msra.mxu0 0.0
    %3748 = vmatprep.subr.mxu0 0.0
    %3749 = vmatpush1.msra.mxu0 0.0
    %3750 = vmatprep.subr.mxu0 0.0
    %3751 = vmatpush1.msra.mxu0 0.0
    %3752 = vmatprep.subr.mxu0 0.0
    %3753 = vmatpush1.msra.mxu0 0.0
    %3754 = vmatprep.subr.mxu0 0.0
    %3755 = vmatpush1.msra.mxu0 0.0
    %3756 = vmatprep.subr.mxu0 0.0
    %3757 = vmatpush1.msra.mxu0 0.0
    %3758 = vmatprep.subr.mxu0 0.0
    %3759 = vmatpush1.msra.mxu0 0.0
    %3760 = vmatprep.subr.mxu0 0.0
    %3761 = vmatpush1.msra.mxu0 0.0
    %3762 = vmatprep.subr.mxu0 0.0
    %3763 = vmatpush1.msra.mxu0 0.0
    %3764 = vmatprep.subr.mxu0 0.0
    %3765 = vmatpush1.msra.mxu0 0.0
    %3766 = vmatprep.subr.mxu0 0.0
    %3767 = vmatpush1.msra.mxu0 0.0
    %3768 = vmatprep.mubr.f32.mxu0 0.0
    %3769 = vmatmul.mubr.f32.gmra.mrb[0].mxu0 %v3702
    %v3770 = vpop.f32.mrb[0].mxu0
    %v3771 = vadd.f32 %v3698, %v3770
    %v3772 = vpop.f32.mrb[0].mxu0
    %3773 = vdwg.mxu0
    %vm3774 = vcmask 1024
    %3775 = vst.msk [vmem:[%s71] sm:$0x3] %vm3774, %v3771
    // Predicated region
    $region142: #{tpu_custom_call.1} parent=1 // pred_check
      _
    $region143: #{tpu_custom_call.1} parent=1 // pred_check_branch
      %3777 = sbr.rel (0) target = $region145
    $region144: #{tpu_custom_call.1} parent=1 // pred_region
      _
    $region145: #{tpu_custom_call.1} parent=1 // pred_fallthru
      _
    // Predicated region
    $region146: #{tpu_custom_call.1} parent=1 // pred_check
      _
    $region147: #{tpu_custom_call.1} parent=1 // pred_check_branch
      %3779 = sbr.rel (0) target = $region149
    $region148: #{tpu_custom_call.1} parent=1 // pred_region
      %s3781 = ssub.s32 32, 32
      %3782 = vsyncadd [#allocation4], %s3781
      %s3784 = sshll.u32 [#allocation3], 4
      %s3785 = int_to_ptr.vmem [resolvable:$true] %s3784
      %3787 = dma.vmem_to_hbm [thread:$0]  %s3785, 32, %s73, [#allocation4]
    $region149: #{tpu_custom_call.1} parent=1 // pred_fallthru
      _
    // Predicated region
    $region150: #{tpu_custom_call.1} parent=1 // pred_check
      _
    $region151: #{tpu_custom_call.1} parent=1 // pred_check_branch
      %3789 = sbr.rel (0) target = $region153
    $region152: #{tpu_custom_call.1} parent=1 // pred_region
      %s3791 = ssub.s32 32, 32
      %3792 = vsyncadd [#allocation6], %s3791
      %s3794 = sshll.u32 [#allocation5], 4
      %s3795 = int_to_ptr.vmem [resolvable:$true] %s3794
      %3797 = dma.vmem_to_hbm [thread:$0]  %s3795, 32, %s75, [#allocation6]
    $region153: #{tpu_custom_call.1} parent=1 // pred_fallthru
      _
    // Predicated region
    $region154: #{tpu_custom_call.1} parent=1 // pred_check
      _
    $region155: #{tpu_custom_call.1} parent=1 // pred_check_branch
      %3799 = sbr.rel (0) target = $region157
    $region156: #{tpu_custom_call.1} parent=1 // pred_region
      _
    $region157: #{tpu_custom_call.1} parent=1 // pred_fallthru
      _
    // Predicated region
    $region158: #{tpu_custom_call.1} parent=1 // pred_check
      _
    $region159: #{tpu_custom_call.1} parent=1 // pred_check_branch
      %3801 = sbr.rel (0) target = $region161
    $region160: #{tpu_custom_call.1} parent=1 // pred_region
      %3802 = dma.done [#allocation4], 32
    $region161: #{tpu_custom_call.1} parent=1 // pred_fallthru
      _
    // Predicated region
    $region162: #{tpu_custom_call.1} parent=1 // pred_check
      _
    $region163: #{tpu_custom_call.1} parent=1 // pred_check_branch
      %3804 = sbr.rel (0) target = $region165
    $region164: #{tpu_custom_call.1} parent=1 // pred_region
      %3805 = dma.done [#allocation6], 32
    $region165: #{tpu_custom_call.1} parent=1 // pred_fallthru
      _
    %3806 = vsyncpa [#allocation4], 1
    %3807 = vsyncpa [#allocation6], 1

</llo_original>
